<compile_context>
chip_gen: v7x
topology: tpu7x:2x2x1
jax: 0.10.0
libtpu: 0.0.40
codegen_flags: <defaults>
</compile_context>

<pallas_src>
import jax
import jax.numpy as jnp
from jax import lax
from jax.experimental import pallas as pl
from jax.experimental.pallas import tpu as pltpu


_VMEM = pl.BlockSpec(memory_space=pltpu.MemorySpace.VMEM)
_SMEM = pl.BlockSpec(memory_space=pltpu.MemorySpace.SMEM)


def _gelu_tanh(y):
    # Exactly the elementwise sequence from the PyTorch module.
    v2 = y * 0.5
    v3 = y * y
    v4 = v3 * y
    v5 = v4 * 0.044715
    v6 = y + v5
    v7 = v6 * 0.7978845608028654
    v8 = jnp.tanh(v7)
    v9 = v8 + 1.0
    return v2 * v9


# --------------------------------------------------------------------------
# Fused Pallas kernel: conv1d+GELU, conv2d+GELU, conv3d+GELU+broadcast-add
# --------------------------------------------------------------------------
def fused_forward_kernel(x1pt_ref, w1t_ref, b1r_ref,
                         a2_ref, w2f_ref, b2r_ref,
                         x3t_ref, w3_ref, b3_ref,
                         v31_ref, v20_ref):
    # ---- conv1d + GELU: accumulator in (L, C1) = (w, h) layout (1 vreg) ----
    # x1pt: (Lp, Cin1) padded+transposed input;  w1t: (Cin1*KW1, C1);  b1r: (1, C1)
    Lp, Cin1 = x1pt_ref.shape                 # (7, 5)
    K1, C1 = w1t_ref.shape                    # (15, 64)
    KW1 = K1 // Cin1                          # 3
    L = Lp - (KW1 - 1)                        # 5
    acc1 = jnp.broadcast_to(b1r_ref[...], (L, C1))
    for cin in range(Cin1):                   # 15 unrolled single-vreg VPU FMAs
        for kw in range(KW1):
            k = cin * KW1 + kw
            acc1 = acc1 + x1pt_ref[kw:kw + L, cin:cin + 1] * w1t_ref[k:k + 1, :]
    v10_t = _gelu_tanh(acc1)                  # (L, C1): v10_t[w, h] == v10[h, w]

    # ---- conv2d + GELU (im2col contraction) --------------------------------
    # a2: (K2, P)  w2f: (C2, K2)  b2r: (C2, 1)  -> v20: (C2, P)
    C2, K2 = w2f_ref.shape                    # (5, 27)
    P = a2_ref.shape[1]                       # 6
    acc2 = jnp.broadcast_to(b2r_ref[...], (C2, P))
    for k in range(K2):                       # 27 unrolled sub-vreg VPU FMAs
        acc2 = acc2 + w2f_ref[:, k:k + 1] * a2_ref[k:k + 1, :]
    v20_ref[...] = _gelu_tanh(acc2)

    # ---- conv3d(1x1x1) + bias + GELU + broadcast add of v10_t --------------
    # x3t: (Cin3, Dp, Wp, Hp) so each (c3, d) slab is a (Wp, Hp) = (5, 64)
    # single-vreg tile that adds v10_t directly (no transpose / reshape).
    Cin3, Dp, Wp, Hp = x3t_ref.shape          # (4, 5, 5, 64)
    C3 = w3_ref.shape[0]                      # 8
    for d in range(Dp):
        xd = [x3t_ref[cin, d, :, :] for cin in range(Cin3)]   # 4 vreg loads / d
        for c3 in range(C3):
            acc = xd[0] * w3_ref[c3, 0]                        # SMEM scalar * vreg
            for cin in range(1, Cin3):
                acc = acc + xd[cin] * w3_ref[c3, cin]
            acc = acc + b3_ref[c3]
            v31_ref[c3, d, :, :] = _gelu_tanh(acc) + v10_t


# --------------------------------------------------------------------------
# pallas_call wrapper (single dispatch, whole-array VMEM / SMEM blocks)
# --------------------------------------------------------------------------
def _fused_forward(x1pt, w1t, b1r, A2, w2f, b2r, x3t, w3f, b3f):
    C2, P = w2f.shape[0], A2.shape[1]
    _, Dp, Wp, Hp = x3t.shape
    C3 = w3f.shape[0]
    return pl.pallas_call(
        fused_forward_kernel,
        out_shape=(jax.ShapeDtypeStruct((C3, Dp, Wp, Hp), jnp.float32),
                   jax.ShapeDtypeStruct((C2, P), jnp.float32)),
        in_specs=[_VMEM, _VMEM, _VMEM, _VMEM, _VMEM, _VMEM, _VMEM, _SMEM, _SMEM],
        out_specs=(_VMEM, _VMEM),
    )(x1pt, w1t, b1r, A2, w2f, b2r, x3t, w3f, b3f)


# --------------------------------------------------------------------------
# Model forward (single jitted program: tiny prep fusions + ONE pallas_call)
# --------------------------------------------------------------------------
@jax.jit
def model_forward(x1, x2, x3, params):
    w1, b1, w2, b2, w3, b3 = params
    f32 = jnp.float32
    x1 = x1.astype(f32)
    x2 = x2.astype(f32)
    x3 = x3.astype(f32)

    # ---- conv1d prep: padded + transposed input (Lp, Cin1), weight (K1, C1)
    C1, Cin1, KW1 = w1.shape                                   # (64, 5, 3)
    L = x1.shape[2]
    x1pt = jnp.pad(x1[0], ((0, 0), (1, 1))).T                  # (L+2, Cin1)
    w1t = w1.reshape(C1, Cin1 * KW1).T.astype(f32)             # (15, 64)
    b1r = b1.reshape(1, C1).astype(f32)

    # ---- conv2d im2col (stride 5, valid): static patch slices ----
    C2, Cin2, KH, KW = w2.shape                                # (5, 3, 3, 3)
    H2, W2d = x2.shape[2], x2.shape[3]
    S = 5
    OH = (H2 - KH) // S + 1
    OW = (W2d - KW) // S + 1
    cols = []
    for oh in range(OH):
        for ow in range(OW):
            patch = x2[0, :, oh * S:oh * S + KH, ow * S:ow * S + KW]
            cols.append(patch.reshape(Cin2 * KH * KW))
    A2 = jnp.stack(cols, axis=1)                               # (27, OH*OW)
    w2f = w2.reshape(C2, Cin2 * KH * KW).astype(f32)           # (5, 27)
    b2r = b2.reshape(C2, 1).astype(f32)

    # ---- conv3d prep: pad + swap (H, W) so kernel tiles are (Wp, Hp) --------
    C3, Cin3 = w3.shape[0], w3.shape[1]                        # (8, 4)
    x3s = jnp.transpose(x3[0], (0, 1, 3, 2))                   # (Cin3, D, W, H)
    x3t = jnp.pad(x3s, ((0, 0), (1, 1), (1, 1), (1, 1)))       # (Cin3, Dp, Wp, Hp)
    Dp, Wp, Hp = x3t.shape[1], x3t.shape[2], x3t.shape[3]
    w3f = w3.reshape(C3, Cin3).astype(f32)                     # (8, 4)  -> SMEM
    b3f = b3.astype(f32)                                       # (8,)    -> SMEM

    # static broadcast check (PyTorch semantics; fail loudly like torch would)
    if Hp != C1 or Wp != L:
        raise ValueError(
            f"v10 shape (1,{C1},{L}) does not broadcast against "
            f"v30 shape (1,{C3},{Dp},{Hp},{Wp})")

    # ONE fused pallas_call: v31t is (C3, Dp, Wp, Hp), v20 is (C2, OH*OW)
    v31t, v20 = _fused_forward(x1pt, w1t, b1r, A2, w2f, b2r, x3t, w3f, b3f)

    v31 = jnp.transpose(v31t, (0, 1, 3, 2))[None]              # (1, C3, Dp, Hp, Wp)
    v20 = v20.reshape(1, C2, OH, OW)
    return v31, v20


# --------------------------------------------------------------------------
# Pure-JAX reference (lax convs, HIGHEST precision) for a sanity check
# --------------------------------------------------------------------------
def reference_forward(x1, x2, x3, params):
    w1, b1, w2, b2, w3, b3 = params
    hp = lax.Precision.HIGHEST
    v1 = lax.conv_general_dilated(x1, w1, (1,), ((1, 1),),
                                  dimension_numbers=("NCH", "OIH", "NCH"),
                                  precision=hp)
    v1 = v1 + b1.reshape(1, -1, 1)
    v11 = lax.conv_general_dilated(x2, w2, (5, 5), "VALID",
                                   dimension_numbers=("NCHW", "OIHW", "NCHW"),
                                   precision=hp)
    v11 = v11 + b2.reshape(1, -1, 1, 1)
    v21 = lax.conv_general_dilated(x3, w3, (1, 1, 1), ((1, 1),) * 3,
                                   dimension_numbers=("NCDHW", "OIDHW", "NCDHW"),
                                   precision=hp)
    v21 = v21 + b3.reshape(1, -1, 1, 1, 1)
    return _gelu_tanh(v1)[:, None, None] + _gelu_tanh(v21), _gelu_tanh(v11)


# --------------------------------------------------------------------------
if __name__ == "__main__":
    key = jax.random.PRNGKey(0)
    k = jax.random.split(key, 9)

    # Inputs (small, forward-consistent shapes)
    x1 = jax.random.normal(k[0], (1, 5, 5), jnp.float32)
    x2 = jax.random.normal(k[1], (1, 3, 13, 11), jnp.float32)
    x3 = jax.random.normal(k[2], (1, 4, 3, 62, 3), jnp.float32)

    # Parameters: Conv1d(5,64,3,p=1), Conv2d(3,5,3,s=5), Conv3d(4,8,1,p=1)
    w1 = jax.random.normal(k[3], (64, 5, 3), jnp.float32) * 0.1
    b1 = jax.random.normal(k[4], (64,), jnp.float32) * 0.1
    w2 = jax.random.normal(k[5], (5, 3, 3, 3), jnp.float32) * 0.1
    b2 = jax.random.normal(k[6], (5,), jnp.float32) * 0.1
    w3 = jax.random.normal(k[7], (8, 4, 1, 1, 1), jnp.float32) * 0.1
    b3 = jax.random.normal(k[8], (8,), jnp.float32) * 0.1
    params = (w1, b1, w2, b2, w3, b3)

    v31, v20 = model_forward(x1, x2, x3, params)
    jax.block_until_ready(v31)
    jax.block_until_ready(v20)

    ref_v31, ref_v20 = reference_forward(x1, x2, x3, params)
    assert v31.shape == (1, 8, 5, 64, 5), v31.shape
    assert v20.shape == (1, 5, 3, 2), v20.shape
    assert jnp.allclose(v31, ref_v31, rtol=1e-4, atol=1e-5), "v31 mismatch"
    assert jnp.allclose(v20, ref_v20, rtol=1e-4, atol=1e-5), "v20 mismatch"

    print("KERNEL_OK")
</pallas_src>

<mosaic_0001>
module attributes {stable_mosaic.version = 11 : i64} {
  func.func @fused_forward_kernel(%arg0: memref<7x5xf32, #tpu.memory_space<vmem>>, %arg1: memref<15x64xf32, #tpu.memory_space<vmem>>, %arg2: memref<1x64xf32, #tpu.memory_space<vmem>>, %arg3: memref<27x6xf32, #tpu.memory_space<vmem>>, %arg4: memref<5x27xf32, #tpu.memory_space<vmem>>, %arg5: memref<5x1xf32, #tpu.memory_space<vmem>>, %arg6: memref<4x5x5x64xf32, #tpu.memory_space<vmem>>, %arg7: memref<8x4xf32, #tpu.memory_space<smem>>, %arg8: memref<8xf32, #tpu.memory_space<smem>>, %arg9: memref<8x5x5x64xf32, #tpu.memory_space<vmem>>, %arg10: memref<5x6xf32, #tpu.memory_space<vmem>>) attributes {dimension_semantics = [], scalar_prefetch = 0 : i64, scratch_operands = 0 : i64, tpu.core_type = #tpu.core_type<tc>} {
    %c0 = arith.constant 0 : index
    %c0_0 = arith.constant 0 : index
    %0 = vector.load %arg2[%c0, %c0_0] : memref<1x64xf32, #tpu.memory_space<vmem>>, vector<1x64xf32>
    %1 = vector.shape_cast %0 : vector<1x64xf32> to vector<1x64xf32>
    %2 = vector.broadcast %1 : vector<1x64xf32> to vector<5x64xf32>
    %c0_1 = arith.constant 0 : index
    %c0_2 = arith.constant 0 : index
    %3 = vector.load %arg0[%c0_1, %c0_2] : memref<7x5xf32, #tpu.memory_space<vmem>>, vector<5x1xf32>
    %c0_3 = arith.constant 0 : index
    %c0_4 = arith.constant 0 : index
    %4 = vector.load %arg1[%c0_3, %c0_4] : memref<15x64xf32, #tpu.memory_space<vmem>>, vector<1x64xf32>
    %5 = vector.broadcast %3 : vector<5x1xf32> to vector<5x64xf32>
    %6 = vector.broadcast %4 : vector<1x64xf32> to vector<5x64xf32>
    %7 = arith.mulf %5, %6 : vector<5x64xf32>
    %8 = arith.addf %2, %7 : vector<5x64xf32>
    %c1 = arith.constant 1 : index
    %c0_5 = arith.constant 0 : index
    %9 = vector.load %arg0[%c1, %c0_5] : memref<7x5xf32, #tpu.memory_space<vmem>>, vector<5x1xf32>
    %c1_6 = arith.constant 1 : index
    %c0_7 = arith.constant 0 : index
    %10 = vector.load %arg1[%c1_6, %c0_7] : memref<15x64xf32, #tpu.memory_space<vmem>>, vector<1x64xf32>
    %11 = vector.broadcast %9 : vector<5x1xf32> to vector<5x64xf32>
    %12 = vector.broadcast %10 : vector<1x64xf32> to vector<5x64xf32>
    %13 = arith.mulf %11, %12 : vector<5x64xf32>
    %14 = arith.addf %8, %13 : vector<5x64xf32>
    %c2 = arith.constant 2 : index
    %c0_8 = arith.constant 0 : index
    %15 = vector.load %arg0[%c2, %c0_8] : memref<7x5xf32, #tpu.memory_space<vmem>>, vector<5x1xf32>
    %c2_9 = arith.constant 2 : index
    %c0_10 = arith.constant 0 : index
    %16 = vector.load %arg1[%c2_9, %c0_10] : memref<15x64xf32, #tpu.memory_space<vmem>>, vector<1x64xf32>
    %17 = vector.broadcast %15 : vector<5x1xf32> to vector<5x64xf32>
    %18 = vector.broadcast %16 : vector<1x64xf32> to vector<5x64xf32>
    %19 = arith.mulf %17, %18 : vector<5x64xf32>
    %20 = arith.addf %14, %19 : vector<5x64xf32>
    %c0_11 = arith.constant 0 : index
    %c1_12 = arith.constant 1 : index
    %21 = vector.load %arg0[%c0_11, %c1_12] : memref<7x5xf32, #tpu.memory_space<vmem>>, vector<5x1xf32>
    %c3 = arith.constant 3 : index
    %c0_13 = arith.constant 0 : index
    %22 = vector.load %arg1[%c3, %c0_13] : memref<15x64xf32, #tpu.memory_space<vmem>>, vector<1x64xf32>
    %23 = vector.broadcast %21 : vector<5x1xf32> to vector<5x64xf32>
    %24 = vector.broadcast %22 : vector<1x64xf32> to vector<5x64xf32>
    %25 = arith.mulf %23, %24 : vector<5x64xf32>
    %26 = arith.addf %20, %25 : vector<5x64xf32>
    %c1_14 = arith.constant 1 : index
    %c1_15 = arith.constant 1 : index
    %27 = vector.load %arg0[%c1_14, %c1_15] : memref<7x5xf32, #tpu.memory_space<vmem>>, vector<5x1xf32>
    %c4 = arith.constant 4 : index
    %c0_16 = arith.constant 0 : index
    %28 = vector.load %arg1[%c4, %c0_16] : memref<15x64xf32, #tpu.memory_space<vmem>>, vector<1x64xf32>
    %29 = vector.broadcast %27 : vector<5x1xf32> to vector<5x64xf32>
    %30 = vector.broadcast %28 : vector<1x64xf32> to vector<5x64xf32>
    %31 = arith.mulf %29, %30 : vector<5x64xf32>
    %32 = arith.addf %26, %31 : vector<5x64xf32>
    %c2_17 = arith.constant 2 : index
    %c1_18 = arith.constant 1 : index
    %33 = vector.load %arg0[%c2_17, %c1_18] : memref<7x5xf32, #tpu.memory_space<vmem>>, vector<5x1xf32>
    %c5 = arith.constant 5 : index
    %c0_19 = arith.constant 0 : index
    %34 = vector.load %arg1[%c5, %c0_19] : memref<15x64xf32, #tpu.memory_space<vmem>>, vector<1x64xf32>
    %35 = vector.broadcast %33 : vector<5x1xf32> to vector<5x64xf32>
    %36 = vector.broadcast %34 : vector<1x64xf32> to vector<5x64xf32>
    %37 = arith.mulf %35, %36 : vector<5x64xf32>
    %38 = arith.addf %32, %37 : vector<5x64xf32>
    %c0_20 = arith.constant 0 : index
    %c2_21 = arith.constant 2 : index
    %39 = vector.load %arg0[%c0_20, %c2_21] : memref<7x5xf32, #tpu.memory_space<vmem>>, vector<5x1xf32>
    %c6 = arith.constant 6 : index
    %c0_22 = arith.constant 0 : index
    %40 = vector.load %arg1[%c6, %c0_22] : memref<15x64xf32, #tpu.memory_space<vmem>>, vector<1x64xf32>
    %41 = vector.broadcast %39 : vector<5x1xf32> to vector<5x64xf32>
    %42 = vector.broadcast %40 : vector<1x64xf32> to vector<5x64xf32>
    %43 = arith.mulf %41, %42 : vector<5x64xf32>
    %44 = arith.addf %38, %43 : vector<5x64xf32>
    %c1_23 = arith.constant 1 : index
    %c2_24 = arith.constant 2 : index
    %45 = vector.load %arg0[%c1_23, %c2_24] : memref<7x5xf32, #tpu.memory_space<vmem>>, vector<5x1xf32>
    %c7 = arith.constant 7 : index
    %c0_25 = arith.constant 0 : index
    %46 = vector.load %arg1[%c7, %c0_25] : memref<15x64xf32, #tpu.memory_space<vmem>>, vector<1x64xf32>
    %47 = vector.broadcast %45 : vector<5x1xf32> to vector<5x64xf32>
    %48 = vector.broadcast %46 : vector<1x64xf32> to vector<5x64xf32>
    %49 = arith.mulf %47, %48 : vector<5x64xf32>
    %50 = arith.addf %44, %49 : vector<5x64xf32>
    %c2_26 = arith.constant 2 : index
    %c2_27 = arith.constant 2 : index
    %51 = vector.load %arg0[%c2_26, %c2_27] : memref<7x5xf32, #tpu.memory_space<vmem>>, vector<5x1xf32>
    %c8 = arith.constant 8 : index
    %c0_28 = arith.constant 0 : index
    %52 = vector.load %arg1[%c8, %c0_28] : memref<15x64xf32, #tpu.memory_space<vmem>>, vector<1x64xf32>
    %53 = vector.broadcast %51 : vector<5x1xf32> to vector<5x64xf32>
    %54 = vector.broadcast %52 : vector<1x64xf32> to vector<5x64xf32>
    %55 = arith.mulf %53, %54 : vector<5x64xf32>
    %56 = arith.addf %50, %55 : vector<5x64xf32>
    %c0_29 = arith.constant 0 : index
    %c3_30 = arith.constant 3 : index
    %57 = vector.load %arg0[%c0_29, %c3_30] : memref<7x5xf32, #tpu.memory_space<vmem>>, vector<5x1xf32>
    %c9 = arith.constant 9 : index
    %c0_31 = arith.constant 0 : index
    %58 = vector.load %arg1[%c9, %c0_31] : memref<15x64xf32, #tpu.memory_space<vmem>>, vector<1x64xf32>
    %59 = vector.broadcast %57 : vector<5x1xf32> to vector<5x64xf32>
    %60 = vector.broadcast %58 : vector<1x64xf32> to vector<5x64xf32>
    %61 = arith.mulf %59, %60 : vector<5x64xf32>
    %62 = arith.addf %56, %61 : vector<5x64xf32>
    %c1_32 = arith.constant 1 : index
    %c3_33 = arith.constant 3 : index
    %63 = vector.load %arg0[%c1_32, %c3_33] : memref<7x5xf32, #tpu.memory_space<vmem>>, vector<5x1xf32>
    %c10 = arith.constant 10 : index
    %c0_34 = arith.constant 0 : index
    %64 = vector.load %arg1[%c10, %c0_34] : memref<15x64xf32, #tpu.memory_space<vmem>>, vector<1x64xf32>
    %65 = vector.broadcast %63 : vector<5x1xf32> to vector<5x64xf32>
    %66 = vector.broadcast %64 : vector<1x64xf32> to vector<5x64xf32>
    %67 = arith.mulf %65, %66 : vector<5x64xf32>
    %68 = arith.addf %62, %67 : vector<5x64xf32>
    %c2_35 = arith.constant 2 : index
    %c3_36 = arith.constant 3 : index
    %69 = vector.load %arg0[%c2_35, %c3_36] : memref<7x5xf32, #tpu.memory_space<vmem>>, vector<5x1xf32>
    %c11 = arith.constant 11 : index
    %c0_37 = arith.constant 0 : index
    %70 = vector.load %arg1[%c11, %c0_37] : memref<15x64xf32, #tpu.memory_space<vmem>>, vector<1x64xf32>
    %71 = vector.broadcast %69 : vector<5x1xf32> to vector<5x64xf32>
    %72 = vector.broadcast %70 : vector<1x64xf32> to vector<5x64xf32>
    %73 = arith.mulf %71, %72 : vector<5x64xf32>
    %74 = arith.addf %68, %73 : vector<5x64xf32>
    %c0_38 = arith.constant 0 : index
    %c4_39 = arith.constant 4 : index
    %75 = vector.load %arg0[%c0_38, %c4_39] : memref<7x5xf32, #tpu.memory_space<vmem>>, vector<5x1xf32>
    %c12 = arith.constant 12 : index
    %c0_40 = arith.constant 0 : index
    %76 = vector.load %arg1[%c12, %c0_40] : memref<15x64xf32, #tpu.memory_space<vmem>>, vector<1x64xf32>
    %77 = vector.broadcast %75 : vector<5x1xf32> to vector<5x64xf32>
    %78 = vector.broadcast %76 : vector<1x64xf32> to vector<5x64xf32>
    %79 = arith.mulf %77, %78 : vector<5x64xf32>
    %80 = arith.addf %74, %79 : vector<5x64xf32>
    %c1_41 = arith.constant 1 : index
    %c4_42 = arith.constant 4 : index
    %81 = vector.load %arg0[%c1_41, %c4_42] : memref<7x5xf32, #tpu.memory_space<vmem>>, vector<5x1xf32>
    %c13 = arith.constant 13 : index
    %c0_43 = arith.constant 0 : index
    %82 = vector.load %arg1[%c13, %c0_43] : memref<15x64xf32, #tpu.memory_space<vmem>>, vector<1x64xf32>
    %83 = vector.broadcast %81 : vector<5x1xf32> to vector<5x64xf32>
    %84 = vector.broadcast %82 : vector<1x64xf32> to vector<5x64xf32>
    %85 = arith.mulf %83, %84 : vector<5x64xf32>
    %86 = arith.addf %80, %85 : vector<5x64xf32>
    %c2_44 = arith.constant 2 : index
    %c4_45 = arith.constant 4 : index
    %87 = vector.load %arg0[%c2_44, %c4_45] : memref<7x5xf32, #tpu.memory_space<vmem>>, vector<5x1xf32>
    %c14 = arith.constant 14 : index
    %c0_46 = arith.constant 0 : index
    %88 = vector.load %arg1[%c14, %c0_46] : memref<15x64xf32, #tpu.memory_space<vmem>>, vector<1x64xf32>
    %89 = vector.broadcast %87 : vector<5x1xf32> to vector<5x64xf32>
    %90 = vector.broadcast %88 : vector<1x64xf32> to vector<5x64xf32>
    %91 = arith.mulf %89, %90 : vector<5x64xf32>
    %92 = arith.addf %86, %91 : vector<5x64xf32>
    %cst = arith.constant 5.000000e-01 : f32
    %93 = vector.broadcast %cst : f32 to vector<5x64xf32>
    %94 = arith.mulf %92, %93 : vector<5x64xf32>
    %95 = arith.mulf %92, %92 : vector<5x64xf32>
    %96 = arith.mulf %95, %92 : vector<5x64xf32>
    %cst_47 = arith.constant 4.471500e-02 : f32
    %97 = vector.broadcast %cst_47 : f32 to vector<5x64xf32>
    %98 = arith.mulf %96, %97 : vector<5x64xf32>
    %99 = arith.addf %92, %98 : vector<5x64xf32>
    %cst_48 = arith.constant 0.797884583 : f32
    %100 = vector.broadcast %cst_48 : f32 to vector<5x64xf32>
    %101 = arith.mulf %99, %100 : vector<5x64xf32>
    %102 = math.tanh %101 : vector<5x64xf32>
    %cst_49 = arith.constant 1.000000e+00 : f32
    %103 = vector.broadcast %cst_49 : f32 to vector<5x64xf32>
    %104 = arith.addf %102, %103 : vector<5x64xf32>
    %105 = arith.mulf %94, %104 : vector<5x64xf32>
    %c0_50 = arith.constant 0 : index
    %c0_51 = arith.constant 0 : index
    %106 = vector.load %arg5[%c0_50, %c0_51] : memref<5x1xf32, #tpu.memory_space<vmem>>, vector<5x1xf32>
    %107 = vector.shape_cast %106 : vector<5x1xf32> to vector<5x1xf32>
    %108 = vector.broadcast %107 : vector<5x1xf32> to vector<5x6xf32>
    %c0_52 = arith.constant 0 : index
    %c0_53 = arith.constant 0 : index
    %109 = vector.load %arg4[%c0_52, %c0_53] : memref<5x27xf32, #tpu.memory_space<vmem>>, vector<5x1xf32>
    %c0_54 = arith.constant 0 : index
    %c0_55 = arith.constant 0 : index
    %110 = vector.load %arg3[%c0_54, %c0_55] : memref<27x6xf32, #tpu.memory_space<vmem>>, vector<1x6xf32>
    %111 = vector.broadcast %109 : vector<5x1xf32> to vector<5x6xf32>
    %112 = vector.broadcast %110 : vector<1x6xf32> to vector<5x6xf32>
    %113 = arith.mulf %111, %112 : vector<5x6xf32>
    %114 = arith.addf %108, %113 : vector<5x6xf32>
    %c0_56 = arith.constant 0 : index
    %c1_57 = arith.constant 1 : index
    %115 = vector.load %arg4[%c0_56, %c1_57] : memref<5x27xf32, #tpu.memory_space<vmem>>, vector<5x1xf32>
    %c1_58 = arith.constant 1 : index
    %c0_59 = arith.constant 0 : index
    %116 = vector.load %arg3[%c1_58, %c0_59] : memref<27x6xf32, #tpu.memory_space<vmem>>, vector<1x6xf32>
    %117 = vector.broadcast %115 : vector<5x1xf32> to vector<5x6xf32>
    %118 = vector.broadcast %116 : vector<1x6xf32> to vector<5x6xf32>
    %119 = arith.mulf %117, %118 : vector<5x6xf32>
    %120 = arith.addf %114, %119 : vector<5x6xf32>
    %c0_60 = arith.constant 0 : index
    %c2_61 = arith.constant 2 : index
    %121 = vector.load %arg4[%c0_60, %c2_61] : memref<5x27xf32, #tpu.memory_space<vmem>>, vector<5x1xf32>
    %c2_62 = arith.constant 2 : index
    %c0_63 = arith.constant 0 : index
    %122 = vector.load %arg3[%c2_62, %c0_63] : memref<27x6xf32, #tpu.memory_space<vmem>>, vector<1x6xf32>
    %123 = vector.broadcast %121 : vector<5x1xf32> to vector<5x6xf32>
    %124 = vector.broadcast %122 : vector<1x6xf32> to vector<5x6xf32>
    %125 = arith.mulf %123, %124 : vector<5x6xf32>
    %126 = arith.addf %120, %125 : vector<5x6xf32>
    %c0_64 = arith.constant 0 : index
    %c3_65 = arith.constant 3 : index
    %127 = vector.load %arg4[%c0_64, %c3_65] : memref<5x27xf32, #tpu.memory_space<vmem>>, vector<5x1xf32>
    %c3_66 = arith.constant 3 : index
    %c0_67 = arith.constant 0 : index
    %128 = vector.load %arg3[%c3_66, %c0_67] : memref<27x6xf32, #tpu.memory_space<vmem>>, vector<1x6xf32>
    %129 = vector.broadcast %127 : vector<5x1xf32> to vector<5x6xf32>
    %130 = vector.broadcast %128 : vector<1x6xf32> to vector<5x6xf32>
    %131 = arith.mulf %129, %130 : vector<5x6xf32>
    %132 = arith.addf %126, %131 : vector<5x6xf32>
    %c0_68 = arith.constant 0 : index
    %c4_69 = arith.constant 4 : index
    %133 = vector.load %arg4[%c0_68, %c4_69] : memref<5x27xf32, #tpu.memory_space<vmem>>, vector<5x1xf32>
    %c4_70 = arith.constant 4 : index
    %c0_71 = arith.constant 0 : index
    %134 = vector.load %arg3[%c4_70, %c0_71] : memref<27x6xf32, #tpu.memory_space<vmem>>, vector<1x6xf32>
    %135 = vector.broadcast %133 : vector<5x1xf32> to vector<5x6xf32>
    %136 = vector.broadcast %134 : vector<1x6xf32> to vector<5x6xf32>
    %137 = arith.mulf %135, %136 : vector<5x6xf32>
    %138 = arith.addf %132, %137 : vector<5x6xf32>
    %c0_72 = arith.constant 0 : index
    %c5_73 = arith.constant 5 : index
    %139 = vector.load %arg4[%c0_72, %c5_73] : memref<5x27xf32, #tpu.memory_space<vmem>>, vector<5x1xf32>
    %c5_74 = arith.constant 5 : index
    %c0_75 = arith.constant 0 : index
    %140 = vector.load %arg3[%c5_74, %c0_75] : memref<27x6xf32, #tpu.memory_space<vmem>>, vector<1x6xf32>
    %141 = vector.broadcast %139 : vector<5x1xf32> to vector<5x6xf32>
    %142 = vector.broadcast %140 : vector<1x6xf32> to vector<5x6xf32>
    %143 = arith.mulf %141, %142 : vector<5x6xf32>
    %144 = arith.addf %138, %143 : vector<5x6xf32>
    %c0_76 = arith.constant 0 : index
    %c6_77 = arith.constant 6 : index
    %145 = vector.load %arg4[%c0_76, %c6_77] : memref<5x27xf32, #tpu.memory_space<vmem>>, vector<5x1xf32>
    %c6_78 = arith.constant 6 : index
    %c0_79 = arith.constant 0 : index
    %146 = vector.load %arg3[%c6_78, %c0_79] : memref<27x6xf32, #tpu.memory_space<vmem>>, vector<1x6xf32>
    %147 = vector.broadcast %145 : vector<5x1xf32> to vector<5x6xf32>
    %148 = vector.broadcast %146 : vector<1x6xf32> to vector<5x6xf32>
    %149 = arith.mulf %147, %148 : vector<5x6xf32>
    %150 = arith.addf %144, %149 : vector<5x6xf32>
    %c0_80 = arith.constant 0 : index
    %c7_81 = arith.constant 7 : index
    %151 = vector.load %arg4[%c0_80, %c7_81] : memref<5x27xf32, #tpu.memory_space<vmem>>, vector<5x1xf32>
    %c7_82 = arith.constant 7 : index
    %c0_83 = arith.constant 0 : index
    %152 = vector.load %arg3[%c7_82, %c0_83] : memref<27x6xf32, #tpu.memory_space<vmem>>, vector<1x6xf32>
    %153 = vector.broadcast %151 : vector<5x1xf32> to vector<5x6xf32>
    %154 = vector.broadcast %152 : vector<1x6xf32> to vector<5x6xf32>
    %155 = arith.mulf %153, %154 : vector<5x6xf32>
    %156 = arith.addf %150, %155 : vector<5x6xf32>
    %c0_84 = arith.constant 0 : index
    %c8_85 = arith.constant 8 : index
    %157 = vector.load %arg4[%c0_84, %c8_85] : memref<5x27xf32, #tpu.memory_space<vmem>>, vector<5x1xf32>
    %c8_86 = arith.constant 8 : index
    %c0_87 = arith.constant 0 : index
    %158 = vector.load %arg3[%c8_86, %c0_87] : memref<27x6xf32, #tpu.memory_space<vmem>>, vector<1x6xf32>
    %159 = vector.broadcast %157 : vector<5x1xf32> to vector<5x6xf32>
    %160 = vector.broadcast %158 : vector<1x6xf32> to vector<5x6xf32>
    %161 = arith.mulf %159, %160 : vector<5x6xf32>
    %162 = arith.addf %156, %161 : vector<5x6xf32>
    %c0_88 = arith.constant 0 : index
    %c9_89 = arith.constant 9 : index
    %163 = vector.load %arg4[%c0_88, %c9_89] : memref<5x27xf32, #tpu.memory_space<vmem>>, vector<5x1xf32>
    %c9_90 = arith.constant 9 : index
    %c0_91 = arith.constant 0 : index
    %164 = vector.load %arg3[%c9_90, %c0_91] : memref<27x6xf32, #tpu.memory_space<vmem>>, vector<1x6xf32>
    %165 = vector.broadcast %163 : vector<5x1xf32> to vector<5x6xf32>
    %166 = vector.broadcast %164 : vector<1x6xf32> to vector<5x6xf32>
    %167 = arith.mulf %165, %166 : vector<5x6xf32>
    %168 = arith.addf %162, %167 : vector<5x6xf32>
    %c0_92 = arith.constant 0 : index
    %c10_93 = arith.constant 10 : index
    %169 = vector.load %arg4[%c0_92, %c10_93] : memref<5x27xf32, #tpu.memory_space<vmem>>, vector<5x1xf32>
    %c10_94 = arith.constant 10 : index
    %c0_95 = arith.constant 0 : index
    %170 = vector.load %arg3[%c10_94, %c0_95] : memref<27x6xf32, #tpu.memory_space<vmem>>, vector<1x6xf32>
    %171 = vector.broadcast %169 : vector<5x1xf32> to vector<5x6xf32>
    %172 = vector.broadcast %170 : vector<1x6xf32> to vector<5x6xf32>
    %173 = arith.mulf %171, %172 : vector<5x6xf32>
    %174 = arith.addf %168, %173 : vector<5x6xf32>
    %c0_96 = arith.constant 0 : index
    %c11_97 = arith.constant 11 : index
    %175 = vector.load %arg4[%c0_96, %c11_97] : memref<5x27xf32, #tpu.memory_space<vmem>>, vector<5x1xf32>
    %c11_98 = arith.constant 11 : index
    %c0_99 = arith.constant 0 : index
    %176 = vector.load %arg3[%c11_98, %c0_99] : memref<27x6xf32, #tpu.memory_space<vmem>>, vector<1x6xf32>
    %177 = vector.broadcast %175 : vector<5x1xf32> to vector<5x6xf32>
    %178 = vector.broadcast %176 : vector<1x6xf32> to vector<5x6xf32>
    %179 = arith.mulf %177, %178 : vector<5x6xf32>
    %180 = arith.addf %174, %179 : vector<5x6xf32>
    %c0_100 = arith.constant 0 : index
    %c12_101 = arith.constant 12 : index
    %181 = vector.load %arg4[%c0_100, %c12_101] : memref<5x27xf32, #tpu.memory_space<vmem>>, vector<5x1xf32>
    %c12_102 = arith.constant 12 : index
    %c0_103 = arith.constant 0 : index
    %182 = vector.load %arg3[%c12_102, %c0_103] : memref<27x6xf32, #tpu.memory_space<vmem>>, vector<1x6xf32>
    %183 = vector.broadcast %181 : vector<5x1xf32> to vector<5x6xf32>
    %184 = vector.broadcast %182 : vector<1x6xf32> to vector<5x6xf32>
    %185 = arith.mulf %183, %184 : vector<5x6xf32>
    %186 = arith.addf %180, %185 : vector<5x6xf32>
    %c0_104 = arith.constant 0 : index
    %c13_105 = arith.constant 13 : index
    %187 = vector.load %arg4[%c0_104, %c13_105] : memref<5x27xf32, #tpu.memory_space<vmem>>, vector<5x1xf32>
    %c13_106 = arith.constant 13 : index
    %c0_107 = arith.constant 0 : index
    %188 = vector.load %arg3[%c13_106, %c0_107] : memref<27x6xf32, #tpu.memory_space<vmem>>, vector<1x6xf32>
    %189 = vector.broadcast %187 : vector<5x1xf32> to vector<5x6xf32>
    %190 = vector.broadcast %188 : vector<1x6xf32> to vector<5x6xf32>
    %191 = arith.mulf %189, %190 : vector<5x6xf32>
    %192 = arith.addf %186, %191 : vector<5x6xf32>
    %c0_108 = arith.constant 0 : index
    %c14_109 = arith.constant 14 : index
    %193 = vector.load %arg4[%c0_108, %c14_109] : memref<5x27xf32, #tpu.memory_space<vmem>>, vector<5x1xf32>
    %c14_110 = arith.constant 14 : index
    %c0_111 = arith.constant 0 : index
    %194 = vector.load %arg3[%c14_110, %c0_111] : memref<27x6xf32, #tpu.memory_space<vmem>>, vector<1x6xf32>
    %195 = vector.broadcast %193 : vector<5x1xf32> to vector<5x6xf32>
    %196 = vector.broadcast %194 : vector<1x6xf32> to vector<5x6xf32>
    %197 = arith.mulf %195, %196 : vector<5x6xf32>
    %198 = arith.addf %192, %197 : vector<5x6xf32>
    %c0_112 = arith.constant 0 : index
    %c15 = arith.constant 15 : index
    %199 = vector.load %arg4[%c0_112, %c15] : memref<5x27xf32, #tpu.memory_space<vmem>>, vector<5x1xf32>
    %c15_113 = arith.constant 15 : index
    %c0_114 = arith.constant 0 : index
    %200 = vector.load %arg3[%c15_113, %c0_114] : memref<27x6xf32, #tpu.memory_space<vmem>>, vector<1x6xf32>
    %201 = vector.broadcast %199 : vector<5x1xf32> to vector<5x6xf32>
    %202 = vector.broadcast %200 : vector<1x6xf32> to vector<5x6xf32>
    %203 = arith.mulf %201, %202 : vector<5x6xf32>
    %204 = arith.addf %198, %203 : vector<5x6xf32>
    %c0_115 = arith.constant 0 : index
    %c16 = arith.constant 16 : index
    %205 = vector.load %arg4[%c0_115, %c16] : memref<5x27xf32, #tpu.memory_space<vmem>>, vector<5x1xf32>
    %c16_116 = arith.constant 16 : index
    %c0_117 = arith.constant 0 : index
    %206 = vector.load %arg3[%c16_116, %c0_117] : memref<27x6xf32, #tpu.memory_space<vmem>>, vector<1x6xf32>
    %207 = vector.broadcast %205 : vector<5x1xf32> to vector<5x6xf32>
    %208 = vector.broadcast %206 : vector<1x6xf32> to vector<5x6xf32>
    %209 = arith.mulf %207, %208 : vector<5x6xf32>
    %210 = arith.addf %204, %209 : vector<5x6xf32>
    %c0_118 = arith.constant 0 : index
    %c17 = arith.constant 17 : index
    %211 = vector.load %arg4[%c0_118, %c17] : memref<5x27xf32, #tpu.memory_space<vmem>>, vector<5x1xf32>
    %c17_119 = arith.constant 17 : index
    %c0_120 = arith.constant 0 : index
    %212 = vector.load %arg3[%c17_119, %c0_120] : memref<27x6xf32, #tpu.memory_space<vmem>>, vector<1x6xf32>
    %213 = vector.broadcast %211 : vector<5x1xf32> to vector<5x6xf32>
    %214 = vector.broadcast %212 : vector<1x6xf32> to vector<5x6xf32>
    %215 = arith.mulf %213, %214 : vector<5x6xf32>
    %216 = arith.addf %210, %215 : vector<5x6xf32>
    %c0_121 = arith.constant 0 : index
    %c18 = arith.constant 18 : index
    %217 = vector.load %arg4[%c0_121, %c18] : memref<5x27xf32, #tpu.memory_space<vmem>>, vector<5x1xf32>
    %c18_122 = arith.constant 18 : index
    %c0_123 = arith.constant 0 : index
    %218 = vector.load %arg3[%c18_122, %c0_123] : memref<27x6xf32, #tpu.memory_space<vmem>>, vector<1x6xf32>
    %219 = vector.broadcast %217 : vector<5x1xf32> to vector<5x6xf32>
    %220 = vector.broadcast %218 : vector<1x6xf32> to vector<5x6xf32>
    %221 = arith.mulf %219, %220 : vector<5x6xf32>
    %222 = arith.addf %216, %221 : vector<5x6xf32>
    %c0_124 = arith.constant 0 : index
    %c19 = arith.constant 19 : index
    %223 = vector.load %arg4[%c0_124, %c19] : memref<5x27xf32, #tpu.memory_space<vmem>>, vector<5x1xf32>
    %c19_125 = arith.constant 19 : index
    %c0_126 = arith.constant 0 : index
    %224 = vector.load %arg3[%c19_125, %c0_126] : memref<27x6xf32, #tpu.memory_space<vmem>>, vector<1x6xf32>
    %225 = vector.broadcast %223 : vector<5x1xf32> to vector<5x6xf32>
    %226 = vector.broadcast %224 : vector<1x6xf32> to vector<5x6xf32>
    %227 = arith.mulf %225, %226 : vector<5x6xf32>
    %228 = arith.addf %222, %227 : vector<5x6xf32>
    %c0_127 = arith.constant 0 : index
    %c20 = arith.constant 20 : index
    %229 = vector.load %arg4[%c0_127, %c20] : memref<5x27xf32, #tpu.memory_space<vmem>>, vector<5x1xf32>
    %c20_128 = arith.constant 20 : index
    %c0_129 = arith.constant 0 : index
    %230 = vector.load %arg3[%c20_128, %c0_129] : memref<27x6xf32, #tpu.memory_space<vmem>>, vector<1x6xf32>
    %231 = vector.broadcast %229 : vector<5x1xf32> to vector<5x6xf32>
    %232 = vector.broadcast %230 : vector<1x6xf32> to vector<5x6xf32>
    %233 = arith.mulf %231, %232 : vector<5x6xf32>
    %234 = arith.addf %228, %233 : vector<5x6xf32>
    %c0_130 = arith.constant 0 : index
    %c21 = arith.constant 21 : index
    %235 = vector.load %arg4[%c0_130, %c21] : memref<5x27xf32, #tpu.memory_space<vmem>>, vector<5x1xf32>
    %c21_131 = arith.constant 21 : index
    %c0_132 = arith.constant 0 : index
    %236 = vector.load %arg3[%c21_131, %c0_132] : memref<27x6xf32, #tpu.memory_space<vmem>>, vector<1x6xf32>
    %237 = vector.broadcast %235 : vector<5x1xf32> to vector<5x6xf32>
    %238 = vector.broadcast %236 : vector<1x6xf32> to vector<5x6xf32>
    %239 = arith.mulf %237, %238 : vector<5x6xf32>
    %240 = arith.addf %234, %239 : vector<5x6xf32>
    %c0_133 = arith.constant 0 : index
    %c22 = arith.constant 22 : index
    %241 = vector.load %arg4[%c0_133, %c22] : memref<5x27xf32, #tpu.memory_space<vmem>>, vector<5x1xf32>
    %c22_134 = arith.constant 22 : index
    %c0_135 = arith.constant 0 : index
    %242 = vector.load %arg3[%c22_134, %c0_135] : memref<27x6xf32, #tpu.memory_space<vmem>>, vector<1x6xf32>
    %243 = vector.broadcast %241 : vector<5x1xf32> to vector<5x6xf32>
    %244 = vector.broadcast %242 : vector<1x6xf32> to vector<5x6xf32>
    %245 = arith.mulf %243, %244 : vector<5x6xf32>
    %246 = arith.addf %240, %245 : vector<5x6xf32>
    %c0_136 = arith.constant 0 : index
    %c23 = arith.constant 23 : index
    %247 = vector.load %arg4[%c0_136, %c23] : memref<5x27xf32, #tpu.memory_space<vmem>>, vector<5x1xf32>
    %c23_137 = arith.constant 23 : index
    %c0_138 = arith.constant 0 : index
    %248 = vector.load %arg3[%c23_137, %c0_138] : memref<27x6xf32, #tpu.memory_space<vmem>>, vector<1x6xf32>
    %249 = vector.broadcast %247 : vector<5x1xf32> to vector<5x6xf32>
    %250 = vector.broadcast %248 : vector<1x6xf32> to vector<5x6xf32>
    %251 = arith.mulf %249, %250 : vector<5x6xf32>
    %252 = arith.addf %246, %251 : vector<5x6xf32>
    %c0_139 = arith.constant 0 : index
    %c24 = arith.constant 24 : index
    %253 = vector.load %arg4[%c0_139, %c24] : memref<5x27xf32, #tpu.memory_space<vmem>>, vector<5x1xf32>
    %c24_140 = arith.constant 24 : index
    %c0_141 = arith.constant 0 : index
    %254 = vector.load %arg3[%c24_140, %c0_141] : memref<27x6xf32, #tpu.memory_space<vmem>>, vector<1x6xf32>
    %255 = vector.broadcast %253 : vector<5x1xf32> to vector<5x6xf32>
    %256 = vector.broadcast %254 : vector<1x6xf32> to vector<5x6xf32>
    %257 = arith.mulf %255, %256 : vector<5x6xf32>
    %258 = arith.addf %252, %257 : vector<5x6xf32>
    %c0_142 = arith.constant 0 : index
    %c25 = arith.constant 25 : index
    %259 = vector.load %arg4[%c0_142, %c25] : memref<5x27xf32, #tpu.memory_space<vmem>>, vector<5x1xf32>
    %c25_143 = arith.constant 25 : index
    %c0_144 = arith.constant 0 : index
    %260 = vector.load %arg3[%c25_143, %c0_144] : memref<27x6xf32, #tpu.memory_space<vmem>>, vector<1x6xf32>
    %261 = vector.broadcast %259 : vector<5x1xf32> to vector<5x6xf32>
    %262 = vector.broadcast %260 : vector<1x6xf32> to vector<5x6xf32>
    %263 = arith.mulf %261, %262 : vector<5x6xf32>
    %264 = arith.addf %258, %263 : vector<5x6xf32>
    %c0_145 = arith.constant 0 : index
    %c26 = arith.constant 26 : index
    %265 = vector.load %arg4[%c0_145, %c26] : memref<5x27xf32, #tpu.memory_space<vmem>>, vector<5x1xf32>
    %c26_146 = arith.constant 26 : index
    %c0_147 = arith.constant 0 : index
    %266 = vector.load %arg3[%c26_146, %c0_147] : memref<27x6xf32, #tpu.memory_space<vmem>>, vector<1x6xf32>
    %267 = vector.broadcast %265 : vector<5x1xf32> to vector<5x6xf32>
    %268 = vector.broadcast %266 : vector<1x6xf32> to vector<5x6xf32>
    %269 = arith.mulf %267, %268 : vector<5x6xf32>
    %270 = arith.addf %264, %269 : vector<5x6xf32>
    %cst_148 = arith.constant 5.000000e-01 : f32
    %271 = vector.broadcast %cst_148 : f32 to vector<5x6xf32>
    %272 = arith.mulf %270, %271 : vector<5x6xf32>
    %273 = arith.mulf %270, %270 : vector<5x6xf32>
    %274 = arith.mulf %273, %270 : vector<5x6xf32>
    %cst_149 = arith.constant 4.471500e-02 : f32
    %275 = vector.broadcast %cst_149 : f32 to vector<5x6xf32>
    %276 = arith.mulf %274, %275 : vector<5x6xf32>
    %277 = arith.addf %270, %276 : vector<5x6xf32>
    %cst_150 = arith.constant 0.797884583 : f32
    %278 = vector.broadcast %cst_150 : f32 to vector<5x6xf32>
    %279 = arith.mulf %277, %278 : vector<5x6xf32>
    %280 = math.tanh %279 : vector<5x6xf32>
    %cst_151 = arith.constant 1.000000e+00 : f32
    %281 = vector.broadcast %cst_151 : f32 to vector<5x6xf32>
    %282 = arith.addf %280, %281 : vector<5x6xf32>
    %283 = arith.mulf %272, %282 : vector<5x6xf32>
    %c0_152 = arith.constant 0 : index
    %c0_153 = arith.constant 0 : index
    %284 = vector.load %arg10[%c0_152, %c0_153] : memref<5x6xf32, #tpu.memory_space<vmem>>, vector<5x6xf32>
    tpu.vector_store %arg10[%c0_152, %c0_153], %283 {strides = array<i32>} : memref<5x6xf32, #tpu.memory_space<vmem>>, vector<5x6xf32>,
    %c0_154 = arith.constant 0 : index
    %c0_155 = arith.constant 0 : index
    %c0_156 = arith.constant 0 : index
    %c0_157 = arith.constant 0 : index
    %285 = vector.load %arg6[%c0_154, %c0_155, %c0_156, %c0_157] : memref<4x5x5x64xf32, #tpu.memory_space<vmem>>, vector<1x1x5x64xf32>
    %286 = vector.shape_cast %285 : vector<1x1x5x64xf32> to vector<5x64xf32>
    %c1_158 = arith.constant 1 : index
    %c0_159 = arith.constant 0 : index
    %c0_160 = arith.constant 0 : index
    %c0_161 = arith.constant 0 : index
    %287 = vector.load %arg6[%c1_158, %c0_159, %c0_160, %c0_161] : memref<4x5x5x64xf32, #tpu.memory_space<vmem>>, vector<1x1x5x64xf32>
    %288 = vector.shape_cast %287 : vector<1x1x5x64xf32> to vector<5x64xf32>
    %c2_162 = arith.constant 2 : index
    %c0_163 = arith.constant 0 : index
    %c0_164 = arith.constant 0 : index
    %c0_165 = arith.constant 0 : index
    %289 = vector.load %arg6[%c2_162, %c0_163, %c0_164, %c0_165] : memref<4x5x5x64xf32, #tpu.memory_space<vmem>>, vector<1x1x5x64xf32>
    %290 = vector.shape_cast %289 : vector<1x1x5x64xf32> to vector<5x64xf32>
    %c3_166 = arith.constant 3 : index
    %c0_167 = arith.constant 0 : index
    %c0_168 = arith.constant 0 : index
    %c0_169 = arith.constant 0 : index
    %291 = vector.load %arg6[%c3_166, %c0_167, %c0_168, %c0_169] : memref<4x5x5x64xf32, #tpu.memory_space<vmem>>, vector<1x1x5x64xf32>
    %292 = vector.shape_cast %291 : vector<1x1x5x64xf32> to vector<5x64xf32>
    %c0_170 = arith.constant 0 : index
    %c0_171 = arith.constant 0 : index
    %293 = memref.load %arg7[%c0_170, %c0_171] : memref<8x4xf32, #tpu.memory_space<smem>>
    %294 = vector.broadcast %293 : f32 to vector<5x64xf32>
    %295 = arith.mulf %286, %294 : vector<5x64xf32>
    %c0_172 = arith.constant 0 : index
    %c1_173 = arith.constant 1 : index
    %296 = memref.load %arg7[%c0_172, %c1_173] : memref<8x4xf32, #tpu.memory_space<smem>>
    %297 = vector.broadcast %296 : f32 to vector<5x64xf32>
    %298 = arith.mulf %288, %297 : vector<5x64xf32>
    %299 = arith.addf %295, %298 : vector<5x64xf32>
    %c0_174 = arith.constant 0 : index
    %c2_175 = arith.constant 2 : index
    %300 = memref.load %arg7[%c0_174, %c2_175] : memref<8x4xf32, #tpu.memory_space<smem>>
    %301 = vector.broadcast %300 : f32 to vector<5x64xf32>
    %302 = arith.mulf %290, %301 : vector<5x64xf32>
    %303 = arith.addf %299, %302 : vector<5x64xf32>
    %c0_176 = arith.constant 0 : index
    %c3_177 = arith.constant 3 : index
    %304 = memref.load %arg7[%c0_176, %c3_177] : memref<8x4xf32, #tpu.memory_space<smem>>
    %305 = vector.broadcast %304 : f32 to vector<5x64xf32>
    %306 = arith.mulf %292, %305 : vector<5x64xf32>
    %307 = arith.addf %303, %306 : vector<5x64xf32>
    %c0_178 = arith.constant 0 : index
    %308 = memref.load %arg8[%c0_178] : memref<8xf32, #tpu.memory_space<smem>>
    %309 = vector.broadcast %308 : f32 to vector<5x64xf32>
    %310 = arith.addf %307, %309 : vector<5x64xf32>
    %cst_179 = arith.constant 5.000000e-01 : f32
    %311 = vector.broadcast %cst_179 : f32 to vector<5x64xf32>
    %312 = arith.mulf %310, %311 : vector<5x64xf32>
    %313 = arith.mulf %310, %310 : vector<5x64xf32>
    %314 = arith.mulf %313, %310 : vector<5x64xf32>
    %cst_180 = arith.constant 4.471500e-02 : f32
    %315 = vector.broadcast %cst_180 : f32 to vector<5x64xf32>
    %316 = arith.mulf %314, %315 : vector<5x64xf32>
    %317 = arith.addf %310, %316 : vector<5x64xf32>
    %cst_181 = arith.constant 0.797884583 : f32
    %318 = vector.broadcast %cst_181 : f32 to vector<5x64xf32>
    %319 = arith.mulf %317, %318 : vector<5x64xf32>
    %320 = math.tanh %319 : vector<5x64xf32>
    %cst_182 = arith.constant 1.000000e+00 : f32
    %321 = vector.broadcast %cst_182 : f32 to vector<5x64xf32>
    %322 = arith.addf %320, %321 : vector<5x64xf32>
    %323 = arith.mulf %312, %322 : vector<5x64xf32>
    %324 = arith.addf %323, %105 : vector<5x64xf32>
    %c0_183 = arith.constant 0 : index
    %c0_184 = arith.constant 0 : index
    %c0_185 = arith.constant 0 : index
    %c0_186 = arith.constant 0 : index
    %325 = vector.load %arg9[%c0_183, %c0_184, %c0_185, %c0_186] : memref<8x5x5x64xf32, #tpu.memory_space<vmem>>, vector<1x1x5x64xf32>
    %326 = vector.shape_cast %325 : vector<1x1x5x64xf32> to vector<5x64xf32>
    %327 = vector.shape_cast %324 : vector<5x64xf32> to vector<1x1x5x64xf32>
    tpu.vector_store %arg9[%c0_183, %c0_184, %c0_185, %c0_186], %327 {strides = array<i32>} : memref<8x5x5x64xf32, #tpu.memory_space<vmem>>, vector<1x1x5x64xf32>,
    %c1_187 = arith.constant 1 : index
    %c0_188 = arith.constant 0 : index
    %328 = memref.load %arg7[%c1_187, %c0_188] : memref<8x4xf32, #tpu.memory_space<smem>>
    %329 = vector.broadcast %328 : f32 to vector<5x64xf32>
    %330 = arith.mulf %286, %329 : vector<5x64xf32>
    %c1_189 = arith.constant 1 : index
    %c1_190 = arith.constant 1 : index
    %331 = memref.load %arg7[%c1_189, %c1_190] : memref<8x4xf32, #tpu.memory_space<smem>>
    %332 = vector.broadcast %331 : f32 to vector<5x64xf32>
    %333 = arith.mulf %288, %332 : vector<5x64xf32>
    %334 = arith.addf %330, %333 : vector<5x64xf32>
    %c1_191 = arith.constant 1 : index
    %c2_192 = arith.constant 2 : index
    %335 = memref.load %arg7[%c1_191, %c2_192] : memref<8x4xf32, #tpu.memory_space<smem>>
    %336 = vector.broadcast %335 : f32 to vector<5x64xf32>
    %337 = arith.mulf %290, %336 : vector<5x64xf32>
    %338 = arith.addf %334, %337 : vector<5x64xf32>
    %c1_193 = arith.constant 1 : index
    %c3_194 = arith.constant 3 : index
    %339 = memref.load %arg7[%c1_193, %c3_194] : memref<8x4xf32, #tpu.memory_space<smem>>
    %340 = vector.broadcast %339 : f32 to vector<5x64xf32>
    %341 = arith.mulf %292, %340 : vector<5x64xf32>
    %342 = arith.addf %338, %341 : vector<5x64xf32>
    %c1_195 = arith.constant 1 : index
    %343 = memref.load %arg8[%c1_195] : memref<8xf32, #tpu.memory_space<smem>>
    %344 = vector.broadcast %343 : f32 to vector<5x64xf32>
    %345 = arith.addf %342, %344 : vector<5x64xf32>
    %cst_196 = arith.constant 5.000000e-01 : f32
    %346 = vector.broadcast %cst_196 : f32 to vector<5x64xf32>
    %347 = arith.mulf %345, %346 : vector<5x64xf32>
    %348 = arith.mulf %345, %345 : vector<5x64xf32>
    %349 = arith.mulf %348, %345 : vector<5x64xf32>
    %cst_197 = arith.constant 4.471500e-02 : f32
    %350 = vector.broadcast %cst_197 : f32 to vector<5x64xf32>
    %351 = arith.mulf %349, %350 : vector<5x64xf32>
    %352 = arith.addf %345, %351 : vector<5x64xf32>
    %cst_198 = arith.constant 0.797884583 : f32
    %353 = vector.broadcast %cst_198 : f32 to vector<5x64xf32>
    %354 = arith.mulf %352, %353 : vector<5x64xf32>
    %355 = math.tanh %354 : vector<5x64xf32>
    %cst_199 = arith.constant 1.000000e+00 : f32
    %356 = vector.broadcast %cst_199 : f32 to vector<5x64xf32>
    %357 = arith.addf %355, %356 : vector<5x64xf32>
    %358 = arith.mulf %347, %357 : vector<5x64xf32>
    %359 = arith.addf %358, %105 : vector<5x64xf32>
    %c1_200 = arith.constant 1 : index
    %c0_201 = arith.constant 0 : index
    %c0_202 = arith.constant 0 : index
    %c0_203 = arith.constant 0 : index
    %360 = vector.load %arg9[%c1_200, %c0_201, %c0_202, %c0_203] : memref<8x5x5x64xf32, #tpu.memory_space<vmem>>, vector<1x1x5x64xf32>
    %361 = vector.shape_cast %360 : vector<1x1x5x64xf32> to vector<5x64xf32>
    %362 = vector.shape_cast %359 : vector<5x64xf32> to vector<1x1x5x64xf32>
    tpu.vector_store %arg9[%c1_200, %c0_201, %c0_202, %c0_203], %362 {strides = array<i32>} : memref<8x5x5x64xf32, #tpu.memory_space<vmem>>, vector<1x1x5x64xf32>,
    %c2_204 = arith.constant 2 : index
    %c0_205 = arith.constant 0 : index
    %363 = memref.load %arg7[%c2_204, %c0_205] : memref<8x4xf32, #tpu.memory_space<smem>>
    %364 = vector.broadcast %363 : f32 to vector<5x64xf32>
    %365 = arith.mulf %286, %364 : vector<5x64xf32>
    %c2_206 = arith.constant 2 : index
    %c1_207 = arith.constant 1 : index
    %366 = memref.load %arg7[%c2_206, %c1_207] : memref<8x4xf32, #tpu.memory_space<smem>>
    %367 = vector.broadcast %366 : f32 to vector<5x64xf32>
    %368 = arith.mulf %288, %367 : vector<5x64xf32>
    %369 = arith.addf %365, %368 : vector<5x64xf32>
    %c2_208 = arith.constant 2 : index
    %c2_209 = arith.constant 2 : index
    %370 = memref.load %arg7[%c2_208, %c2_209] : memref<8x4xf32, #tpu.memory_space<smem>>
    %371 = vector.broadcast %370 : f32 to vector<5x64xf32>
    %372 = arith.mulf %290, %371 : vector<5x64xf32>
    %373 = arith.addf %369, %372 : vector<5x64xf32>
    %c2_210 = arith.constant 2 : index
    %c3_211 = arith.constant 3 : index
    %374 = memref.load %arg7[%c2_210, %c3_211] : memref<8x4xf32, #tpu.memory_space<smem>>
    %375 = vector.broadcast %374 : f32 to vector<5x64xf32>
    %376 = arith.mulf %292, %375 : vector<5x64xf32>
    %377 = arith.addf %373, %376 : vector<5x64xf32>
    %c2_212 = arith.constant 2 : index
    %378 = memref.load %arg8[%c2_212] : memref<8xf32, #tpu.memory_space<smem>>
    %379 = vector.broadcast %378 : f32 to vector<5x64xf32>
    %380 = arith.addf %377, %379 : vector<5x64xf32>
    %cst_213 = arith.constant 5.000000e-01 : f32
    %381 = vector.broadcast %cst_213 : f32 to vector<5x64xf32>
    %382 = arith.mulf %380, %381 : vector<5x64xf32>
    %383 = arith.mulf %380, %380 : vector<5x64xf32>
    %384 = arith.mulf %383, %380 : vector<5x64xf32>
    %cst_214 = arith.constant 4.471500e-02 : f32
    %385 = vector.broadcast %cst_214 : f32 to vector<5x64xf32>
    %386 = arith.mulf %384, %385 : vector<5x64xf32>
    %387 = arith.addf %380, %386 : vector<5x64xf32>
    %cst_215 = arith.constant 0.797884583 : f32
    %388 = vector.broadcast %cst_215 : f32 to vector<5x64xf32>
    %389 = arith.mulf %387, %388 : vector<5x64xf32>
    %390 = math.tanh %389 : vector<5x64xf32>
    %cst_216 = arith.constant 1.000000e+00 : f32
    %391 = vector.broadcast %cst_216 : f32 to vector<5x64xf32>
    %392 = arith.addf %390, %391 : vector<5x64xf32>
    %393 = arith.mulf %382, %392 : vector<5x64xf32>
    %394 = arith.addf %393, %105 : vector<5x64xf32>
    %c2_217 = arith.constant 2 : index
    %c0_218 = arith.constant 0 : index
    %c0_219 = arith.constant 0 : index
    %c0_220 = arith.constant 0 : index
    %395 = vector.load %arg9[%c2_217, %c0_218, %c0_219, %c0_220] : memref<8x5x5x64xf32, #tpu.memory_space<vmem>>, vector<1x1x5x64xf32>
    %396 = vector.shape_cast %395 : vector<1x1x5x64xf32> to vector<5x64xf32>
    %397 = vector.shape_cast %394 : vector<5x64xf32> to vector<1x1x5x64xf32>
    tpu.vector_store %arg9[%c2_217, %c0_218, %c0_219, %c0_220], %397 {strides = array<i32>} : memref<8x5x5x64xf32, #tpu.memory_space<vmem>>, vector<1x1x5x64xf32>,
    %c3_221 = arith.constant 3 : index
    %c0_222 = arith.constant 0 : index
    %398 = memref.load %arg7[%c3_221, %c0_222] : memref<8x4xf32, #tpu.memory_space<smem>>
    %399 = vector.broadcast %398 : f32 to vector<5x64xf32>
    %400 = arith.mulf %286, %399 : vector<5x64xf32>
    %c3_223 = arith.constant 3 : index
    %c1_224 = arith.constant 1 : index
    %401 = memref.load %arg7[%c3_223, %c1_224] : memref<8x4xf32, #tpu.memory_space<smem>>
    %402 = vector.broadcast %401 : f32 to vector<5x64xf32>
    %403 = arith.mulf %288, %402 : vector<5x64xf32>
    %404 = arith.addf %400, %403 : vector<5x64xf32>
    %c3_225 = arith.constant 3 : index
    %c2_226 = arith.constant 2 : index
    %405 = memref.load %arg7[%c3_225, %c2_226] : memref<8x4xf32, #tpu.memory_space<smem>>
    %406 = vector.broadcast %405 : f32 to vector<5x64xf32>
    %407 = arith.mulf %290, %406 : vector<5x64xf32>
    %408 = arith.addf %404, %407 : vector<5x64xf32>
    %c3_227 = arith.constant 3 : index
    %c3_228 = arith.constant 3 : index
    %409 = memref.load %arg7[%c3_227, %c3_228] : memref<8x4xf32, #tpu.memory_space<smem>>
    %410 = vector.broadcast %409 : f32 to vector<5x64xf32>
    %411 = arith.mulf %292, %410 : vector<5x64xf32>
    %412 = arith.addf %408, %411 : vector<5x64xf32>
    %c3_229 = arith.constant 3 : index
    %413 = memref.load %arg8[%c3_229] : memref<8xf32, #tpu.memory_space<smem>>
    %414 = vector.broadcast %413 : f32 to vector<5x64xf32>
    %415 = arith.addf %412, %414 : vector<5x64xf32>
    %cst_230 = arith.constant 5.000000e-01 : f32
    %416 = vector.broadcast %cst_230 : f32 to vector<5x64xf32>
    %417 = arith.mulf %415, %416 : vector<5x64xf32>
    %418 = arith.mulf %415, %415 : vector<5x64xf32>
    %419 = arith.mulf %418, %415 : vector<5x64xf32>
    %cst_231 = arith.constant 4.471500e-02 : f32
    %420 = vector.broadcast %cst_231 : f32 to vector<5x64xf32>
    %421 = arith.mulf %419, %420 : vector<5x64xf32>
    %422 = arith.addf %415, %421 : vector<5x64xf32>
    %cst_232 = arith.constant 0.797884583 : f32
    %423 = vector.broadcast %cst_232 : f32 to vector<5x64xf32>
    %424 = arith.mulf %422, %423 : vector<5x64xf32>
    %425 = math.tanh %424 : vector<5x64xf32>
    %cst_233 = arith.constant 1.000000e+00 : f32
    %426 = vector.broadcast %cst_233 : f32 to vector<5x64xf32>
    %427 = arith.addf %425, %426 : vector<5x64xf32>
    %428 = arith.mulf %417, %427 : vector<5x64xf32>
    %429 = arith.addf %428, %105 : vector<5x64xf32>
    %c3_234 = arith.constant 3 : index
    %c0_235 = arith.constant 0 : index
    %c0_236 = arith.constant 0 : index
    %c0_237 = arith.constant 0 : index
    %430 = vector.load %arg9[%c3_234, %c0_235, %c0_236, %c0_237] : memref<8x5x5x64xf32, #tpu.memory_space<vmem>>, vector<1x1x5x64xf32>
    %431 = vector.shape_cast %430 : vector<1x1x5x64xf32> to vector<5x64xf32>
    %432 = vector.shape_cast %429 : vector<5x64xf32> to vector<1x1x5x64xf32>
    tpu.vector_store %arg9[%c3_234, %c0_235, %c0_236, %c0_237], %432 {strides = array<i32>} : memref<8x5x5x64xf32, #tpu.memory_space<vmem>>, vector<1x1x5x64xf32>,
    %c4_238 = arith.constant 4 : index
    %c0_239 = arith.constant 0 : index
    %433 = memref.load %arg7[%c4_238, %c0_239] : memref<8x4xf32, #tpu.memory_space<smem>>
    %434 = vector.broadcast %433 : f32 to vector<5x64xf32>
    %435 = arith.mulf %286, %434 : vector<5x64xf32>
    %c4_240 = arith.constant 4 : index
    %c1_241 = arith.constant 1 : index
    %436 = memref.load %arg7[%c4_240, %c1_241] : memref<8x4xf32, #tpu.memory_space<smem>>
    %437 = vector.broadcast %436 : f32 to vector<5x64xf32>
    %438 = arith.mulf %288, %437 : vector<5x64xf32>
    %439 = arith.addf %435, %438 : vector<5x64xf32>
    %c4_242 = arith.constant 4 : index
    %c2_243 = arith.constant 2 : index
    %440 = memref.load %arg7[%c4_242, %c2_243] : memref<8x4xf32, #tpu.memory_space<smem>>
    %441 = vector.broadcast %440 : f32 to vector<5x64xf32>
    %442 = arith.mulf %290, %441 : vector<5x64xf32>
    %443 = arith.addf %439, %442 : vector<5x64xf32>
    %c4_244 = arith.constant 4 : index
    %c3_245 = arith.constant 3 : index
    %444 = memref.load %arg7[%c4_244, %c3_245] : memref<8x4xf32, #tpu.memory_space<smem>>
    %445 = vector.broadcast %444 : f32 to vector<5x64xf32>
    %446 = arith.mulf %292, %445 : vector<5x64xf32>
    %447 = arith.addf %443, %446 : vector<5x64xf32>
    %c4_246 = arith.constant 4 : index
    %448 = memref.load %arg8[%c4_246] : memref<8xf32, #tpu.memory_space<smem>>
    %449 = vector.broadcast %448 : f32 to vector<5x64xf32>
    %450 = arith.addf %447, %449 : vector<5x64xf32>
    %cst_247 = arith.constant 5.000000e-01 : f32
    %451 = vector.broadcast %cst_247 : f32 to vector<5x64xf32>
    %452 = arith.mulf %450, %451 : vector<5x64xf32>
    %453 = arith.mulf %450, %450 : vector<5x64xf32>
    %454 = arith.mulf %453, %450 : vector<5x64xf32>
    %cst_248 = arith.constant 4.471500e-02 : f32
    %455 = vector.broadcast %cst_248 : f32 to vector<5x64xf32>
    %456 = arith.mulf %454, %455 : vector<5x64xf32>
    %457 = arith.addf %450, %456 : vector<5x64xf32>
    %cst_249 = arith.constant 0.797884583 : f32
    %458 = vector.broadcast %cst_249 : f32 to vector<5x64xf32>
    %459 = arith.mulf %457, %458 : vector<5x64xf32>
    %460 = math.tanh %459 : vector<5x64xf32>
    %cst_250 = arith.constant 1.000000e+00 : f32
    %461 = vector.broadcast %cst_250 : f32 to vector<5x64xf32>
    %462 = arith.addf %460, %461 : vector<5x64xf32>
    %463 = arith.mulf %452, %462 : vector<5x64xf32>
    %464 = arith.addf %463, %105 : vector<5x64xf32>
    %c4_251 = arith.constant 4 : index
    %c0_252 = arith.constant 0 : index
    %c0_253 = arith.constant 0 : index
    %c0_254 = arith.constant 0 : index
    %465 = vector.load %arg9[%c4_251, %c0_252, %c0_253, %c0_254] : memref<8x5x5x64xf32, #tpu.memory_space<vmem>>, vector<1x1x5x64xf32>
    %466 = vector.shape_cast %465 : vector<1x1x5x64xf32> to vector<5x64xf32>
    %467 = vector.shape_cast %464 : vector<5x64xf32> to vector<1x1x5x64xf32>
    tpu.vector_store %arg9[%c4_251, %c0_252, %c0_253, %c0_254], %467 {strides = array<i32>} : memref<8x5x5x64xf32, #tpu.memory_space<vmem>>, vector<1x1x5x64xf32>,
    %c5_255 = arith.constant 5 : index
    %c0_256 = arith.constant 0 : index
    %468 = memref.load %arg7[%c5_255, %c0_256] : memref<8x4xf32, #tpu.memory_space<smem>>
    %469 = vector.broadcast %468 : f32 to vector<5x64xf32>
    %470 = arith.mulf %286, %469 : vector<5x64xf32>
    %c5_257 = arith.constant 5 : index
    %c1_258 = arith.constant 1 : index
    %471 = memref.load %arg7[%c5_257, %c1_258] : memref<8x4xf32, #tpu.memory_space<smem>>
    %472 = vector.broadcast %471 : f32 to vector<5x64xf32>
    %473 = arith.mulf %288, %472 : vector<5x64xf32>
    %474 = arith.addf %470, %473 : vector<5x64xf32>
    %c5_259 = arith.constant 5 : index
    %c2_260 = arith.constant 2 : index
    %475 = memref.load %arg7[%c5_259, %c2_260] : memref<8x4xf32, #tpu.memory_space<smem>>
    %476 = vector.broadcast %475 : f32 to vector<5x64xf32>
    %477 = arith.mulf %290, %476 : vector<5x64xf32>
    %478 = arith.addf %474, %477 : vector<5x64xf32>
    %c5_261 = arith.constant 5 : index
    %c3_262 = arith.constant 3 : index
    %479 = memref.load %arg7[%c5_261, %c3_262] : memref<8x4xf32, #tpu.memory_space<smem>>
    %480 = vector.broadcast %479 : f32 to vector<5x64xf32>
    %481 = arith.mulf %292, %480 : vector<5x64xf32>
    %482 = arith.addf %478, %481 : vector<5x64xf32>
    %c5_263 = arith.constant 5 : index
    %483 = memref.load %arg8[%c5_263] : memref<8xf32, #tpu.memory_space<smem>>
    %484 = vector.broadcast %483 : f32 to vector<5x64xf32>
    %485 = arith.addf %482, %484 : vector<5x64xf32>
    %cst_264 = arith.constant 5.000000e-01 : f32
    %486 = vector.broadcast %cst_264 : f32 to vector<5x64xf32>
    %487 = arith.mulf %485, %486 : vector<5x64xf32>
    %488 = arith.mulf %485, %485 : vector<5x64xf32>
    %489 = arith.mulf %488, %485 : vector<5x64xf32>
    %cst_265 = arith.constant 4.471500e-02 : f32
    %490 = vector.broadcast %cst_265 : f32 to vector<5x64xf32>
    %491 = arith.mulf %489, %490 : vector<5x64xf32>
    %492 = arith.addf %485, %491 : vector<5x64xf32>
    %cst_266 = arith.constant 0.797884583 : f32
    %493 = vector.broadcast %cst_266 : f32 to vector<5x64xf32>
    %494 = arith.mulf %492, %493 : vector<5x64xf32>
    %495 = math.tanh %494 : vector<5x64xf32>
    %cst_267 = arith.constant 1.000000e+00 : f32
    %496 = vector.broadcast %cst_267 : f32 to vector<5x64xf32>
    %497 = arith.addf %495, %496 : vector<5x64xf32>
    %498 = arith.mulf %487, %497 : vector<5x64xf32>
    %499 = arith.addf %498, %105 : vector<5x64xf32>
    %c5_268 = arith.constant 5 : index
    %c0_269 = arith.constant 0 : index
    %c0_270 = arith.constant 0 : index
    %c0_271 = arith.constant 0 : index
    %500 = vector.load %arg9[%c5_268, %c0_269, %c0_270, %c0_271] : memref<8x5x5x64xf32, #tpu.memory_space<vmem>>, vector<1x1x5x64xf32>
    %501 = vector.shape_cast %500 : vector<1x1x5x64xf32> to vector<5x64xf32>
    %502 = vector.shape_cast %499 : vector<5x64xf32> to vector<1x1x5x64xf32>
    tpu.vector_store %arg9[%c5_268, %c0_269, %c0_270, %c0_271], %502 {strides = array<i32>} : memref<8x5x5x64xf32, #tpu.memory_space<vmem>>, vector<1x1x5x64xf32>,
    %c6_272 = arith.constant 6 : index
    %c0_273 = arith.constant 0 : index
    %503 = memref.load %arg7[%c6_272, %c0_273] : memref<8x4xf32, #tpu.memory_space<smem>>
    %504 = vector.broadcast %503 : f32 to vector<5x64xf32>
    %505 = arith.mulf %286, %504 : vector<5x64xf32>
    %c6_274 = arith.constant 6 : index
    %c1_275 = arith.constant 1 : index
    %506 = memref.load %arg7[%c6_274, %c1_275] : memref<8x4xf32, #tpu.memory_space<smem>>
    %507 = vector.broadcast %506 : f32 to vector<5x64xf32>
    %508 = arith.mulf %288, %507 : vector<5x64xf32>
    %509 = arith.addf %505, %508 : vector<5x64xf32>
    %c6_276 = arith.constant 6 : index
    %c2_277 = arith.constant 2 : index
    %510 = memref.load %arg7[%c6_276, %c2_277] : memref<8x4xf32, #tpu.memory_space<smem>>
    %511 = vector.broadcast %510 : f32 to vector<5x64xf32>
    %512 = arith.mulf %290, %511 : vector<5x64xf32>
    %513 = arith.addf %509, %512 : vector<5x64xf32>
    %c6_278 = arith.constant 6 : index
    %c3_279 = arith.constant 3 : index
    %514 = memref.load %arg7[%c6_278, %c3_279] : memref<8x4xf32, #tpu.memory_space<smem>>
    %515 = vector.broadcast %514 : f32 to vector<5x64xf32>
    %516 = arith.mulf %292, %515 : vector<5x64xf32>
    %517 = arith.addf %513, %516 : vector<5x64xf32>
    %c6_280 = arith.constant 6 : index
    %518 = memref.load %arg8[%c6_280] : memref<8xf32, #tpu.memory_space<smem>>
    %519 = vector.broadcast %518 : f32 to vector<5x64xf32>
    %520 = arith.addf %517, %519 : vector<5x64xf32>
    %cst_281 = arith.constant 5.000000e-01 : f32
    %521 = vector.broadcast %cst_281 : f32 to vector<5x64xf32>
    %522 = arith.mulf %520, %521 : vector<5x64xf32>
    %523 = arith.mulf %520, %520 : vector<5x64xf32>
    %524 = arith.mulf %523, %520 : vector<5x64xf32>
    %cst_282 = arith.constant 4.471500e-02 : f32
    %525 = vector.broadcast %cst_282 : f32 to vector<5x64xf32>
    %526 = arith.mulf %524, %525 : vector<5x64xf32>
    %527 = arith.addf %520, %526 : vector<5x64xf32>
    %cst_283 = arith.constant 0.797884583 : f32
    %528 = vector.broadcast %cst_283 : f32 to vector<5x64xf32>
    %529 = arith.mulf %527, %528 : vector<5x64xf32>
    %530 = math.tanh %529 : vector<5x64xf32>
    %cst_284 = arith.constant 1.000000e+00 : f32
    %531 = vector.broadcast %cst_284 : f32 to vector<5x64xf32>
    %532 = arith.addf %530, %531 : vector<5x64xf32>
    %533 = arith.mulf %522, %532 : vector<5x64xf32>
    %534 = arith.addf %533, %105 : vector<5x64xf32>
    %c6_285 = arith.constant 6 : index
    %c0_286 = arith.constant 0 : index
    %c0_287 = arith.constant 0 : index
    %c0_288 = arith.constant 0 : index
    %535 = vector.load %arg9[%c6_285, %c0_286, %c0_287, %c0_288] : memref<8x5x5x64xf32, #tpu.memory_space<vmem>>, vector<1x1x5x64xf32>
    %536 = vector.shape_cast %535 : vector<1x1x5x64xf32> to vector<5x64xf32>
    %537 = vector.shape_cast %534 : vector<5x64xf32> to vector<1x1x5x64xf32>
    tpu.vector_store %arg9[%c6_285, %c0_286, %c0_287, %c0_288], %537 {strides = array<i32>} : memref<8x5x5x64xf32, #tpu.memory_space<vmem>>, vector<1x1x5x64xf32>,
    %c7_289 = arith.constant 7 : index
    %c0_290 = arith.constant 0 : index
    %538 = memref.load %arg7[%c7_289, %c0_290] : memref<8x4xf32, #tpu.memory_space<smem>>
    %539 = vector.broadcast %538 : f32 to vector<5x64xf32>
    %540 = arith.mulf %286, %539 : vector<5x64xf32>
    %c7_291 = arith.constant 7 : index
    %c1_292 = arith.constant 1 : index
    %541 = memref.load %arg7[%c7_291, %c1_292] : memref<8x4xf32, #tpu.memory_space<smem>>
    %542 = vector.broadcast %541 : f32 to vector<5x64xf32>
    %543 = arith.mulf %288, %542 : vector<5x64xf32>
    %544 = arith.addf %540, %543 : vector<5x64xf32>
    %c7_293 = arith.constant 7 : index
    %c2_294 = arith.constant 2 : index
    %545 = memref.load %arg7[%c7_293, %c2_294] : memref<8x4xf32, #tpu.memory_space<smem>>
    %546 = vector.broadcast %545 : f32 to vector<5x64xf32>
    %547 = arith.mulf %290, %546 : vector<5x64xf32>
    %548 = arith.addf %544, %547 : vector<5x64xf32>
    %c7_295 = arith.constant 7 : index
    %c3_296 = arith.constant 3 : index
    %549 = memref.load %arg7[%c7_295, %c3_296] : memref<8x4xf32, #tpu.memory_space<smem>>
    %550 = vector.broadcast %549 : f32 to vector<5x64xf32>
    %551 = arith.mulf %292, %550 : vector<5x64xf32>
    %552 = arith.addf %548, %551 : vector<5x64xf32>
    %c7_297 = arith.constant 7 : index
    %553 = memref.load %arg8[%c7_297] : memref<8xf32, #tpu.memory_space<smem>>
    %554 = vector.broadcast %553 : f32 to vector<5x64xf32>
    %555 = arith.addf %552, %554 : vector<5x64xf32>
    %cst_298 = arith.constant 5.000000e-01 : f32
    %556 = vector.broadcast %cst_298 : f32 to vector<5x64xf32>
    %557 = arith.mulf %555, %556 : vector<5x64xf32>
    %558 = arith.mulf %555, %555 : vector<5x64xf32>
    %559 = arith.mulf %558, %555 : vector<5x64xf32>
    %cst_299 = arith.constant 4.471500e-02 : f32
    %560 = vector.broadcast %cst_299 : f32 to vector<5x64xf32>
    %561 = arith.mulf %559, %560 : vector<5x64xf32>
    %562 = arith.addf %555, %561 : vector<5x64xf32>
    %cst_300 = arith.constant 0.797884583 : f32
    %563 = vector.broadcast %cst_300 : f32 to vector<5x64xf32>
    %564 = arith.mulf %562, %563 : vector<5x64xf32>
    %565 = math.tanh %564 : vector<5x64xf32>
    %cst_301 = arith.constant 1.000000e+00 : f32
    %566 = vector.broadcast %cst_301 : f32 to vector<5x64xf32>
    %567 = arith.addf %565, %566 : vector<5x64xf32>
    %568 = arith.mulf %557, %567 : vector<5x64xf32>
    %569 = arith.addf %568, %105 : vector<5x64xf32>
    %c7_302 = arith.constant 7 : index
    %c0_303 = arith.constant 0 : index
    %c0_304 = arith.constant 0 : index
    %c0_305 = arith.constant 0 : index
    %570 = vector.load %arg9[%c7_302, %c0_303, %c0_304, %c0_305] : memref<8x5x5x64xf32, #tpu.memory_space<vmem>>, vector<1x1x5x64xf32>
    %571 = vector.shape_cast %570 : vector<1x1x5x64xf32> to vector<5x64xf32>
    %572 = vector.shape_cast %569 : vector<5x64xf32> to vector<1x1x5x64xf32>
    tpu.vector_store %arg9[%c7_302, %c0_303, %c0_304, %c0_305], %572 {strides = array<i32>} : memref<8x5x5x64xf32, #tpu.memory_space<vmem>>, vector<1x1x5x64xf32>,
    %c0_306 = arith.constant 0 : index
    %c1_307 = arith.constant 1 : index
    %c0_308 = arith.constant 0 : index
    %c0_309 = arith.constant 0 : index
    %573 = vector.load %arg6[%c0_306, %c1_307, %c0_308, %c0_309] : memref<4x5x5x64xf32, #tpu.memory_space<vmem>>, vector<1x1x5x64xf32>
    %574 = vector.shape_cast %573 : vector<1x1x5x64xf32> to vector<5x64xf32>
    %c1_310 = arith.constant 1 : index
    %c1_311 = arith.constant 1 : index
    %c0_312 = arith.constant 0 : index
    %c0_313 = arith.constant 0 : index
    %575 = vector.load %arg6[%c1_310, %c1_311, %c0_312, %c0_313] : memref<4x5x5x64xf32, #tpu.memory_space<vmem>>, vector<1x1x5x64xf32>
    %576 = vector.shape_cast %575 : vector<1x1x5x64xf32> to vector<5x64xf32>
    %c2_314 = arith.constant 2 : index
    %c1_315 = arith.constant 1 : index
    %c0_316 = arith.constant 0 : index
    %c0_317 = arith.constant 0 : index
    %577 = vector.load %arg6[%c2_314, %c1_315, %c0_316, %c0_317] : memref<4x5x5x64xf32, #tpu.memory_space<vmem>>, vector<1x1x5x64xf32>
    %578 = vector.shape_cast %577 : vector<1x1x5x64xf32> to vector<5x64xf32>
    %c3_318 = arith.constant 3 : index
    %c1_319 = arith.constant 1 : index
    %c0_320 = arith.constant 0 : index
    %c0_321 = arith.constant 0 : index
    %579 = vector.load %arg6[%c3_318, %c1_319, %c0_320, %c0_321] : memref<4x5x5x64xf32, #tpu.memory_space<vmem>>, vector<1x1x5x64xf32>
    %580 = vector.shape_cast %579 : vector<1x1x5x64xf32> to vector<5x64xf32>
    %c0_322 = arith.constant 0 : index
    %c0_323 = arith.constant 0 : index
    %581 = memref.load %arg7[%c0_322, %c0_323] : memref<8x4xf32, #tpu.memory_space<smem>>
    %582 = vector.broadcast %581 : f32 to vector<5x64xf32>
    %583 = arith.mulf %574, %582 : vector<5x64xf32>
    %c0_324 = arith.constant 0 : index
    %c1_325 = arith.constant 1 : index
    %584 = memref.load %arg7[%c0_324, %c1_325] : memref<8x4xf32, #tpu.memory_space<smem>>
    %585 = vector.broadcast %584 : f32 to vector<5x64xf32>
    %586 = arith.mulf %576, %585 : vector<5x64xf32>
    %587 = arith.addf %583, %586 : vector<5x64xf32>
    %c0_326 = arith.constant 0 : index
    %c2_327 = arith.constant 2 : index
    %588 = memref.load %arg7[%c0_326, %c2_327] : memref<8x4xf32, #tpu.memory_space<smem>>
    %589 = vector.broadcast %588 : f32 to vector<5x64xf32>
    %590 = arith.mulf %578, %589 : vector<5x64xf32>
    %591 = arith.addf %587, %590 : vector<5x64xf32>
    %c0_328 = arith.constant 0 : index
    %c3_329 = arith.constant 3 : index
    %592 = memref.load %arg7[%c0_328, %c3_329] : memref<8x4xf32, #tpu.memory_space<smem>>
    %593 = vector.broadcast %592 : f32 to vector<5x64xf32>
    %594 = arith.mulf %580, %593 : vector<5x64xf32>
    %595 = arith.addf %591, %594 : vector<5x64xf32>
    %c0_330 = arith.constant 0 : index
    %596 = memref.load %arg8[%c0_330] : memref<8xf32, #tpu.memory_space<smem>>
    %597 = vector.broadcast %596 : f32 to vector<5x64xf32>
    %598 = arith.addf %595, %597 : vector<5x64xf32>
    %cst_331 = arith.constant 5.000000e-01 : f32
    %599 = vector.broadcast %cst_331 : f32 to vector<5x64xf32>
    %600 = arith.mulf %598, %599 : vector<5x64xf32>
    %601 = arith.mulf %598, %598 : vector<5x64xf32>
    %602 = arith.mulf %601, %598 : vector<5x64xf32>
    %cst_332 = arith.constant 4.471500e-02 : f32
    %603 = vector.broadcast %cst_332 : f32 to vector<5x64xf32>
    %604 = arith.mulf %602, %603 : vector<5x64xf32>
    %605 = arith.addf %598, %604 : vector<5x64xf32>
    %cst_333 = arith.constant 0.797884583 : f32
    %606 = vector.broadcast %cst_333 : f32 to vector<5x64xf32>
    %607 = arith.mulf %605, %606 : vector<5x64xf32>
    %608 = math.tanh %607 : vector<5x64xf32>
    %cst_334 = arith.constant 1.000000e+00 : f32
    %609 = vector.broadcast %cst_334 : f32 to vector<5x64xf32>
    %610 = arith.addf %608, %609 : vector<5x64xf32>
    %611 = arith.mulf %600, %610 : vector<5x64xf32>
    %612 = arith.addf %611, %105 : vector<5x64xf32>
    %c0_335 = arith.constant 0 : index
    %c1_336 = arith.constant 1 : index
    %c0_337 = arith.constant 0 : index
    %c0_338 = arith.constant 0 : index
    %613 = vector.load %arg9[%c0_335, %c1_336, %c0_337, %c0_338] : memref<8x5x5x64xf32, #tpu.memory_space<vmem>>, vector<1x1x5x64xf32>
    %614 = vector.shape_cast %613 : vector<1x1x5x64xf32> to vector<5x64xf32>
    %615 = vector.shape_cast %612 : vector<5x64xf32> to vector<1x1x5x64xf32>
    tpu.vector_store %arg9[%c0_335, %c1_336, %c0_337, %c0_338], %615 {strides = array<i32>} : memref<8x5x5x64xf32, #tpu.memory_space<vmem>>, vector<1x1x5x64xf32>,
    %c1_339 = arith.constant 1 : index
    %c0_340 = arith.constant 0 : index
    %616 = memref.load %arg7[%c1_339, %c0_340] : memref<8x4xf32, #tpu.memory_space<smem>>
    %617 = vector.broadcast %616 : f32 to vector<5x64xf32>
    %618 = arith.mulf %574, %617 : vector<5x64xf32>
    %c1_341 = arith.constant 1 : index
    %c1_342 = arith.constant 1 : index
    %619 = memref.load %arg7[%c1_341, %c1_342] : memref<8x4xf32, #tpu.memory_space<smem>>
    %620 = vector.broadcast %619 : f32 to vector<5x64xf32>
    %621 = arith.mulf %576, %620 : vector<5x64xf32>
    %622 = arith.addf %618, %621 : vector<5x64xf32>
    %c1_343 = arith.constant 1 : index
    %c2_344 = arith.constant 2 : index
    %623 = memref.load %arg7[%c1_343, %c2_344] : memref<8x4xf32, #tpu.memory_space<smem>>
    %624 = vector.broadcast %623 : f32 to vector<5x64xf32>
    %625 = arith.mulf %578, %624 : vector<5x64xf32>
    %626 = arith.addf %622, %625 : vector<5x64xf32>
    %c1_345 = arith.constant 1 : index
    %c3_346 = arith.constant 3 : index
    %627 = memref.load %arg7[%c1_345, %c3_346] : memref<8x4xf32, #tpu.memory_space<smem>>
    %628 = vector.broadcast %627 : f32 to vector<5x64xf32>
    %629 = arith.mulf %580, %628 : vector<5x64xf32>
    %630 = arith.addf %626, %629 : vector<5x64xf32>
    %c1_347 = arith.constant 1 : index
    %631 = memref.load %arg8[%c1_347] : memref<8xf32, #tpu.memory_space<smem>>
    %632 = vector.broadcast %631 : f32 to vector<5x64xf32>
    %633 = arith.addf %630, %632 : vector<5x64xf32>
    %cst_348 = arith.constant 5.000000e-01 : f32
    %634 = vector.broadcast %cst_348 : f32 to vector<5x64xf32>
    %635 = arith.mulf %633, %634 : vector<5x64xf32>
    %636 = arith.mulf %633, %633 : vector<5x64xf32>
    %637 = arith.mulf %636, %633 : vector<5x64xf32>
    %cst_349 = arith.constant 4.471500e-02 : f32
    %638 = vector.broadcast %cst_349 : f32 to vector<5x64xf32>
    %639 = arith.mulf %637, %638 : vector<5x64xf32>
    %640 = arith.addf %633, %639 : vector<5x64xf32>
    %cst_350 = arith.constant 0.797884583 : f32
    %641 = vector.broadcast %cst_350 : f32 to vector<5x64xf32>
    %642 = arith.mulf %640, %641 : vector<5x64xf32>
    %643 = math.tanh %642 : vector<5x64xf32>
    %cst_351 = arith.constant 1.000000e+00 : f32
    %644 = vector.broadcast %cst_351 : f32 to vector<5x64xf32>
    %645 = arith.addf %643, %644 : vector<5x64xf32>
    %646 = arith.mulf %635, %645 : vector<5x64xf32>
    %647 = arith.addf %646, %105 : vector<5x64xf32>
    %c1_352 = arith.constant 1 : index
    %c1_353 = arith.constant 1 : index
    %c0_354 = arith.constant 0 : index
    %c0_355 = arith.constant 0 : index
    %648 = vector.load %arg9[%c1_352, %c1_353, %c0_354, %c0_355] : memref<8x5x5x64xf32, #tpu.memory_space<vmem>>, vector<1x1x5x64xf32>
    %649 = vector.shape_cast %648 : vector<1x1x5x64xf32> to vector<5x64xf32>
    %650 = vector.shape_cast %647 : vector<5x64xf32> to vector<1x1x5x64xf32>
    tpu.vector_store %arg9[%c1_352, %c1_353, %c0_354, %c0_355], %650 {strides = array<i32>} : memref<8x5x5x64xf32, #tpu.memory_space<vmem>>, vector<1x1x5x64xf32>,
    %c2_356 = arith.constant 2 : index
    %c0_357 = arith.constant 0 : index
    %651 = memref.load %arg7[%c2_356, %c0_357] : memref<8x4xf32, #tpu.memory_space<smem>>
    %652 = vector.broadcast %651 : f32 to vector<5x64xf32>
    %653 = arith.mulf %574, %652 : vector<5x64xf32>
    %c2_358 = arith.constant 2 : index
    %c1_359 = arith.constant 1 : index
    %654 = memref.load %arg7[%c2_358, %c1_359] : memref<8x4xf32, #tpu.memory_space<smem>>
    %655 = vector.broadcast %654 : f32 to vector<5x64xf32>
    %656 = arith.mulf %576, %655 : vector<5x64xf32>
    %657 = arith.addf %653, %656 : vector<5x64xf32>
    %c2_360 = arith.constant 2 : index
    %c2_361 = arith.constant 2 : index
    %658 = memref.load %arg7[%c2_360, %c2_361] : memref<8x4xf32, #tpu.memory_space<smem>>
    %659 = vector.broadcast %658 : f32 to vector<5x64xf32>
    %660 = arith.mulf %578, %659 : vector<5x64xf32>
    %661 = arith.addf %657, %660 : vector<5x64xf32>
    %c2_362 = arith.constant 2 : index
    %c3_363 = arith.constant 3 : index
    %662 = memref.load %arg7[%c2_362, %c3_363] : memref<8x4xf32, #tpu.memory_space<smem>>
    %663 = vector.broadcast %662 : f32 to vector<5x64xf32>
    %664 = arith.mulf %580, %663 : vector<5x64xf32>
    %665 = arith.addf %661, %664 : vector<5x64xf32>
    %c2_364 = arith.constant 2 : index
    %666 = memref.load %arg8[%c2_364] : memref<8xf32, #tpu.memory_space<smem>>
    %667 = vector.broadcast %666 : f32 to vector<5x64xf32>
    %668 = arith.addf %665, %667 : vector<5x64xf32>
    %cst_365 = arith.constant 5.000000e-01 : f32
    %669 = vector.broadcast %cst_365 : f32 to vector<5x64xf32>
    %670 = arith.mulf %668, %669 : vector<5x64xf32>
    %671 = arith.mulf %668, %668 : vector<5x64xf32>
    %672 = arith.mulf %671, %668 : vector<5x64xf32>
    %cst_366 = arith.constant 4.471500e-02 : f32
    %673 = vector.broadcast %cst_366 : f32 to vector<5x64xf32>
    %674 = arith.mulf %672, %673 : vector<5x64xf32>
    %675 = arith.addf %668, %674 : vector<5x64xf32>
    %cst_367 = arith.constant 0.797884583 : f32
    %676 = vector.broadcast %cst_367 : f32 to vector<5x64xf32>
    %677 = arith.mulf %675, %676 : vector<5x64xf32>
    %678 = math.tanh %677 : vector<5x64xf32>
    %cst_368 = arith.constant 1.000000e+00 : f32
    %679 = vector.broadcast %cst_368 : f32 to vector<5x64xf32>
    %680 = arith.addf %678, %679 : vector<5x64xf32>
    %681 = arith.mulf %670, %680 : vector<5x64xf32>
    %682 = arith.addf %681, %105 : vector<5x64xf32>
    %c2_369 = arith.constant 2 : index
    %c1_370 = arith.constant 1 : index
    %c0_371 = arith.constant 0 : index
    %c0_372 = arith.constant 0 : index
    %683 = vector.load %arg9[%c2_369, %c1_370, %c0_371, %c0_372] : memref<8x5x5x64xf32, #tpu.memory_space<vmem>>, vector<1x1x5x64xf32>
    %684 = vector.shape_cast %683 : vector<1x1x5x64xf32> to vector<5x64xf32>
    %685 = vector.shape_cast %682 : vector<5x64xf32> to vector<1x1x5x64xf32>
    tpu.vector_store %arg9[%c2_369, %c1_370, %c0_371, %c0_372], %685 {strides = array<i32>} : memref<8x5x5x64xf32, #tpu.memory_space<vmem>>, vector<1x1x5x64xf32>,
    %c3_373 = arith.constant 3 : index
    %c0_374 = arith.constant 0 : index
    %686 = memref.load %arg7[%c3_373, %c0_374] : memref<8x4xf32, #tpu.memory_space<smem>>
    %687 = vector.broadcast %686 : f32 to vector<5x64xf32>
    %688 = arith.mulf %574, %687 : vector<5x64xf32>
    %c3_375 = arith.constant 3 : index
    %c1_376 = arith.constant 1 : index
    %689 = memref.load %arg7[%c3_375, %c1_376] : memref<8x4xf32, #tpu.memory_space<smem>>
    %690 = vector.broadcast %689 : f32 to vector<5x64xf32>
    %691 = arith.mulf %576, %690 : vector<5x64xf32>
    %692 = arith.addf %688, %691 : vector<5x64xf32>
    %c3_377 = arith.constant 3 : index
    %c2_378 = arith.constant 2 : index
    %693 = memref.load %arg7[%c3_377, %c2_378] : memref<8x4xf32, #tpu.memory_space<smem>>
    %694 = vector.broadcast %693 : f32 to vector<5x64xf32>
    %695 = arith.mulf %578, %694 : vector<5x64xf32>
    %696 = arith.addf %692, %695 : vector<5x64xf32>
    %c3_379 = arith.constant 3 : index
    %c3_380 = arith.constant 3 : index
    %697 = memref.load %arg7[%c3_379, %c3_380] : memref<8x4xf32, #tpu.memory_space<smem>>
    %698 = vector.broadcast %697 : f32 to vector<5x64xf32>
    %699 = arith.mulf %580, %698 : vector<5x64xf32>
    %700 = arith.addf %696, %699 : vector<5x64xf32>
    %c3_381 = arith.constant 3 : index
    %701 = memref.load %arg8[%c3_381] : memref<8xf32, #tpu.memory_space<smem>>
    %702 = vector.broadcast %701 : f32 to vector<5x64xf32>
    %703 = arith.addf %700, %702 : vector<5x64xf32>
    %cst_382 = arith.constant 5.000000e-01 : f32
    %704 = vector.broadcast %cst_382 : f32 to vector<5x64xf32>
    %705 = arith.mulf %703, %704 : vector<5x64xf32>
    %706 = arith.mulf %703, %703 : vector<5x64xf32>
    %707 = arith.mulf %706, %703 : vector<5x64xf32>
    %cst_383 = arith.constant 4.471500e-02 : f32
    %708 = vector.broadcast %cst_383 : f32 to vector<5x64xf32>
    %709 = arith.mulf %707, %708 : vector<5x64xf32>
    %710 = arith.addf %703, %709 : vector<5x64xf32>
    %cst_384 = arith.constant 0.797884583 : f32
    %711 = vector.broadcast %cst_384 : f32 to vector<5x64xf32>
    %712 = arith.mulf %710, %711 : vector<5x64xf32>
    %713 = math.tanh %712 : vector<5x64xf32>
    %cst_385 = arith.constant 1.000000e+00 : f32
    %714 = vector.broadcast %cst_385 : f32 to vector<5x64xf32>
    %715 = arith.addf %713, %714 : vector<5x64xf32>
    %716 = arith.mulf %705, %715 : vector<5x64xf32>
    %717 = arith.addf %716, %105 : vector<5x64xf32>
    %c3_386 = arith.constant 3 : index
    %c1_387 = arith.constant 1 : index
    %c0_388 = arith.constant 0 : index
    %c0_389 = arith.constant 0 : index
    %718 = vector.load %arg9[%c3_386, %c1_387, %c0_388, %c0_389] : memref<8x5x5x64xf32, #tpu.memory_space<vmem>>, vector<1x1x5x64xf32>
    %719 = vector.shape_cast %718 : vector<1x1x5x64xf32> to vector<5x64xf32>
    %720 = vector.shape_cast %717 : vector<5x64xf32> to vector<1x1x5x64xf32>
    tpu.vector_store %arg9[%c3_386, %c1_387, %c0_388, %c0_389], %720 {strides = array<i32>} : memref<8x5x5x64xf32, #tpu.memory_space<vmem>>, vector<1x1x5x64xf32>,
    %c4_390 = arith.constant 4 : index
    %c0_391 = arith.constant 0 : index
    %721 = memref.load %arg7[%c4_390, %c0_391] : memref<8x4xf32, #tpu.memory_space<smem>>
    %722 = vector.broadcast %721 : f32 to vector<5x64xf32>
    %723 = arith.mulf %574, %722 : vector<5x64xf32>
    %c4_392 = arith.constant 4 : index
    %c1_393 = arith.constant 1 : index
    %724 = memref.load %arg7[%c4_392, %c1_393] : memref<8x4xf32, #tpu.memory_space<smem>>
    %725 = vector.broadcast %724 : f32 to vector<5x64xf32>
    %726 = arith.mulf %576, %725 : vector<5x64xf32>
    %727 = arith.addf %723, %726 : vector<5x64xf32>
    %c4_394 = arith.constant 4 : index
    %c2_395 = arith.constant 2 : index
    %728 = memref.load %arg7[%c4_394, %c2_395] : memref<8x4xf32, #tpu.memory_space<smem>>
    %729 = vector.broadcast %728 : f32 to vector<5x64xf32>
    %730 = arith.mulf %578, %729 : vector<5x64xf32>
    %731 = arith.addf %727, %730 : vector<5x64xf32>
    %c4_396 = arith.constant 4 : index
    %c3_397 = arith.constant 3 : index
    %732 = memref.load %arg7[%c4_396, %c3_397] : memref<8x4xf32, #tpu.memory_space<smem>>
    %733 = vector.broadcast %732 : f32 to vector<5x64xf32>
    %734 = arith.mulf %580, %733 : vector<5x64xf32>
    %735 = arith.addf %731, %734 : vector<5x64xf32>
    %c4_398 = arith.constant 4 : index
    %736 = memref.load %arg8[%c4_398] : memref<8xf32, #tpu.memory_space<smem>>
    %737 = vector.broadcast %736 : f32 to vector<5x64xf32>
    %738 = arith.addf %735, %737 : vector<5x64xf32>
    %cst_399 = arith.constant 5.000000e-01 : f32
    %739 = vector.broadcast %cst_399 : f32 to vector<5x64xf32>
    %740 = arith.mulf %738, %739 : vector<5x64xf32>
    %741 = arith.mulf %738, %738 : vector<5x64xf32>
    %742 = arith.mulf %741, %738 : vector<5x64xf32>
    %cst_400 = arith.constant 4.471500e-02 : f32
    %743 = vector.broadcast %cst_400 : f32 to vector<5x64xf32>
    %744 = arith.mulf %742, %743 : vector<5x64xf32>
    %745 = arith.addf %738, %744 : vector<5x64xf32>
    %cst_401 = arith.constant 0.797884583 : f32
    %746 = vector.broadcast %cst_401 : f32 to vector<5x64xf32>
    %747 = arith.mulf %745, %746 : vector<5x64xf32>
    %748 = math.tanh %747 : vector<5x64xf32>
    %cst_402 = arith.constant 1.000000e+00 : f32
    %749 = vector.broadcast %cst_402 : f32 to vector<5x64xf32>
    %750 = arith.addf %748, %749 : vector<5x64xf32>
    %751 = arith.mulf %740, %750 : vector<5x64xf32>
    %752 = arith.addf %751, %105 : vector<5x64xf32>
    %c4_403 = arith.constant 4 : index
    %c1_404 = arith.constant 1 : index
    %c0_405 = arith.constant 0 : index
    %c0_406 = arith.constant 0 : index
    %753 = vector.load %arg9[%c4_403, %c1_404, %c0_405, %c0_406] : memref<8x5x5x64xf32, #tpu.memory_space<vmem>>, vector<1x1x5x64xf32>
    %754 = vector.shape_cast %753 : vector<1x1x5x64xf32> to vector<5x64xf32>
    %755 = vector.shape_cast %752 : vector<5x64xf32> to vector<1x1x5x64xf32>
    tpu.vector_store %arg9[%c4_403, %c1_404, %c0_405, %c0_406], %755 {strides = array<i32>} : memref<8x5x5x64xf32, #tpu.memory_space<vmem>>, vector<1x1x5x64xf32>,
    %c5_407 = arith.constant 5 : index
    %c0_408 = arith.constant 0 : index
    %756 = memref.load %arg7[%c5_407, %c0_408] : memref<8x4xf32, #tpu.memory_space<smem>>
    %757 = vector.broadcast %756 : f32 to vector<5x64xf32>
    %758 = arith.mulf %574, %757 : vector<5x64xf32>
    %c5_409 = arith.constant 5 : index
    %c1_410 = arith.constant 1 : index
    %759 = memref.load %arg7[%c5_409, %c1_410] : memref<8x4xf32, #tpu.memory_space<smem>>
    %760 = vector.broadcast %759 : f32 to vector<5x64xf32>
    %761 = arith.mulf %576, %760 : vector<5x64xf32>
    %762 = arith.addf %758, %761 : vector<5x64xf32>
    %c5_411 = arith.constant 5 : index
    %c2_412 = arith.constant 2 : index
    %763 = memref.load %arg7[%c5_411, %c2_412] : memref<8x4xf32, #tpu.memory_space<smem>>
    %764 = vector.broadcast %763 : f32 to vector<5x64xf32>
    %765 = arith.mulf %578, %764 : vector<5x64xf32>
    %766 = arith.addf %762, %765 : vector<5x64xf32>
    %c5_413 = arith.constant 5 : index
    %c3_414 = arith.constant 3 : index
    %767 = memref.load %arg7[%c5_413, %c3_414] : memref<8x4xf32, #tpu.memory_space<smem>>
    %768 = vector.broadcast %767 : f32 to vector<5x64xf32>
    %769 = arith.mulf %580, %768 : vector<5x64xf32>
    %770 = arith.addf %766, %769 : vector<5x64xf32>
    %c5_415 = arith.constant 5 : index
    %771 = memref.load %arg8[%c5_415] : memref<8xf32, #tpu.memory_space<smem>>
    %772 = vector.broadcast %771 : f32 to vector<5x64xf32>
    %773 = arith.addf %770, %772 : vector<5x64xf32>
    %cst_416 = arith.constant 5.000000e-01 : f32
    %774 = vector.broadcast %cst_416 : f32 to vector<5x64xf32>
    %775 = arith.mulf %773, %774 : vector<5x64xf32>
    %776 = arith.mulf %773, %773 : vector<5x64xf32>
    %777 = arith.mulf %776, %773 : vector<5x64xf32>
    %cst_417 = arith.constant 4.471500e-02 : f32
    %778 = vector.broadcast %cst_417 : f32 to vector<5x64xf32>
    %779 = arith.mulf %777, %778 : vector<5x64xf32>
    %780 = arith.addf %773, %779 : vector<5x64xf32>
    %cst_418 = arith.constant 0.797884583 : f32
    %781 = vector.broadcast %cst_418 : f32 to vector<5x64xf32>
    %782 = arith.mulf %780, %781 : vector<5x64xf32>
    %783 = math.tanh %782 : vector<5x64xf32>
    %cst_419 = arith.constant 1.000000e+00 : f32
    %784 = vector.broadcast %cst_419 : f32 to vector<5x64xf32>
    %785 = arith.addf %783, %784 : vector<5x64xf32>
    %786 = arith.mulf %775, %785 : vector<5x64xf32>
    %787 = arith.addf %786, %105 : vector<5x64xf32>
    %c5_420 = arith.constant 5 : index
    %c1_421 = arith.constant 1 : index
    %c0_422 = arith.constant 0 : index
    %c0_423 = arith.constant 0 : index
    %788 = vector.load %arg9[%c5_420, %c1_421, %c0_422, %c0_423] : memref<8x5x5x64xf32, #tpu.memory_space<vmem>>, vector<1x1x5x64xf32>
    %789 = vector.shape_cast %788 : vector<1x1x5x64xf32> to vector<5x64xf32>
    %790 = vector.shape_cast %787 : vector<5x64xf32> to vector<1x1x5x64xf32>
    tpu.vector_store %arg9[%c5_420, %c1_421, %c0_422, %c0_423], %790 {strides = array<i32>} : memref<8x5x5x64xf32, #tpu.memory_space<vmem>>, vector<1x1x5x64xf32>,
    %c6_424 = arith.constant 6 : index
    %c0_425 = arith.constant 0 : index
    %791 = memref.load %arg7[%c6_424, %c0_425] : memref<8x4xf32, #tpu.memory_space<smem>>
    %792 = vector.broadcast %791 : f32 to vector<5x64xf32>
    %793 = arith.mulf %574, %792 : vector<5x64xf32>
    %c6_426 = arith.constant 6 : index
    %c1_427 = arith.constant 1 : index
    %794 = memref.load %arg7[%c6_426, %c1_427] : memref<8x4xf32, #tpu.memory_space<smem>>
    %795 = vector.broadcast %794 : f32 to vector<5x64xf32>
    %796 = arith.mulf %576, %795 : vector<5x64xf32>
    %797 = arith.addf %793, %796 : vector<5x64xf32>
    %c6_428 = arith.constant 6 : index
    %c2_429 = arith.constant 2 : index
    %798 = memref.load %arg7[%c6_428, %c2_429] : memref<8x4xf32, #tpu.memory_space<smem>>
    %799 = vector.broadcast %798 : f32 to vector<5x64xf32>
    %800 = arith.mulf %578, %799 : vector<5x64xf32>
    %801 = arith.addf %797, %800 : vector<5x64xf32>
    %c6_430 = arith.constant 6 : index
    %c3_431 = arith.constant 3 : index
    %802 = memref.load %arg7[%c6_430, %c3_431] : memref<8x4xf32, #tpu.memory_space<smem>>
    %803 = vector.broadcast %802 : f32 to vector<5x64xf32>
    %804 = arith.mulf %580, %803 : vector<5x64xf32>
    %805 = arith.addf %801, %804 : vector<5x64xf32>
    %c6_432 = arith.constant 6 : index
    %806 = memref.load %arg8[%c6_432] : memref<8xf32, #tpu.memory_space<smem>>
    %807 = vector.broadcast %806 : f32 to vector<5x64xf32>
    %808 = arith.addf %805, %807 : vector<5x64xf32>
    %cst_433 = arith.constant 5.000000e-01 : f32
    %809 = vector.broadcast %cst_433 : f32 to vector<5x64xf32>
    %810 = arith.mulf %808, %809 : vector<5x64xf32>
    %811 = arith.mulf %808, %808 : vector<5x64xf32>
    %812 = arith.mulf %811, %808 : vector<5x64xf32>
    %cst_434 = arith.constant 4.471500e-02 : f32
    %813 = vector.broadcast %cst_434 : f32 to vector<5x64xf32>
    %814 = arith.mulf %812, %813 : vector<5x64xf32>
    %815 = arith.addf %808, %814 : vector<5x64xf32>
    %cst_435 = arith.constant 0.797884583 : f32
    %816 = vector.broadcast %cst_435 : f32 to vector<5x64xf32>
    %817 = arith.mulf %815, %816 : vector<5x64xf32>
    %818 = math.tanh %817 : vector<5x64xf32>
    %cst_436 = arith.constant 1.000000e+00 : f32
    %819 = vector.broadcast %cst_436 : f32 to vector<5x64xf32>
    %820 = arith.addf %818, %819 : vector<5x64xf32>
    %821 = arith.mulf %810, %820 : vector<5x64xf32>
    %822 = arith.addf %821, %105 : vector<5x64xf32>
    %c6_437 = arith.constant 6 : index
    %c1_438 = arith.constant 1 : index
    %c0_439 = arith.constant 0 : index
    %c0_440 = arith.constant 0 : index
    %823 = vector.load %arg9[%c6_437, %c1_438, %c0_439, %c0_440] : memref<8x5x5x64xf32, #tpu.memory_space<vmem>>, vector<1x1x5x64xf32>
    %824 = vector.shape_cast %823 : vector<1x1x5x64xf32> to vector<5x64xf32>
    %825 = vector.shape_cast %822 : vector<5x64xf32> to vector<1x1x5x64xf32>
    tpu.vector_store %arg9[%c6_437, %c1_438, %c0_439, %c0_440], %825 {strides = array<i32>} : memref<8x5x5x64xf32, #tpu.memory_space<vmem>>, vector<1x1x5x64xf32>,
    %c7_441 = arith.constant 7 : index
    %c0_442 = arith.constant 0 : index
    %826 = memref.load %arg7[%c7_441, %c0_442] : memref<8x4xf32, #tpu.memory_space<smem>>
    %827 = vector.broadcast %826 : f32 to vector<5x64xf32>
    %828 = arith.mulf %574, %827 : vector<5x64xf32>
    %c7_443 = arith.constant 7 : index
    %c1_444 = arith.constant 1 : index
    %829 = memref.load %arg7[%c7_443, %c1_444] : memref<8x4xf32, #tpu.memory_space<smem>>
    %830 = vector.broadcast %829 : f32 to vector<5x64xf32>
    %831 = arith.mulf %576, %830 : vector<5x64xf32>
    %832 = arith.addf %828, %831 : vector<5x64xf32>
    %c7_445 = arith.constant 7 : index
    %c2_446 = arith.constant 2 : index
    %833 = memref.load %arg7[%c7_445, %c2_446] : memref<8x4xf32, #tpu.memory_space<smem>>
    %834 = vector.broadcast %833 : f32 to vector<5x64xf32>
    %835 = arith.mulf %578, %834 : vector<5x64xf32>
    %836 = arith.addf %832, %835 : vector<5x64xf32>
    %c7_447 = arith.constant 7 : index
    %c3_448 = arith.constant 3 : index
    %837 = memref.load %arg7[%c7_447, %c3_448] : memref<8x4xf32, #tpu.memory_space<smem>>
    %838 = vector.broadcast %837 : f32 to vector<5x64xf32>
    %839 = arith.mulf %580, %838 : vector<5x64xf32>
    %840 = arith.addf %836, %839 : vector<5x64xf32>
    %c7_449 = arith.constant 7 : index
    %841 = memref.load %arg8[%c7_449] : memref<8xf32, #tpu.memory_space<smem>>
    %842 = vector.broadcast %841 : f32 to vector<5x64xf32>
    %843 = arith.addf %840, %842 : vector<5x64xf32>
    %cst_450 = arith.constant 5.000000e-01 : f32
    %844 = vector.broadcast %cst_450 : f32 to vector<5x64xf32>
    %845 = arith.mulf %843, %844 : vector<5x64xf32>
    %846 = arith.mulf %843, %843 : vector<5x64xf32>
    %847 = arith.mulf %846, %843 : vector<5x64xf32>
    %cst_451 = arith.constant 4.471500e-02 : f32
    %848 = vector.broadcast %cst_451 : f32 to vector<5x64xf32>
    %849 = arith.mulf %847, %848 : vector<5x64xf32>
    %850 = arith.addf %843, %849 : vector<5x64xf32>
    %cst_452 = arith.constant 0.797884583 : f32
    %851 = vector.broadcast %cst_452 : f32 to vector<5x64xf32>
    %852 = arith.mulf %850, %851 : vector<5x64xf32>
    %853 = math.tanh %852 : vector<5x64xf32>
    %cst_453 = arith.constant 1.000000e+00 : f32
    %854 = vector.broadcast %cst_453 : f32 to vector<5x64xf32>
    %855 = arith.addf %853, %854 : vector<5x64xf32>
    %856 = arith.mulf %845, %855 : vector<5x64xf32>
    %857 = arith.addf %856, %105 : vector<5x64xf32>
    %c7_454 = arith.constant 7 : index
    %c1_455 = arith.constant 1 : index
    %c0_456 = arith.constant 0 : index
    %c0_457 = arith.constant 0 : index
    %858 = vector.load %arg9[%c7_454, %c1_455, %c0_456, %c0_457] : memref<8x5x5x64xf32, #tpu.memory_space<vmem>>, vector<1x1x5x64xf32>
    %859 = vector.shape_cast %858 : vector<1x1x5x64xf32> to vector<5x64xf32>
    %860 = vector.shape_cast %857 : vector<5x64xf32> to vector<1x1x5x64xf32>
    tpu.vector_store %arg9[%c7_454, %c1_455, %c0_456, %c0_457], %860 {strides = array<i32>} : memref<8x5x5x64xf32, #tpu.memory_space<vmem>>, vector<1x1x5x64xf32>,
    %c0_458 = arith.constant 0 : index
    %c2_459 = arith.constant 2 : index
    %c0_460 = arith.constant 0 : index
    %c0_461 = arith.constant 0 : index
    %861 = vector.load %arg6[%c0_458, %c2_459, %c0_460, %c0_461] : memref<4x5x5x64xf32, #tpu.memory_space<vmem>>, vector<1x1x5x64xf32>
    %862 = vector.shape_cast %861 : vector<1x1x5x64xf32> to vector<5x64xf32>
    %c1_462 = arith.constant 1 : index
    %c2_463 = arith.constant 2 : index
    %c0_464 = arith.constant 0 : index
    %c0_465 = arith.constant 0 : index
    %863 = vector.load %arg6[%c1_462, %c2_463, %c0_464, %c0_465] : memref<4x5x5x64xf32, #tpu.memory_space<vmem>>, vector<1x1x5x64xf32>
    %864 = vector.shape_cast %863 : vector<1x1x5x64xf32> to vector<5x64xf32>
    %c2_466 = arith.constant 2 : index
    %c2_467 = arith.constant 2 : index
    %c0_468 = arith.constant 0 : index
    %c0_469 = arith.constant 0 : index
    %865 = vector.load %arg6[%c2_466, %c2_467, %c0_468, %c0_469] : memref<4x5x5x64xf32, #tpu.memory_space<vmem>>, vector<1x1x5x64xf32>
    %866 = vector.shape_cast %865 : vector<1x1x5x64xf32> to vector<5x64xf32>
    %c3_470 = arith.constant 3 : index
    %c2_471 = arith.constant 2 : index
    %c0_472 = arith.constant 0 : index
    %c0_473 = arith.constant 0 : index
    %867 = vector.load %arg6[%c3_470, %c2_471, %c0_472, %c0_473] : memref<4x5x5x64xf32, #tpu.memory_space<vmem>>, vector<1x1x5x64xf32>
    %868 = vector.shape_cast %867 : vector<1x1x5x64xf32> to vector<5x64xf32>
    %c0_474 = arith.constant 0 : index
    %c0_475 = arith.constant 0 : index
    %869 = memref.load %arg7[%c0_474, %c0_475] : memref<8x4xf32, #tpu.memory_space<smem>>
    %870 = vector.broadcast %869 : f32 to vector<5x64xf32>
    %871 = arith.mulf %862, %870 : vector<5x64xf32>
    %c0_476 = arith.constant 0 : index
    %c1_477 = arith.constant 1 : index
    %872 = memref.load %arg7[%c0_476, %c1_477] : memref<8x4xf32, #tpu.memory_space<smem>>
    %873 = vector.broadcast %872 : f32 to vector<5x64xf32>
    %874 = arith.mulf %864, %873 : vector<5x64xf32>
    %875 = arith.addf %871, %874 : vector<5x64xf32>
    %c0_478 = arith.constant 0 : index
    %c2_479 = arith.constant 2 : index
    %876 = memref.load %arg7[%c0_478, %c2_479] : memref<8x4xf32, #tpu.memory_space<smem>>
    %877 = vector.broadcast %876 : f32 to vector<5x64xf32>
    %878 = arith.mulf %866, %877 : vector<5x64xf32>
    %879 = arith.addf %875, %878 : vector<5x64xf32>
    %c0_480 = arith.constant 0 : index
    %c3_481 = arith.constant 3 : index
    %880 = memref.load %arg7[%c0_480, %c3_481] : memref<8x4xf32, #tpu.memory_space<smem>>
    %881 = vector.broadcast %880 : f32 to vector<5x64xf32>
    %882 = arith.mulf %868, %881 : vector<5x64xf32>
    %883 = arith.addf %879, %882 : vector<5x64xf32>
    %c0_482 = arith.constant 0 : index
    %884 = memref.load %arg8[%c0_482] : memref<8xf32, #tpu.memory_space<smem>>
    %885 = vector.broadcast %884 : f32 to vector<5x64xf32>
    %886 = arith.addf %883, %885 : vector<5x64xf32>
    %cst_483 = arith.constant 5.000000e-01 : f32
    %887 = vector.broadcast %cst_483 : f32 to vector<5x64xf32>
    %888 = arith.mulf %886, %887 : vector<5x64xf32>
    %889 = arith.mulf %886, %886 : vector<5x64xf32>
    %890 = arith.mulf %889, %886 : vector<5x64xf32>
    %cst_484 = arith.constant 4.471500e-02 : f32
    %891 = vector.broadcast %cst_484 : f32 to vector<5x64xf32>
    %892 = arith.mulf %890, %891 : vector<5x64xf32>
    %893 = arith.addf %886, %892 : vector<5x64xf32>
    %cst_485 = arith.constant 0.797884583 : f32
    %894 = vector.broadcast %cst_485 : f32 to vector<5x64xf32>
    %895 = arith.mulf %893, %894 : vector<5x64xf32>
    %896 = math.tanh %895 : vector<5x64xf32>
    %cst_486 = arith.constant 1.000000e+00 : f32
    %897 = vector.broadcast %cst_486 : f32 to vector<5x64xf32>
    %898 = arith.addf %896, %897 : vector<5x64xf32>
    %899 = arith.mulf %888, %898 : vector<5x64xf32>
    %900 = arith.addf %899, %105 : vector<5x64xf32>
    %c0_487 = arith.constant 0 : index
    %c2_488 = arith.constant 2 : index
    %c0_489 = arith.constant 0 : index
    %c0_490 = arith.constant 0 : index
    %901 = vector.load %arg9[%c0_487, %c2_488, %c0_489, %c0_490] : memref<8x5x5x64xf32, #tpu.memory_space<vmem>>, vector<1x1x5x64xf32>
    %902 = vector.shape_cast %901 : vector<1x1x5x64xf32> to vector<5x64xf32>
    %903 = vector.shape_cast %900 : vector<5x64xf32> to vector<1x1x5x64xf32>
    tpu.vector_store %arg9[%c0_487, %c2_488, %c0_489, %c0_490], %903 {strides = array<i32>} : memref<8x5x5x64xf32, #tpu.memory_space<vmem>>, vector<1x1x5x64xf32>,
    %c1_491 = arith.constant 1 : index
    %c0_492 = arith.constant 0 : index
    %904 = memref.load %arg7[%c1_491, %c0_492] : memref<8x4xf32, #tpu.memory_space<smem>>
    %905 = vector.broadcast %904 : f32 to vector<5x64xf32>
    %906 = arith.mulf %862, %905 : vector<5x64xf32>
    %c1_493 = arith.constant 1 : index
    %c1_494 = arith.constant 1 : index
    %907 = memref.load %arg7[%c1_493, %c1_494] : memref<8x4xf32, #tpu.memory_space<smem>>
    %908 = vector.broadcast %907 : f32 to vector<5x64xf32>
    %909 = arith.mulf %864, %908 : vector<5x64xf32>
    %910 = arith.addf %906, %909 : vector<5x64xf32>
    %c1_495 = arith.constant 1 : index
    %c2_496 = arith.constant 2 : index
    %911 = memref.load %arg7[%c1_495, %c2_496] : memref<8x4xf32, #tpu.memory_space<smem>>
    %912 = vector.broadcast %911 : f32 to vector<5x64xf32>
    %913 = arith.mulf %866, %912 : vector<5x64xf32>
    %914 = arith.addf %910, %913 : vector<5x64xf32>
    %c1_497 = arith.constant 1 : index
    %c3_498 = arith.constant 3 : index
    %915 = memref.load %arg7[%c1_497, %c3_498] : memref<8x4xf32, #tpu.memory_space<smem>>
    %916 = vector.broadcast %915 : f32 to vector<5x64xf32>
    %917 = arith.mulf %868, %916 : vector<5x64xf32>
    %918 = arith.addf %914, %917 : vector<5x64xf32>
    %c1_499 = arith.constant 1 : index
    %919 = memref.load %arg8[%c1_499] : memref<8xf32, #tpu.memory_space<smem>>
    %920 = vector.broadcast %919 : f32 to vector<5x64xf32>
    %921 = arith.addf %918, %920 : vector<5x64xf32>
    %cst_500 = arith.constant 5.000000e-01 : f32
    %922 = vector.broadcast %cst_500 : f32 to vector<5x64xf32>
    %923 = arith.mulf %921, %922 : vector<5x64xf32>
    %924 = arith.mulf %921, %921 : vector<5x64xf32>
    %925 = arith.mulf %924, %921 : vector<5x64xf32>
    %cst_501 = arith.constant 4.471500e-02 : f32
    %926 = vector.broadcast %cst_501 : f32 to vector<5x64xf32>
    %927 = arith.mulf %925, %926 : vector<5x64xf32>
    %928 = arith.addf %921, %927 : vector<5x64xf32>
    %cst_502 = arith.constant 0.797884583 : f32
    %929 = vector.broadcast %cst_502 : f32 to vector<5x64xf32>
    %930 = arith.mulf %928, %929 : vector<5x64xf32>
    %931 = math.tanh %930 : vector<5x64xf32>
    %cst_503 = arith.constant 1.000000e+00 : f32
    %932 = vector.broadcast %cst_503 : f32 to vector<5x64xf32>
    %933 = arith.addf %931, %932 : vector<5x64xf32>
    %934 = arith.mulf %923, %933 : vector<5x64xf32>
    %935 = arith.addf %934, %105 : vector<5x64xf32>
    %c1_504 = arith.constant 1 : index
    %c2_505 = arith.constant 2 : index
    %c0_506 = arith.constant 0 : index
    %c0_507 = arith.constant 0 : index
    %936 = vector.load %arg9[%c1_504, %c2_505, %c0_506, %c0_507] : memref<8x5x5x64xf32, #tpu.memory_space<vmem>>, vector<1x1x5x64xf32>
    %937 = vector.shape_cast %936 : vector<1x1x5x64xf32> to vector<5x64xf32>
    %938 = vector.shape_cast %935 : vector<5x64xf32> to vector<1x1x5x64xf32>
    tpu.vector_store %arg9[%c1_504, %c2_505, %c0_506, %c0_507], %938 {strides = array<i32>} : memref<8x5x5x64xf32, #tpu.memory_space<vmem>>, vector<1x1x5x64xf32>,
    %c2_508 = arith.constant 2 : index
    %c0_509 = arith.constant 0 : index
    %939 = memref.load %arg7[%c2_508, %c0_509] : memref<8x4xf32, #tpu.memory_space<smem>>
    %940 = vector.broadcast %939 : f32 to vector<5x64xf32>
    %941 = arith.mulf %862, %940 : vector<5x64xf32>
    %c2_510 = arith.constant 2 : index
    %c1_511 = arith.constant 1 : index
    %942 = memref.load %arg7[%c2_510, %c1_511] : memref<8x4xf32, #tpu.memory_space<smem>>
    %943 = vector.broadcast %942 : f32 to vector<5x64xf32>
    %944 = arith.mulf %864, %943 : vector<5x64xf32>
    %945 = arith.addf %941, %944 : vector<5x64xf32>
    %c2_512 = arith.constant 2 : index
    %c2_513 = arith.constant 2 : index
    %946 = memref.load %arg7[%c2_512, %c2_513] : memref<8x4xf32, #tpu.memory_space<smem>>
    %947 = vector.broadcast %946 : f32 to vector<5x64xf32>
    %948 = arith.mulf %866, %947 : vector<5x64xf32>
    %949 = arith.addf %945, %948 : vector<5x64xf32>
    %c2_514 = arith.constant 2 : index
    %c3_515 = arith.constant 3 : index
    %950 = memref.load %arg7[%c2_514, %c3_515] : memref<8x4xf32, #tpu.memory_space<smem>>
    %951 = vector.broadcast %950 : f32 to vector<5x64xf32>
    %952 = arith.mulf %868, %951 : vector<5x64xf32>
    %953 = arith.addf %949, %952 : vector<5x64xf32>
    %c2_516 = arith.constant 2 : index
    %954 = memref.load %arg8[%c2_516] : memref<8xf32, #tpu.memory_space<smem>>
    %955 = vector.broadcast %954 : f32 to vector<5x64xf32>
    %956 = arith.addf %953, %955 : vector<5x64xf32>
    %cst_517 = arith.constant 5.000000e-01 : f32
    %957 = vector.broadcast %cst_517 : f32 to vector<5x64xf32>
    %958 = arith.mulf %956, %957 : vector<5x64xf32>
    %959 = arith.mulf %956, %956 : vector<5x64xf32>
    %960 = arith.mulf %959, %956 : vector<5x64xf32>
    %cst_518 = arith.constant 4.471500e-02 : f32
    %961 = vector.broadcast %cst_518 : f32 to vector<5x64xf32>
    %962 = arith.mulf %960, %961 : vector<5x64xf32>
    %963 = arith.addf %956, %962 : vector<5x64xf32>
    %cst_519 = arith.constant 0.797884583 : f32
    %964 = vector.broadcast %cst_519 : f32 to vector<5x64xf32>
    %965 = arith.mulf %963, %964 : vector<5x64xf32>
    %966 = math.tanh %965 : vector<5x64xf32>
    %cst_520 = arith.constant 1.000000e+00 : f32
    %967 = vector.broadcast %cst_520 : f32 to vector<5x64xf32>
    %968 = arith.addf %966, %967 : vector<5x64xf32>
    %969 = arith.mulf %958, %968 : vector<5x64xf32>
    %970 = arith.addf %969, %105 : vector<5x64xf32>
    %c2_521 = arith.constant 2 : index
    %c2_522 = arith.constant 2 : index
    %c0_523 = arith.constant 0 : index
    %c0_524 = arith.constant 0 : index
    %971 = vector.load %arg9[%c2_521, %c2_522, %c0_523, %c0_524] : memref<8x5x5x64xf32, #tpu.memory_space<vmem>>, vector<1x1x5x64xf32>
    %972 = vector.shape_cast %971 : vector<1x1x5x64xf32> to vector<5x64xf32>
    %973 = vector.shape_cast %970 : vector<5x64xf32> to vector<1x1x5x64xf32>
    tpu.vector_store %arg9[%c2_521, %c2_522, %c0_523, %c0_524], %973 {strides = array<i32>} : memref<8x5x5x64xf32, #tpu.memory_space<vmem>>, vector<1x1x5x64xf32>,
    %c3_525 = arith.constant 3 : index
    %c0_526 = arith.constant 0 : index
    %974 = memref.load %arg7[%c3_525, %c0_526] : memref<8x4xf32, #tpu.memory_space<smem>>
    %975 = vector.broadcast %974 : f32 to vector<5x64xf32>
    %976 = arith.mulf %862, %975 : vector<5x64xf32>
    %c3_527 = arith.constant 3 : index
    %c1_528 = arith.constant 1 : index
    %977 = memref.load %arg7[%c3_527, %c1_528] : memref<8x4xf32, #tpu.memory_space<smem>>
    %978 = vector.broadcast %977 : f32 to vector<5x64xf32>
    %979 = arith.mulf %864, %978 : vector<5x64xf32>
    %980 = arith.addf %976, %979 : vector<5x64xf32>
    %c3_529 = arith.constant 3 : index
    %c2_530 = arith.constant 2 : index
    %981 = memref.load %arg7[%c3_529, %c2_530] : memref<8x4xf32, #tpu.memory_space<smem>>
    %982 = vector.broadcast %981 : f32 to vector<5x64xf32>
    %983 = arith.mulf %866, %982 : vector<5x64xf32>
    %984 = arith.addf %980, %983 : vector<5x64xf32>
    %c3_531 = arith.constant 3 : index
    %c3_532 = arith.constant 3 : index
    %985 = memref.load %arg7[%c3_531, %c3_532] : memref<8x4xf32, #tpu.memory_space<smem>>
    %986 = vector.broadcast %985 : f32 to vector<5x64xf32>
    %987 = arith.mulf %868, %986 : vector<5x64xf32>
    %988 = arith.addf %984, %987 : vector<5x64xf32>
    %c3_533 = arith.constant 3 : index
    %989 = memref.load %arg8[%c3_533] : memref<8xf32, #tpu.memory_space<smem>>
    %990 = vector.broadcast %989 : f32 to vector<5x64xf32>
    %991 = arith.addf %988, %990 : vector<5x64xf32>
    %cst_534 = arith.constant 5.000000e-01 : f32
    %992 = vector.broadcast %cst_534 : f32 to vector<5x64xf32>
    %993 = arith.mulf %991, %992 : vector<5x64xf32>
    %994 = arith.mulf %991, %991 : vector<5x64xf32>
    %995 = arith.mulf %994, %991 : vector<5x64xf32>
    %cst_535 = arith.constant 4.471500e-02 : f32
    %996 = vector.broadcast %cst_535 : f32 to vector<5x64xf32>
    %997 = arith.mulf %995, %996 : vector<5x64xf32>
    %998 = arith.addf %991, %997 : vector<5x64xf32>
    %cst_536 = arith.constant 0.797884583 : f32
    %999 = vector.broadcast %cst_536 : f32 to vector<5x64xf32>
    %1000 = arith.mulf %998, %999 : vector<5x64xf32>
    %1001 = math.tanh %1000 : vector<5x64xf32>
    %cst_537 = arith.constant 1.000000e+00 : f32
    %1002 = vector.broadcast %cst_537 : f32 to vector<5x64xf32>
    %1003 = arith.addf %1001, %1002 : vector<5x64xf32>
    %1004 = arith.mulf %993, %1003 : vector<5x64xf32>
    %1005 = arith.addf %1004, %105 : vector<5x64xf32>
    %c3_538 = arith.constant 3 : index
    %c2_539 = arith.constant 2 : index
    %c0_540 = arith.constant 0 : index
    %c0_541 = arith.constant 0 : index
    %1006 = vector.load %arg9[%c3_538, %c2_539, %c0_540, %c0_541] : memref<8x5x5x64xf32, #tpu.memory_space<vmem>>, vector<1x1x5x64xf32>
    %1007 = vector.shape_cast %1006 : vector<1x1x5x64xf32> to vector<5x64xf32>
    %1008 = vector.shape_cast %1005 : vector<5x64xf32> to vector<1x1x5x64xf32>
    tpu.vector_store %arg9[%c3_538, %c2_539, %c0_540, %c0_541], %1008 {strides = array<i32>} : memref<8x5x5x64xf32, #tpu.memory_space<vmem>>, vector<1x1x5x64xf32>,
    %c4_542 = arith.constant 4 : index
    %c0_543 = arith.constant 0 : index
    %1009 = memref.load %arg7[%c4_542, %c0_543] : memref<8x4xf32, #tpu.memory_space<smem>>
    %1010 = vector.broadcast %1009 : f32 to vector<5x64xf32>
    %1011 = arith.mulf %862, %1010 : vector<5x64xf32>
    %c4_544 = arith.constant 4 : index
    %c1_545 = arith.constant 1 : index
    %1012 = memref.load %arg7[%c4_544, %c1_545] : memref<8x4xf32, #tpu.memory_space<smem>>
    %1013 = vector.broadcast %1012 : f32 to vector<5x64xf32>
    %1014 = arith.mulf %864, %1013 : vector<5x64xf32>
    %1015 = arith.addf %1011, %1014 : vector<5x64xf32>
    %c4_546 = arith.constant 4 : index
    %c2_547 = arith.constant 2 : index
    %1016 = memref.load %arg7[%c4_546, %c2_547] : memref<8x4xf32, #tpu.memory_space<smem>>
    %1017 = vector.broadcast %1016 : f32 to vector<5x64xf32>
    %1018 = arith.mulf %866, %1017 : vector<5x64xf32>
    %1019 = arith.addf %1015, %1018 : vector<5x64xf32>
    %c4_548 = arith.constant 4 : index
    %c3_549 = arith.constant 3 : index
    %1020 = memref.load %arg7[%c4_548, %c3_549] : memref<8x4xf32, #tpu.memory_space<smem>>
    %1021 = vector.broadcast %1020 : f32 to vector<5x64xf32>
    %1022 = arith.mulf %868, %1021 : vector<5x64xf32>
    %1023 = arith.addf %1019, %1022 : vector<5x64xf32>
    %c4_550 = arith.constant 4 : index
    %1024 = memref.load %arg8[%c4_550] : memref<8xf32, #tpu.memory_space<smem>>
    %1025 = vector.broadcast %1024 : f32 to vector<5x64xf32>
    %1026 = arith.addf %1023, %1025 : vector<5x64xf32>
    %cst_551 = arith.constant 5.000000e-01 : f32
    %1027 = vector.broadcast %cst_551 : f32 to vector<5x64xf32>
    %1028 = arith.mulf %1026, %1027 : vector<5x64xf32>
    %1029 = arith.mulf %1026, %1026 : vector<5x64xf32>
    %1030 = arith.mulf %1029, %1026 : vector<5x64xf32>
    %cst_552 = arith.constant 4.471500e-02 : f32
    %1031 = vector.broadcast %cst_552 : f32 to vector<5x64xf32>
    %1032 = arith.mulf %1030, %1031 : vector<5x64xf32>
    %1033 = arith.addf %1026, %1032 : vector<5x64xf32>
    %cst_553 = arith.constant 0.797884583 : f32
    %1034 = vector.broadcast %cst_553 : f32 to vector<5x64xf32>
    %1035 = arith.mulf %1033, %1034 : vector<5x64xf32>
    %1036 = math.tanh %1035 : vector<5x64xf32>
    %cst_554 = arith.constant 1.000000e+00 : f32
    %1037 = vector.broadcast %cst_554 : f32 to vector<5x64xf32>
    %1038 = arith.addf %1036, %1037 : vector<5x64xf32>
    %1039 = arith.mulf %1028, %1038 : vector<5x64xf32>
    %1040 = arith.addf %1039, %105 : vector<5x64xf32>
    %c4_555 = arith.constant 4 : index
    %c2_556 = arith.constant 2 : index
    %c0_557 = arith.constant 0 : index
    %c0_558 = arith.constant 0 : index
    %1041 = vector.load %arg9[%c4_555, %c2_556, %c0_557, %c0_558] : memref<8x5x5x64xf32, #tpu.memory_space<vmem>>, vector<1x1x5x64xf32>
    %1042 = vector.shape_cast %1041 : vector<1x1x5x64xf32> to vector<5x64xf32>
    %1043 = vector.shape_cast %1040 : vector<5x64xf32> to vector<1x1x5x64xf32>
    tpu.vector_store %arg9[%c4_555, %c2_556, %c0_557, %c0_558], %1043 {strides = array<i32>} : memref<8x5x5x64xf32, #tpu.memory_space<vmem>>, vector<1x1x5x64xf32>,
    %c5_559 = arith.constant 5 : index
    %c0_560 = arith.constant 0 : index
    %1044 = memref.load %arg7[%c5_559, %c0_560] : memref<8x4xf32, #tpu.memory_space<smem>>
    %1045 = vector.broadcast %1044 : f32 to vector<5x64xf32>
    %1046 = arith.mulf %862, %1045 : vector<5x64xf32>
    %c5_561 = arith.constant 5 : index
    %c1_562 = arith.constant 1 : index
    %1047 = memref.load %arg7[%c5_561, %c1_562] : memref<8x4xf32, #tpu.memory_space<smem>>
    %1048 = vector.broadcast %1047 : f32 to vector<5x64xf32>
    %1049 = arith.mulf %864, %1048 : vector<5x64xf32>
    %1050 = arith.addf %1046, %1049 : vector<5x64xf32>
    %c5_563 = arith.constant 5 : index
    %c2_564 = arith.constant 2 : index
    %1051 = memref.load %arg7[%c5_563, %c2_564] : memref<8x4xf32, #tpu.memory_space<smem>>
    %1052 = vector.broadcast %1051 : f32 to vector<5x64xf32>
    %1053 = arith.mulf %866, %1052 : vector<5x64xf32>
    %1054 = arith.addf %1050, %1053 : vector<5x64xf32>
    %c5_565 = arith.constant 5 : index
    %c3_566 = arith.constant 3 : index
    %1055 = memref.load %arg7[%c5_565, %c3_566] : memref<8x4xf32, #tpu.memory_space<smem>>
    %1056 = vector.broadcast %1055 : f32 to vector<5x64xf32>
    %1057 = arith.mulf %868, %1056 : vector<5x64xf32>
    %1058 = arith.addf %1054, %1057 : vector<5x64xf32>
    %c5_567 = arith.constant 5 : index
    %1059 = memref.load %arg8[%c5_567] : memref<8xf32, #tpu.memory_space<smem>>
    %1060 = vector.broadcast %1059 : f32 to vector<5x64xf32>
    %1061 = arith.addf %1058, %1060 : vector<5x64xf32>
    %cst_568 = arith.constant 5.000000e-01 : f32
    %1062 = vector.broadcast %cst_568 : f32 to vector<5x64xf32>
    %1063 = arith.mulf %1061, %1062 : vector<5x64xf32>
    %1064 = arith.mulf %1061, %1061 : vector<5x64xf32>
    %1065 = arith.mulf %1064, %1061 : vector<5x64xf32>
    %cst_569 = arith.constant 4.471500e-02 : f32
    %1066 = vector.broadcast %cst_569 : f32 to vector<5x64xf32>
    %1067 = arith.mulf %1065, %1066 : vector<5x64xf32>
    %1068 = arith.addf %1061, %1067 : vector<5x64xf32>
    %cst_570 = arith.constant 0.797884583 : f32
    %1069 = vector.broadcast %cst_570 : f32 to vector<5x64xf32>
    %1070 = arith.mulf %1068, %1069 : vector<5x64xf32>
    %1071 = math.tanh %1070 : vector<5x64xf32>
    %cst_571 = arith.constant 1.000000e+00 : f32
    %1072 = vector.broadcast %cst_571 : f32 to vector<5x64xf32>
    %1073 = arith.addf %1071, %1072 : vector<5x64xf32>
    %1074 = arith.mulf %1063, %1073 : vector<5x64xf32>
    %1075 = arith.addf %1074, %105 : vector<5x64xf32>
    %c5_572 = arith.constant 5 : index
    %c2_573 = arith.constant 2 : index
    %c0_574 = arith.constant 0 : index
    %c0_575 = arith.constant 0 : index
    %1076 = vector.load %arg9[%c5_572, %c2_573, %c0_574, %c0_575] : memref<8x5x5x64xf32, #tpu.memory_space<vmem>>, vector<1x1x5x64xf32>
    %1077 = vector.shape_cast %1076 : vector<1x1x5x64xf32> to vector<5x64xf32>
    %1078 = vector.shape_cast %1075 : vector<5x64xf32> to vector<1x1x5x64xf32>
    tpu.vector_store %arg9[%c5_572, %c2_573, %c0_574, %c0_575], %1078 {strides = array<i32>} : memref<8x5x5x64xf32, #tpu.memory_space<vmem>>, vector<1x1x5x64xf32>,
    %c6_576 = arith.constant 6 : index
    %c0_577 = arith.constant 0 : index
    %1079 = memref.load %arg7[%c6_576, %c0_577] : memref<8x4xf32, #tpu.memory_space<smem>>
    %1080 = vector.broadcast %1079 : f32 to vector<5x64xf32>
    %1081 = arith.mulf %862, %1080 : vector<5x64xf32>
    %c6_578 = arith.constant 6 : index
    %c1_579 = arith.constant 1 : index
    %1082 = memref.load %arg7[%c6_578, %c1_579] : memref<8x4xf32, #tpu.memory_space<smem>>
    %1083 = vector.broadcast %1082 : f32 to vector<5x64xf32>
    %1084 = arith.mulf %864, %1083 : vector<5x64xf32>
    %1085 = arith.addf %1081, %1084 : vector<5x64xf32>
    %c6_580 = arith.constant 6 : index
    %c2_581 = arith.constant 2 : index
    %1086 = memref.load %arg7[%c6_580, %c2_581] : memref<8x4xf32, #tpu.memory_space<smem>>
    %1087 = vector.broadcast %1086 : f32 to vector<5x64xf32>
    %1088 = arith.mulf %866, %1087 : vector<5x64xf32>
    %1089 = arith.addf %1085, %1088 : vector<5x64xf32>
    %c6_582 = arith.constant 6 : index
    %c3_583 = arith.constant 3 : index
    %1090 = memref.load %arg7[%c6_582, %c3_583] : memref<8x4xf32, #tpu.memory_space<smem>>
    %1091 = vector.broadcast %1090 : f32 to vector<5x64xf32>
    %1092 = arith.mulf %868, %1091 : vector<5x64xf32>
    %1093 = arith.addf %1089, %1092 : vector<5x64xf32>
    %c6_584 = arith.constant 6 : index
    %1094 = memref.load %arg8[%c6_584] : memref<8xf32, #tpu.memory_space<smem>>
    %1095 = vector.broadcast %1094 : f32 to vector<5x64xf32>
    %1096 = arith.addf %1093, %1095 : vector<5x64xf32>
    %cst_585 = arith.constant 5.000000e-01 : f32
    %1097 = vector.broadcast %cst_585 : f32 to vector<5x64xf32>
    %1098 = arith.mulf %1096, %1097 : vector<5x64xf32>
    %1099 = arith.mulf %1096, %1096 : vector<5x64xf32>
    %1100 = arith.mulf %1099, %1096 : vector<5x64xf32>
    %cst_586 = arith.constant 4.471500e-02 : f32
    %1101 = vector.broadcast %cst_586 : f32 to vector<5x64xf32>
    %1102 = arith.mulf %1100, %1101 : vector<5x64xf32>
    %1103 = arith.addf %1096, %1102 : vector<5x64xf32>
    %cst_587 = arith.constant 0.797884583 : f32
    %1104 = vector.broadcast %cst_587 : f32 to vector<5x64xf32>
    %1105 = arith.mulf %1103, %1104 : vector<5x64xf32>
    %1106 = math.tanh %1105 : vector<5x64xf32>
    %cst_588 = arith.constant 1.000000e+00 : f32
    %1107 = vector.broadcast %cst_588 : f32 to vector<5x64xf32>
    %1108 = arith.addf %1106, %1107 : vector<5x64xf32>
    %1109 = arith.mulf %1098, %1108 : vector<5x64xf32>
    %1110 = arith.addf %1109, %105 : vector<5x64xf32>
    %c6_589 = arith.constant 6 : index
    %c2_590 = arith.constant 2 : index
    %c0_591 = arith.constant 0 : index
    %c0_592 = arith.constant 0 : index
    %1111 = vector.load %arg9[%c6_589, %c2_590, %c0_591, %c0_592] : memref<8x5x5x64xf32, #tpu.memory_space<vmem>>, vector<1x1x5x64xf32>
    %1112 = vector.shape_cast %1111 : vector<1x1x5x64xf32> to vector<5x64xf32>
    %1113 = vector.shape_cast %1110 : vector<5x64xf32> to vector<1x1x5x64xf32>
    tpu.vector_store %arg9[%c6_589, %c2_590, %c0_591, %c0_592], %1113 {strides = array<i32>} : memref<8x5x5x64xf32, #tpu.memory_space<vmem>>, vector<1x1x5x64xf32>,
    %c7_593 = arith.constant 7 : index
    %c0_594 = arith.constant 0 : index
    %1114 = memref.load %arg7[%c7_593, %c0_594] : memref<8x4xf32, #tpu.memory_space<smem>>
    %1115 = vector.broadcast %1114 : f32 to vector<5x64xf32>
    %1116 = arith.mulf %862, %1115 : vector<5x64xf32>
    %c7_595 = arith.constant 7 : index
    %c1_596 = arith.constant 1 : index
    %1117 = memref.load %arg7[%c7_595, %c1_596] : memref<8x4xf32, #tpu.memory_space<smem>>
    %1118 = vector.broadcast %1117 : f32 to vector<5x64xf32>
    %1119 = arith.mulf %864, %1118 : vector<5x64xf32>
    %1120 = arith.addf %1116, %1119 : vector<5x64xf32>
    %c7_597 = arith.constant 7 : index
    %c2_598 = arith.constant 2 : index
    %1121 = memref.load %arg7[%c7_597, %c2_598] : memref<8x4xf32, #tpu.memory_space<smem>>
    %1122 = vector.broadcast %1121 : f32 to vector<5x64xf32>
    %1123 = arith.mulf %866, %1122 : vector<5x64xf32>
    %1124 = arith.addf %1120, %1123 : vector<5x64xf32>
    %c7_599 = arith.constant 7 : index
    %c3_600 = arith.constant 3 : index
    %1125 = memref.load %arg7[%c7_599, %c3_600] : memref<8x4xf32, #tpu.memory_space<smem>>
    %1126 = vector.broadcast %1125 : f32 to vector<5x64xf32>
    %1127 = arith.mulf %868, %1126 : vector<5x64xf32>
    %1128 = arith.addf %1124, %1127 : vector<5x64xf32>
    %c7_601 = arith.constant 7 : index
    %1129 = memref.load %arg8[%c7_601] : memref<8xf32, #tpu.memory_space<smem>>
    %1130 = vector.broadcast %1129 : f32 to vector<5x64xf32>
    %1131 = arith.addf %1128, %1130 : vector<5x64xf32>
    %cst_602 = arith.constant 5.000000e-01 : f32
    %1132 = vector.broadcast %cst_602 : f32 to vector<5x64xf32>
    %1133 = arith.mulf %1131, %1132 : vector<5x64xf32>
    %1134 = arith.mulf %1131, %1131 : vector<5x64xf32>
    %1135 = arith.mulf %1134, %1131 : vector<5x64xf32>
    %cst_603 = arith.constant 4.471500e-02 : f32
    %1136 = vector.broadcast %cst_603 : f32 to vector<5x64xf32>
    %1137 = arith.mulf %1135, %1136 : vector<5x64xf32>
    %1138 = arith.addf %1131, %1137 : vector<5x64xf32>
    %cst_604 = arith.constant 0.797884583 : f32
    %1139 = vector.broadcast %cst_604 : f32 to vector<5x64xf32>
    %1140 = arith.mulf %1138, %1139 : vector<5x64xf32>
    %1141 = math.tanh %1140 : vector<5x64xf32>
    %cst_605 = arith.constant 1.000000e+00 : f32
    %1142 = vector.broadcast %cst_605 : f32 to vector<5x64xf32>
    %1143 = arith.addf %1141, %1142 : vector<5x64xf32>
    %1144 = arith.mulf %1133, %1143 : vector<5x64xf32>
    %1145 = arith.addf %1144, %105 : vector<5x64xf32>
    %c7_606 = arith.constant 7 : index
    %c2_607 = arith.constant 2 : index
    %c0_608 = arith.constant 0 : index
    %c0_609 = arith.constant 0 : index
    %1146 = vector.load %arg9[%c7_606, %c2_607, %c0_608, %c0_609] : memref<8x5x5x64xf32, #tpu.memory_space<vmem>>, vector<1x1x5x64xf32>
    %1147 = vector.shape_cast %1146 : vector<1x1x5x64xf32> to vector<5x64xf32>
    %1148 = vector.shape_cast %1145 : vector<5x64xf32> to vector<1x1x5x64xf32>
    tpu.vector_store %arg9[%c7_606, %c2_607, %c0_608, %c0_609], %1148 {strides = array<i32>} : memref<8x5x5x64xf32, #tpu.memory_space<vmem>>, vector<1x1x5x64xf32>,
    %c0_610 = arith.constant 0 : index
    %c3_611 = arith.constant 3 : index
    %c0_612 = arith.constant 0 : index
    %c0_613 = arith.constant 0 : index
    %1149 = vector.load %arg6[%c0_610, %c3_611, %c0_612, %c0_613] : memref<4x5x5x64xf32, #tpu.memory_space<vmem>>, vector<1x1x5x64xf32>
    %1150 = vector.shape_cast %1149 : vector<1x1x5x64xf32> to vector<5x64xf32>
    %c1_614 = arith.constant 1 : index
    %c3_615 = arith.constant 3 : index
    %c0_616 = arith.constant 0 : index
    %c0_617 = arith.constant 0 : index
    %1151 = vector.load %arg6[%c1_614, %c3_615, %c0_616, %c0_617] : memref<4x5x5x64xf32, #tpu.memory_space<vmem>>, vector<1x1x5x64xf32>
    %1152 = vector.shape_cast %1151 : vector<1x1x5x64xf32> to vector<5x64xf32>
    %c2_618 = arith.constant 2 : index
    %c3_619 = arith.constant 3 : index
    %c0_620 = arith.constant 0 : index
    %c0_621 = arith.constant 0 : index
    %1153 = vector.load %arg6[%c2_618, %c3_619, %c0_620, %c0_621] : memref<4x5x5x64xf32, #tpu.memory_space<vmem>>, vector<1x1x5x64xf32>
    %1154 = vector.shape_cast %1153 : vector<1x1x5x64xf32> to vector<5x64xf32>
    %c3_622 = arith.constant 3 : index
    %c3_623 = arith.constant 3 : index
    %c0_624 = arith.constant 0 : index
    %c0_625 = arith.constant 0 : index
    %1155 = vector.load %arg6[%c3_622, %c3_623, %c0_624, %c0_625] : memref<4x5x5x64xf32, #tpu.memory_space<vmem>>, vector<1x1x5x64xf32>
    %1156 = vector.shape_cast %1155 : vector<1x1x5x64xf32> to vector<5x64xf32>
    %c0_626 = arith.constant 0 : index
    %c0_627 = arith.constant 0 : index
    %1157 = memref.load %arg7[%c0_626, %c0_627] : memref<8x4xf32, #tpu.memory_space<smem>>
    %1158 = vector.broadcast %1157 : f32 to vector<5x64xf32>
    %1159 = arith.mulf %1150, %1158 : vector<5x64xf32>
    %c0_628 = arith.constant 0 : index
    %c1_629 = arith.constant 1 : index
    %1160 = memref.load %arg7[%c0_628, %c1_629] : memref<8x4xf32, #tpu.memory_space<smem>>
    %1161 = vector.broadcast %1160 : f32 to vector<5x64xf32>
    %1162 = arith.mulf %1152, %1161 : vector<5x64xf32>
    %1163 = arith.addf %1159, %1162 : vector<5x64xf32>
    %c0_630 = arith.constant 0 : index
    %c2_631 = arith.constant 2 : index
    %1164 = memref.load %arg7[%c0_630, %c2_631] : memref<8x4xf32, #tpu.memory_space<smem>>
    %1165 = vector.broadcast %1164 : f32 to vector<5x64xf32>
    %1166 = arith.mulf %1154, %1165 : vector<5x64xf32>
    %1167 = arith.addf %1163, %1166 : vector<5x64xf32>
    %c0_632 = arith.constant 0 : index
    %c3_633 = arith.constant 3 : index
    %1168 = memref.load %arg7[%c0_632, %c3_633] : memref<8x4xf32, #tpu.memory_space<smem>>
    %1169 = vector.broadcast %1168 : f32 to vector<5x64xf32>
    %1170 = arith.mulf %1156, %1169 : vector<5x64xf32>
    %1171 = arith.addf %1167, %1170 : vector<5x64xf32>
    %c0_634 = arith.constant 0 : index
    %1172 = memref.load %arg8[%c0_634] : memref<8xf32, #tpu.memory_space<smem>>
    %1173 = vector.broadcast %1172 : f32 to vector<5x64xf32>
    %1174 = arith.addf %1171, %1173 : vector<5x64xf32>
    %cst_635 = arith.constant 5.000000e-01 : f32
    %1175 = vector.broadcast %cst_635 : f32 to vector<5x64xf32>
    %1176 = arith.mulf %1174, %1175 : vector<5x64xf32>
    %1177 = arith.mulf %1174, %1174 : vector<5x64xf32>
    %1178 = arith.mulf %1177, %1174 : vector<5x64xf32>
    %cst_636 = arith.constant 4.471500e-02 : f32
    %1179 = vector.broadcast %cst_636 : f32 to vector<5x64xf32>
    %1180 = arith.mulf %1178, %1179 : vector<5x64xf32>
    %1181 = arith.addf %1174, %1180 : vector<5x64xf32>
    %cst_637 = arith.constant 0.797884583 : f32
    %1182 = vector.broadcast %cst_637 : f32 to vector<5x64xf32>
    %1183 = arith.mulf %1181, %1182 : vector<5x64xf32>
    %1184 = math.tanh %1183 : vector<5x64xf32>
    %cst_638 = arith.constant 1.000000e+00 : f32
    %1185 = vector.broadcast %cst_638 : f32 to vector<5x64xf32>
    %1186 = arith.addf %1184, %1185 : vector<5x64xf32>
    %1187 = arith.mulf %1176, %1186 : vector<5x64xf32>
    %1188 = arith.addf %1187, %105 : vector<5x64xf32>
    %c0_639 = arith.constant 0 : index
    %c3_640 = arith.constant 3 : index
    %c0_641 = arith.constant 0 : index
    %c0_642 = arith.constant 0 : index
    %1189 = vector.load %arg9[%c0_639, %c3_640, %c0_641, %c0_642] : memref<8x5x5x64xf32, #tpu.memory_space<vmem>>, vector<1x1x5x64xf32>
    %1190 = vector.shape_cast %1189 : vector<1x1x5x64xf32> to vector<5x64xf32>
    %1191 = vector.shape_cast %1188 : vector<5x64xf32> to vector<1x1x5x64xf32>
    tpu.vector_store %arg9[%c0_639, %c3_640, %c0_641, %c0_642], %1191 {strides = array<i32>} : memref<8x5x5x64xf32, #tpu.memory_space<vmem>>, vector<1x1x5x64xf32>,
    %c1_643 = arith.constant 1 : index
    %c0_644 = arith.constant 0 : index
    %1192 = memref.load %arg7[%c1_643, %c0_644] : memref<8x4xf32, #tpu.memory_space<smem>>
    %1193 = vector.broadcast %1192 : f32 to vector<5x64xf32>
    %1194 = arith.mulf %1150, %1193 : vector<5x64xf32>
    %c1_645 = arith.constant 1 : index
    %c1_646 = arith.constant 1 : index
    %1195 = memref.load %arg7[%c1_645, %c1_646] : memref<8x4xf32, #tpu.memory_space<smem>>
    %1196 = vector.broadcast %1195 : f32 to vector<5x64xf32>
    %1197 = arith.mulf %1152, %1196 : vector<5x64xf32>
    %1198 = arith.addf %1194, %1197 : vector<5x64xf32>
    %c1_647 = arith.constant 1 : index
    %c2_648 = arith.constant 2 : index
    %1199 = memref.load %arg7[%c1_647, %c2_648] : memref<8x4xf32, #tpu.memory_space<smem>>
    %1200 = vector.broadcast %1199 : f32 to vector<5x64xf32>
    %1201 = arith.mulf %1154, %1200 : vector<5x64xf32>
    %1202 = arith.addf %1198, %1201 : vector<5x64xf32>
    %c1_649 = arith.constant 1 : index
    %c3_650 = arith.constant 3 : index
    %1203 = memref.load %arg7[%c1_649, %c3_650] : memref<8x4xf32, #tpu.memory_space<smem>>
    %1204 = vector.broadcast %1203 : f32 to vector<5x64xf32>
    %1205 = arith.mulf %1156, %1204 : vector<5x64xf32>
    %1206 = arith.addf %1202, %1205 : vector<5x64xf32>
    %c1_651 = arith.constant 1 : index
    %1207 = memref.load %arg8[%c1_651] : memref<8xf32, #tpu.memory_space<smem>>
    %1208 = vector.broadcast %1207 : f32 to vector<5x64xf32>
    %1209 = arith.addf %1206, %1208 : vector<5x64xf32>
    %cst_652 = arith.constant 5.000000e-01 : f32
    %1210 = vector.broadcast %cst_652 : f32 to vector<5x64xf32>
    %1211 = arith.mulf %1209, %1210 : vector<5x64xf32>
    %1212 = arith.mulf %1209, %1209 : vector<5x64xf32>
    %1213 = arith.mulf %1212, %1209 : vector<5x64xf32>
    %cst_653 = arith.constant 4.471500e-02 : f32
    %1214 = vector.broadcast %cst_653 : f32 to vector<5x64xf32>
    %1215 = arith.mulf %1213, %1214 : vector<5x64xf32>
    %1216 = arith.addf %1209, %1215 : vector<5x64xf32>
    %cst_654 = arith.constant 0.797884583 : f32
    %1217 = vector.broadcast %cst_654 : f32 to vector<5x64xf32>
    %1218 = arith.mulf %1216, %1217 : vector<5x64xf32>
    %1219 = math.tanh %1218 : vector<5x64xf32>
    %cst_655 = arith.constant 1.000000e+00 : f32
    %1220 = vector.broadcast %cst_655 : f32 to vector<5x64xf32>
    %1221 = arith.addf %1219, %1220 : vector<5x64xf32>
    %1222 = arith.mulf %1211, %1221 : vector<5x64xf32>
    %1223 = arith.addf %1222, %105 : vector<5x64xf32>
    %c1_656 = arith.constant 1 : index
    %c3_657 = arith.constant 3 : index
    %c0_658 = arith.constant 0 : index
    %c0_659 = arith.constant 0 : index
    %1224 = vector.load %arg9[%c1_656, %c3_657, %c0_658, %c0_659] : memref<8x5x5x64xf32, #tpu.memory_space<vmem>>, vector<1x1x5x64xf32>
    %1225 = vector.shape_cast %1224 : vector<1x1x5x64xf32> to vector<5x64xf32>
    %1226 = vector.shape_cast %1223 : vector<5x64xf32> to vector<1x1x5x64xf32>
    tpu.vector_store %arg9[%c1_656, %c3_657, %c0_658, %c0_659], %1226 {strides = array<i32>} : memref<8x5x5x64xf32, #tpu.memory_space<vmem>>, vector<1x1x5x64xf32>,
    %c2_660 = arith.constant 2 : index
    %c0_661 = arith.constant 0 : index
    %1227 = memref.load %arg7[%c2_660, %c0_661] : memref<8x4xf32, #tpu.memory_space<smem>>
    %1228 = vector.broadcast %1227 : f32 to vector<5x64xf32>
    %1229 = arith.mulf %1150, %1228 : vector<5x64xf32>
    %c2_662 = arith.constant 2 : index
    %c1_663 = arith.constant 1 : index
    %1230 = memref.load %arg7[%c2_662, %c1_663] : memref<8x4xf32, #tpu.memory_space<smem>>
    %1231 = vector.broadcast %1230 : f32 to vector<5x64xf32>
    %1232 = arith.mulf %1152, %1231 : vector<5x64xf32>
    %1233 = arith.addf %1229, %1232 : vector<5x64xf32>
    %c2_664 = arith.constant 2 : index
    %c2_665 = arith.constant 2 : index
    %1234 = memref.load %arg7[%c2_664, %c2_665] : memref<8x4xf32, #tpu.memory_space<smem>>
    %1235 = vector.broadcast %1234 : f32 to vector<5x64xf32>
    %1236 = arith.mulf %1154, %1235 : vector<5x64xf32>
    %1237 = arith.addf %1233, %1236 : vector<5x64xf32>
    %c2_666 = arith.constant 2 : index
    %c3_667 = arith.constant 3 : index
    %1238 = memref.load %arg7[%c2_666, %c3_667] : memref<8x4xf32, #tpu.memory_space<smem>>
    %1239 = vector.broadcast %1238 : f32 to vector<5x64xf32>
    %1240 = arith.mulf %1156, %1239 : vector<5x64xf32>
    %1241 = arith.addf %1237, %1240 : vector<5x64xf32>
    %c2_668 = arith.constant 2 : index
    %1242 = memref.load %arg8[%c2_668] : memref<8xf32, #tpu.memory_space<smem>>
    %1243 = vector.broadcast %1242 : f32 to vector<5x64xf32>
    %1244 = arith.addf %1241, %1243 : vector<5x64xf32>
    %cst_669 = arith.constant 5.000000e-01 : f32
    %1245 = vector.broadcast %cst_669 : f32 to vector<5x64xf32>
    %1246 = arith.mulf %1244, %1245 : vector<5x64xf32>
    %1247 = arith.mulf %1244, %1244 : vector<5x64xf32>
    %1248 = arith.mulf %1247, %1244 : vector<5x64xf32>
    %cst_670 = arith.constant 4.471500e-02 : f32
    %1249 = vector.broadcast %cst_670 : f32 to vector<5x64xf32>
    %1250 = arith.mulf %1248, %1249 : vector<5x64xf32>
    %1251 = arith.addf %1244, %1250 : vector<5x64xf32>
    %cst_671 = arith.constant 0.797884583 : f32
    %1252 = vector.broadcast %cst_671 : f32 to vector<5x64xf32>
    %1253 = arith.mulf %1251, %1252 : vector<5x64xf32>
    %1254 = math.tanh %1253 : vector<5x64xf32>
    %cst_672 = arith.constant 1.000000e+00 : f32
    %1255 = vector.broadcast %cst_672 : f32 to vector<5x64xf32>
    %1256 = arith.addf %1254, %1255 : vector<5x64xf32>
    %1257 = arith.mulf %1246, %1256 : vector<5x64xf32>
    %1258 = arith.addf %1257, %105 : vector<5x64xf32>
    %c2_673 = arith.constant 2 : index
    %c3_674 = arith.constant 3 : index
    %c0_675 = arith.constant 0 : index
    %c0_676 = arith.constant 0 : index
    %1259 = vector.load %arg9[%c2_673, %c3_674, %c0_675, %c0_676] : memref<8x5x5x64xf32, #tpu.memory_space<vmem>>, vector<1x1x5x64xf32>
    %1260 = vector.shape_cast %1259 : vector<1x1x5x64xf32> to vector<5x64xf32>
    %1261 = vector.shape_cast %1258 : vector<5x64xf32> to vector<1x1x5x64xf32>
    tpu.vector_store %arg9[%c2_673, %c3_674, %c0_675, %c0_676], %1261 {strides = array<i32>} : memref<8x5x5x64xf32, #tpu.memory_space<vmem>>, vector<1x1x5x64xf32>,
    %c3_677 = arith.constant 3 : index
    %c0_678 = arith.constant 0 : index
    %1262 = memref.load %arg7[%c3_677, %c0_678] : memref<8x4xf32, #tpu.memory_space<smem>>
    %1263 = vector.broadcast %1262 : f32 to vector<5x64xf32>
    %1264 = arith.mulf %1150, %1263 : vector<5x64xf32>
    %c3_679 = arith.constant 3 : index
    %c1_680 = arith.constant 1 : index
    %1265 = memref.load %arg7[%c3_679, %c1_680] : memref<8x4xf32, #tpu.memory_space<smem>>
    %1266 = vector.broadcast %1265 : f32 to vector<5x64xf32>
    %1267 = arith.mulf %1152, %1266 : vector<5x64xf32>
    %1268 = arith.addf %1264, %1267 : vector<5x64xf32>
    %c3_681 = arith.constant 3 : index
    %c2_682 = arith.constant 2 : index
    %1269 = memref.load %arg7[%c3_681, %c2_682] : memref<8x4xf32, #tpu.memory_space<smem>>
    %1270 = vector.broadcast %1269 : f32 to vector<5x64xf32>
    %1271 = arith.mulf %1154, %1270 : vector<5x64xf32>
    %1272 = arith.addf %1268, %1271 : vector<5x64xf32>
    %c3_683 = arith.constant 3 : index
    %c3_684 = arith.constant 3 : index
    %1273 = memref.load %arg7[%c3_683, %c3_684] : memref<8x4xf32, #tpu.memory_space<smem>>
    %1274 = vector.broadcast %1273 : f32 to vector<5x64xf32>
    %1275 = arith.mulf %1156, %1274 : vector<5x64xf32>
    %1276 = arith.addf %1272, %1275 : vector<5x64xf32>
    %c3_685 = arith.constant 3 : index
    %1277 = memref.load %arg8[%c3_685] : memref<8xf32, #tpu.memory_space<smem>>
    %1278 = vector.broadcast %1277 : f32 to vector<5x64xf32>
    %1279 = arith.addf %1276, %1278 : vector<5x64xf32>
    %cst_686 = arith.constant 5.000000e-01 : f32
    %1280 = vector.broadcast %cst_686 : f32 to vector<5x64xf32>
    %1281 = arith.mulf %1279, %1280 : vector<5x64xf32>
    %1282 = arith.mulf %1279, %1279 : vector<5x64xf32>
    %1283 = arith.mulf %1282, %1279 : vector<5x64xf32>
    %cst_687 = arith.constant 4.471500e-02 : f32
    %1284 = vector.broadcast %cst_687 : f32 to vector<5x64xf32>
    %1285 = arith.mulf %1283, %1284 : vector<5x64xf32>
    %1286 = arith.addf %1279, %1285 : vector<5x64xf32>
    %cst_688 = arith.constant 0.797884583 : f32
    %1287 = vector.broadcast %cst_688 : f32 to vector<5x64xf32>
    %1288 = arith.mulf %1286, %1287 : vector<5x64xf32>
    %1289 = math.tanh %1288 : vector<5x64xf32>
    %cst_689 = arith.constant 1.000000e+00 : f32
    %1290 = vector.broadcast %cst_689 : f32 to vector<5x64xf32>
    %1291 = arith.addf %1289, %1290 : vector<5x64xf32>
    %1292 = arith.mulf %1281, %1291 : vector<5x64xf32>
    %1293 = arith.addf %1292, %105 : vector<5x64xf32>
    %c3_690 = arith.constant 3 : index
    %c3_691 = arith.constant 3 : index
    %c0_692 = arith.constant 0 : index
    %c0_693 = arith.constant 0 : index
    %1294 = vector.load %arg9[%c3_690, %c3_691, %c0_692, %c0_693] : memref<8x5x5x64xf32, #tpu.memory_space<vmem>>, vector<1x1x5x64xf32>
    %1295 = vector.shape_cast %1294 : vector<1x1x5x64xf32> to vector<5x64xf32>
    %1296 = vector.shape_cast %1293 : vector<5x64xf32> to vector<1x1x5x64xf32>
    tpu.vector_store %arg9[%c3_690, %c3_691, %c0_692, %c0_693], %1296 {strides = array<i32>} : memref<8x5x5x64xf32, #tpu.memory_space<vmem>>, vector<1x1x5x64xf32>,
    %c4_694 = arith.constant 4 : index
    %c0_695 = arith.constant 0 : index
    %1297 = memref.load %arg7[%c4_694, %c0_695] : memref<8x4xf32, #tpu.memory_space<smem>>
    %1298 = vector.broadcast %1297 : f32 to vector<5x64xf32>
    %1299 = arith.mulf %1150, %1298 : vector<5x64xf32>
    %c4_696 = arith.constant 4 : index
    %c1_697 = arith.constant 1 : index
    %1300 = memref.load %arg7[%c4_696, %c1_697] : memref<8x4xf32, #tpu.memory_space<smem>>
    %1301 = vector.broadcast %1300 : f32 to vector<5x64xf32>
    %1302 = arith.mulf %1152, %1301 : vector<5x64xf32>
    %1303 = arith.addf %1299, %1302 : vector<5x64xf32>
    %c4_698 = arith.constant 4 : index
    %c2_699 = arith.constant 2 : index
    %1304 = memref.load %arg7[%c4_698, %c2_699] : memref<8x4xf32, #tpu.memory_space<smem>>
    %1305 = vector.broadcast %1304 : f32 to vector<5x64xf32>
    %1306 = arith.mulf %1154, %1305 : vector<5x64xf32>
    %1307 = arith.addf %1303, %1306 : vector<5x64xf32>
    %c4_700 = arith.constant 4 : index
    %c3_701 = arith.constant 3 : index
    %1308 = memref.load %arg7[%c4_700, %c3_701] : memref<8x4xf32, #tpu.memory_space<smem>>
    %1309 = vector.broadcast %1308 : f32 to vector<5x64xf32>
    %1310 = arith.mulf %1156, %1309 : vector<5x64xf32>
    %1311 = arith.addf %1307, %1310 : vector<5x64xf32>
    %c4_702 = arith.constant 4 : index
    %1312 = memref.load %arg8[%c4_702] : memref<8xf32, #tpu.memory_space<smem>>
    %1313 = vector.broadcast %1312 : f32 to vector<5x64xf32>
    %1314 = arith.addf %1311, %1313 : vector<5x64xf32>
    %cst_703 = arith.constant 5.000000e-01 : f32
    %1315 = vector.broadcast %cst_703 : f32 to vector<5x64xf32>
    %1316 = arith.mulf %1314, %1315 : vector<5x64xf32>
    %1317 = arith.mulf %1314, %1314 : vector<5x64xf32>
    %1318 = arith.mulf %1317, %1314 : vector<5x64xf32>
    %cst_704 = arith.constant 4.471500e-02 : f32
    %1319 = vector.broadcast %cst_704 : f32 to vector<5x64xf32>
    %1320 = arith.mulf %1318, %1319 : vector<5x64xf32>
    %1321 = arith.addf %1314, %1320 : vector<5x64xf32>
    %cst_705 = arith.constant 0.797884583 : f32
    %1322 = vector.broadcast %cst_705 : f32 to vector<5x64xf32>
    %1323 = arith.mulf %1321, %1322 : vector<5x64xf32>
    %1324 = math.tanh %1323 : vector<5x64xf32>
    %cst_706 = arith.constant 1.000000e+00 : f32
    %1325 = vector.broadcast %cst_706 : f32 to vector<5x64xf32>
    %1326 = arith.addf %1324, %1325 : vector<5x64xf32>
    %1327 = arith.mulf %1316, %1326 : vector<5x64xf32>
    %1328 = arith.addf %1327, %105 : vector<5x64xf32>
    %c4_707 = arith.constant 4 : index
    %c3_708 = arith.constant 3 : index
    %c0_709 = arith.constant 0 : index
    %c0_710 = arith.constant 0 : index
    %1329 = vector.load %arg9[%c4_707, %c3_708, %c0_709, %c0_710] : memref<8x5x5x64xf32, #tpu.memory_space<vmem>>, vector<1x1x5x64xf32>
    %1330 = vector.shape_cast %1329 : vector<1x1x5x64xf32> to vector<5x64xf32>
    %1331 = vector.shape_cast %1328 : vector<5x64xf32> to vector<1x1x5x64xf32>
    tpu.vector_store %arg9[%c4_707, %c3_708, %c0_709, %c0_710], %1331 {strides = array<i32>} : memref<8x5x5x64xf32, #tpu.memory_space<vmem>>, vector<1x1x5x64xf32>,
    %c5_711 = arith.constant 5 : index
    %c0_712 = arith.constant 0 : index
    %1332 = memref.load %arg7[%c5_711, %c0_712] : memref<8x4xf32, #tpu.memory_space<smem>>
    %1333 = vector.broadcast %1332 : f32 to vector<5x64xf32>
    %1334 = arith.mulf %1150, %1333 : vector<5x64xf32>
    %c5_713 = arith.constant 5 : index
    %c1_714 = arith.constant 1 : index
    %1335 = memref.load %arg7[%c5_713, %c1_714] : memref<8x4xf32, #tpu.memory_space<smem>>
    %1336 = vector.broadcast %1335 : f32 to vector<5x64xf32>
    %1337 = arith.mulf %1152, %1336 : vector<5x64xf32>
    %1338 = arith.addf %1334, %1337 : vector<5x64xf32>
    %c5_715 = arith.constant 5 : index
    %c2_716 = arith.constant 2 : index
    %1339 = memref.load %arg7[%c5_715, %c2_716] : memref<8x4xf32, #tpu.memory_space<smem>>
    %1340 = vector.broadcast %1339 : f32 to vector<5x64xf32>
    %1341 = arith.mulf %1154, %1340 : vector<5x64xf32>
    %1342 = arith.addf %1338, %1341 : vector<5x64xf32>
    %c5_717 = arith.constant 5 : index
    %c3_718 = arith.constant 3 : index
    %1343 = memref.load %arg7[%c5_717, %c3_718] : memref<8x4xf32, #tpu.memory_space<smem>>
    %1344 = vector.broadcast %1343 : f32 to vector<5x64xf32>
    %1345 = arith.mulf %1156, %1344 : vector<5x64xf32>
    %1346 = arith.addf %1342, %1345 : vector<5x64xf32>
    %c5_719 = arith.constant 5 : index
    %1347 = memref.load %arg8[%c5_719] : memref<8xf32, #tpu.memory_space<smem>>
    %1348 = vector.broadcast %1347 : f32 to vector<5x64xf32>
    %1349 = arith.addf %1346, %1348 : vector<5x64xf32>
    %cst_720 = arith.constant 5.000000e-01 : f32
    %1350 = vector.broadcast %cst_720 : f32 to vector<5x64xf32>
    %1351 = arith.mulf %1349, %1350 : vector<5x64xf32>
    %1352 = arith.mulf %1349, %1349 : vector<5x64xf32>
    %1353 = arith.mulf %1352, %1349 : vector<5x64xf32>
    %cst_721 = arith.constant 4.471500e-02 : f32
    %1354 = vector.broadcast %cst_721 : f32 to vector<5x64xf32>
    %1355 = arith.mulf %1353, %1354 : vector<5x64xf32>
    %1356 = arith.addf %1349, %1355 : vector<5x64xf32>
    %cst_722 = arith.constant 0.797884583 : f32
    %1357 = vector.broadcast %cst_722 : f32 to vector<5x64xf32>
    %1358 = arith.mulf %1356, %1357 : vector<5x64xf32>
    %1359 = math.tanh %1358 : vector<5x64xf32>
    %cst_723 = arith.constant 1.000000e+00 : f32
    %1360 = vector.broadcast %cst_723 : f32 to vector<5x64xf32>
    %1361 = arith.addf %1359, %1360 : vector<5x64xf32>
    %1362 = arith.mulf %1351, %1361 : vector<5x64xf32>
    %1363 = arith.addf %1362, %105 : vector<5x64xf32>
    %c5_724 = arith.constant 5 : index
    %c3_725 = arith.constant 3 : index
    %c0_726 = arith.constant 0 : index
    %c0_727 = arith.constant 0 : index
    %1364 = vector.load %arg9[%c5_724, %c3_725, %c0_726, %c0_727] : memref<8x5x5x64xf32, #tpu.memory_space<vmem>>, vector<1x1x5x64xf32>
    %1365 = vector.shape_cast %1364 : vector<1x1x5x64xf32> to vector<5x64xf32>
    %1366 = vector.shape_cast %1363 : vector<5x64xf32> to vector<1x1x5x64xf32>
    tpu.vector_store %arg9[%c5_724, %c3_725, %c0_726, %c0_727], %1366 {strides = array<i32>} : memref<8x5x5x64xf32, #tpu.memory_space<vmem>>, vector<1x1x5x64xf32>,
    %c6_728 = arith.constant 6 : index
    %c0_729 = arith.constant 0 : index
    %1367 = memref.load %arg7[%c6_728, %c0_729] : memref<8x4xf32, #tpu.memory_space<smem>>
    %1368 = vector.broadcast %1367 : f32 to vector<5x64xf32>
    %1369 = arith.mulf %1150, %1368 : vector<5x64xf32>
    %c6_730 = arith.constant 6 : index
    %c1_731 = arith.constant 1 : index
    %1370 = memref.load %arg7[%c6_730, %c1_731] : memref<8x4xf32, #tpu.memory_space<smem>>
    %1371 = vector.broadcast %1370 : f32 to vector<5x64xf32>
    %1372 = arith.mulf %1152, %1371 : vector<5x64xf32>
    %1373 = arith.addf %1369, %1372 : vector<5x64xf32>
    %c6_732 = arith.constant 6 : index
    %c2_733 = arith.constant 2 : index
    %1374 = memref.load %arg7[%c6_732, %c2_733] : memref<8x4xf32, #tpu.memory_space<smem>>
    %1375 = vector.broadcast %1374 : f32 to vector<5x64xf32>
    %1376 = arith.mulf %1154, %1375 : vector<5x64xf32>
    %1377 = arith.addf %1373, %1376 : vector<5x64xf32>
    %c6_734 = arith.constant 6 : index
    %c3_735 = arith.constant 3 : index
    %1378 = memref.load %arg7[%c6_734, %c3_735] : memref<8x4xf32, #tpu.memory_space<smem>>
    %1379 = vector.broadcast %1378 : f32 to vector<5x64xf32>
    %1380 = arith.mulf %1156, %1379 : vector<5x64xf32>
    %1381 = arith.addf %1377, %1380 : vector<5x64xf32>
    %c6_736 = arith.constant 6 : index
    %1382 = memref.load %arg8[%c6_736] : memref<8xf32, #tpu.memory_space<smem>>
    %1383 = vector.broadcast %1382 : f32 to vector<5x64xf32>
    %1384 = arith.addf %1381, %1383 : vector<5x64xf32>
    %cst_737 = arith.constant 5.000000e-01 : f32
    %1385 = vector.broadcast %cst_737 : f32 to vector<5x64xf32>
    %1386 = arith.mulf %1384, %1385 : vector<5x64xf32>
    %1387 = arith.mulf %1384, %1384 : vector<5x64xf32>
    %1388 = arith.mulf %1387, %1384 : vector<5x64xf32>
    %cst_738 = arith.constant 4.471500e-02 : f32
    %1389 = vector.broadcast %cst_738 : f32 to vector<5x64xf32>
    %1390 = arith.mulf %1388, %1389 : vector<5x64xf32>
    %1391 = arith.addf %1384, %1390 : vector<5x64xf32>
    %cst_739 = arith.constant 0.797884583 : f32
    %1392 = vector.broadcast %cst_739 : f32 to vector<5x64xf32>
    %1393 = arith.mulf %1391, %1392 : vector<5x64xf32>
    %1394 = math.tanh %1393 : vector<5x64xf32>
    %cst_740 = arith.constant 1.000000e+00 : f32
    %1395 = vector.broadcast %cst_740 : f32 to vector<5x64xf32>
    %1396 = arith.addf %1394, %1395 : vector<5x64xf32>
    %1397 = arith.mulf %1386, %1396 : vector<5x64xf32>
    %1398 = arith.addf %1397, %105 : vector<5x64xf32>
    %c6_741 = arith.constant 6 : index
    %c3_742 = arith.constant 3 : index
    %c0_743 = arith.constant 0 : index
    %c0_744 = arith.constant 0 : index
    %1399 = vector.load %arg9[%c6_741, %c3_742, %c0_743, %c0_744] : memref<8x5x5x64xf32, #tpu.memory_space<vmem>>, vector<1x1x5x64xf32>
    %1400 = vector.shape_cast %1399 : vector<1x1x5x64xf32> to vector<5x64xf32>
    %1401 = vector.shape_cast %1398 : vector<5x64xf32> to vector<1x1x5x64xf32>
    tpu.vector_store %arg9[%c6_741, %c3_742, %c0_743, %c0_744], %1401 {strides = array<i32>} : memref<8x5x5x64xf32, #tpu.memory_space<vmem>>, vector<1x1x5x64xf32>,
    %c7_745 = arith.constant 7 : index
    %c0_746 = arith.constant 0 : index
    %1402 = memref.load %arg7[%c7_745, %c0_746] : memref<8x4xf32, #tpu.memory_space<smem>>
    %1403 = vector.broadcast %1402 : f32 to vector<5x64xf32>
    %1404 = arith.mulf %1150, %1403 : vector<5x64xf32>
    %c7_747 = arith.constant 7 : index
    %c1_748 = arith.constant 1 : index
    %1405 = memref.load %arg7[%c7_747, %c1_748] : memref<8x4xf32, #tpu.memory_space<smem>>
    %1406 = vector.broadcast %1405 : f32 to vector<5x64xf32>
    %1407 = arith.mulf %1152, %1406 : vector<5x64xf32>
    %1408 = arith.addf %1404, %1407 : vector<5x64xf32>
    %c7_749 = arith.constant 7 : index
    %c2_750 = arith.constant 2 : index
    %1409 = memref.load %arg7[%c7_749, %c2_750] : memref<8x4xf32, #tpu.memory_space<smem>>
    %1410 = vector.broadcast %1409 : f32 to vector<5x64xf32>
    %1411 = arith.mulf %1154, %1410 : vector<5x64xf32>
    %1412 = arith.addf %1408, %1411 : vector<5x64xf32>
    %c7_751 = arith.constant 7 : index
    %c3_752 = arith.constant 3 : index
    %1413 = memref.load %arg7[%c7_751, %c3_752] : memref<8x4xf32, #tpu.memory_space<smem>>
    %1414 = vector.broadcast %1413 : f32 to vector<5x64xf32>
    %1415 = arith.mulf %1156, %1414 : vector<5x64xf32>
    %1416 = arith.addf %1412, %1415 : vector<5x64xf32>
    %c7_753 = arith.constant 7 : index
    %1417 = memref.load %arg8[%c7_753] : memref<8xf32, #tpu.memory_space<smem>>
    %1418 = vector.broadcast %1417 : f32 to vector<5x64xf32>
    %1419 = arith.addf %1416, %1418 : vector<5x64xf32>
    %cst_754 = arith.constant 5.000000e-01 : f32
    %1420 = vector.broadcast %cst_754 : f32 to vector<5x64xf32>
    %1421 = arith.mulf %1419, %1420 : vector<5x64xf32>
    %1422 = arith.mulf %1419, %1419 : vector<5x64xf32>
    %1423 = arith.mulf %1422, %1419 : vector<5x64xf32>
    %cst_755 = arith.constant 4.471500e-02 : f32
    %1424 = vector.broadcast %cst_755 : f32 to vector<5x64xf32>
    %1425 = arith.mulf %1423, %1424 : vector<5x64xf32>
    %1426 = arith.addf %1419, %1425 : vector<5x64xf32>
    %cst_756 = arith.constant 0.797884583 : f32
    %1427 = vector.broadcast %cst_756 : f32 to vector<5x64xf32>
    %1428 = arith.mulf %1426, %1427 : vector<5x64xf32>
    %1429 = math.tanh %1428 : vector<5x64xf32>
    %cst_757 = arith.constant 1.000000e+00 : f32
    %1430 = vector.broadcast %cst_757 : f32 to vector<5x64xf32>
    %1431 = arith.addf %1429, %1430 : vector<5x64xf32>
    %1432 = arith.mulf %1421, %1431 : vector<5x64xf32>
    %1433 = arith.addf %1432, %105 : vector<5x64xf32>
    %c7_758 = arith.constant 7 : index
    %c3_759 = arith.constant 3 : index
    %c0_760 = arith.constant 0 : index
    %c0_761 = arith.constant 0 : index
    %1434 = vector.load %arg9[%c7_758, %c3_759, %c0_760, %c0_761] : memref<8x5x5x64xf32, #tpu.memory_space<vmem>>, vector<1x1x5x64xf32>
    %1435 = vector.shape_cast %1434 : vector<1x1x5x64xf32> to vector<5x64xf32>
    %1436 = vector.shape_cast %1433 : vector<5x64xf32> to vector<1x1x5x64xf32>
    tpu.vector_store %arg9[%c7_758, %c3_759, %c0_760, %c0_761], %1436 {strides = array<i32>} : memref<8x5x5x64xf32, #tpu.memory_space<vmem>>, vector<1x1x5x64xf32>,
    %c0_762 = arith.constant 0 : index
    %c4_763 = arith.constant 4 : index
    %c0_764 = arith.constant 0 : index
    %c0_765 = arith.constant 0 : index
    %1437 = vector.load %arg6[%c0_762, %c4_763, %c0_764, %c0_765] : memref<4x5x5x64xf32, #tpu.memory_space<vmem>>, vector<1x1x5x64xf32>
    %1438 = vector.shape_cast %1437 : vector<1x1x5x64xf32> to vector<5x64xf32>
    %c1_766 = arith.constant 1 : index
    %c4_767 = arith.constant 4 : index
    %c0_768 = arith.constant 0 : index
    %c0_769 = arith.constant 0 : index
    %1439 = vector.load %arg6[%c1_766, %c4_767, %c0_768, %c0_769] : memref<4x5x5x64xf32, #tpu.memory_space<vmem>>, vector<1x1x5x64xf32>
    %1440 = vector.shape_cast %1439 : vector<1x1x5x64xf32> to vector<5x64xf32>
    %c2_770 = arith.constant 2 : index
    %c4_771 = arith.constant 4 : index
    %c0_772 = arith.constant 0 : index
    %c0_773 = arith.constant 0 : index
    %1441 = vector.load %arg6[%c2_770, %c4_771, %c0_772, %c0_773] : memref<4x5x5x64xf32, #tpu.memory_space<vmem>>, vector<1x1x5x64xf32>
    %1442 = vector.shape_cast %1441 : vector<1x1x5x64xf32> to vector<5x64xf32>
    %c3_774 = arith.constant 3 : index
    %c4_775 = arith.constant 4 : index
    %c0_776 = arith.constant 0 : index
    %c0_777 = arith.constant 0 : index
    %1443 = vector.load %arg6[%c3_774, %c4_775, %c0_776, %c0_777] : memref<4x5x5x64xf32, #tpu.memory_space<vmem>>, vector<1x1x5x64xf32>
    %1444 = vector.shape_cast %1443 : vector<1x1x5x64xf32> to vector<5x64xf32>
    %c0_778 = arith.constant 0 : index
    %c0_779 = arith.constant 0 : index
    %1445 = memref.load %arg7[%c0_778, %c0_779] : memref<8x4xf32, #tpu.memory_space<smem>>
    %1446 = vector.broadcast %1445 : f32 to vector<5x64xf32>
    %1447 = arith.mulf %1438, %1446 : vector<5x64xf32>
    %c0_780 = arith.constant 0 : index
    %c1_781 = arith.constant 1 : index
    %1448 = memref.load %arg7[%c0_780, %c1_781] : memref<8x4xf32, #tpu.memory_space<smem>>
    %1449 = vector.broadcast %1448 : f32 to vector<5x64xf32>
    %1450 = arith.mulf %1440, %1449 : vector<5x64xf32>
    %1451 = arith.addf %1447, %1450 : vector<5x64xf32>
    %c0_782 = arith.constant 0 : index
    %c2_783 = arith.constant 2 : index
    %1452 = memref.load %arg7[%c0_782, %c2_783] : memref<8x4xf32, #tpu.memory_space<smem>>
    %1453 = vector.broadcast %1452 : f32 to vector<5x64xf32>
    %1454 = arith.mulf %1442, %1453 : vector<5x64xf32>
    %1455 = arith.addf %1451, %1454 : vector<5x64xf32>
    %c0_784 = arith.constant 0 : index
    %c3_785 = arith.constant 3 : index
    %1456 = memref.load %arg7[%c0_784, %c3_785] : memref<8x4xf32, #tpu.memory_space<smem>>
    %1457 = vector.broadcast %1456 : f32 to vector<5x64xf32>
    %1458 = arith.mulf %1444, %1457 : vector<5x64xf32>
    %1459 = arith.addf %1455, %1458 : vector<5x64xf32>
    %c0_786 = arith.constant 0 : index
    %1460 = memref.load %arg8[%c0_786] : memref<8xf32, #tpu.memory_space<smem>>
    %1461 = vector.broadcast %1460 : f32 to vector<5x64xf32>
    %1462 = arith.addf %1459, %1461 : vector<5x64xf32>
    %cst_787 = arith.constant 5.000000e-01 : f32
    %1463 = vector.broadcast %cst_787 : f32 to vector<5x64xf32>
    %1464 = arith.mulf %1462, %1463 : vector<5x64xf32>
    %1465 = arith.mulf %1462, %1462 : vector<5x64xf32>
    %1466 = arith.mulf %1465, %1462 : vector<5x64xf32>
    %cst_788 = arith.constant 4.471500e-02 : f32
    %1467 = vector.broadcast %cst_788 : f32 to vector<5x64xf32>
    %1468 = arith.mulf %1466, %1467 : vector<5x64xf32>
    %1469 = arith.addf %1462, %1468 : vector<5x64xf32>
    %cst_789 = arith.constant 0.797884583 : f32
    %1470 = vector.broadcast %cst_789 : f32 to vector<5x64xf32>
    %1471 = arith.mulf %1469, %1470 : vector<5x64xf32>
    %1472 = math.tanh %1471 : vector<5x64xf32>
    %cst_790 = arith.constant 1.000000e+00 : f32
    %1473 = vector.broadcast %cst_790 : f32 to vector<5x64xf32>
    %1474 = arith.addf %1472, %1473 : vector<5x64xf32>
    %1475 = arith.mulf %1464, %1474 : vector<5x64xf32>
    %1476 = arith.addf %1475, %105 : vector<5x64xf32>
    %c0_791 = arith.constant 0 : index
    %c4_792 = arith.constant 4 : index
    %c0_793 = arith.constant 0 : index
    %c0_794 = arith.constant 0 : index
    %1477 = vector.load %arg9[%c0_791, %c4_792, %c0_793, %c0_794] : memref<8x5x5x64xf32, #tpu.memory_space<vmem>>, vector<1x1x5x64xf32>
    %1478 = vector.shape_cast %1477 : vector<1x1x5x64xf32> to vector<5x64xf32>
    %1479 = vector.shape_cast %1476 : vector<5x64xf32> to vector<1x1x5x64xf32>
    tpu.vector_store %arg9[%c0_791, %c4_792, %c0_793, %c0_794], %1479 {strides = array<i32>} : memref<8x5x5x64xf32, #tpu.memory_space<vmem>>, vector<1x1x5x64xf32>,
    %c1_795 = arith.constant 1 : index
    %c0_796 = arith.constant 0 : index
    %1480 = memref.load %arg7[%c1_795, %c0_796] : memref<8x4xf32, #tpu.memory_space<smem>>
    %1481 = vector.broadcast %1480 : f32 to vector<5x64xf32>
    %1482 = arith.mulf %1438, %1481 : vector<5x64xf32>
    %c1_797 = arith.constant 1 : index
    %c1_798 = arith.constant 1 : index
    %1483 = memref.load %arg7[%c1_797, %c1_798] : memref<8x4xf32, #tpu.memory_space<smem>>
    %1484 = vector.broadcast %1483 : f32 to vector<5x64xf32>
    %1485 = arith.mulf %1440, %1484 : vector<5x64xf32>
    %1486 = arith.addf %1482, %1485 : vector<5x64xf32>
    %c1_799 = arith.constant 1 : index
    %c2_800 = arith.constant 2 : index
    %1487 = memref.load %arg7[%c1_799, %c2_800] : memref<8x4xf32, #tpu.memory_space<smem>>
    %1488 = vector.broadcast %1487 : f32 to vector<5x64xf32>
    %1489 = arith.mulf %1442, %1488 : vector<5x64xf32>
    %1490 = arith.addf %1486, %1489 : vector<5x64xf32>
    %c1_801 = arith.constant 1 : index
    %c3_802 = arith.constant 3 : index
    %1491 = memref.load %arg7[%c1_801, %c3_802] : memref<8x4xf32, #tpu.memory_space<smem>>
    %1492 = vector.broadcast %1491 : f32 to vector<5x64xf32>
    %1493 = arith.mulf %1444, %1492 : vector<5x64xf32>
    %1494 = arith.addf %1490, %1493 : vector<5x64xf32>
    %c1_803 = arith.constant 1 : index
    %1495 = memref.load %arg8[%c1_803] : memref<8xf32, #tpu.memory_space<smem>>
    %1496 = vector.broadcast %1495 : f32 to vector<5x64xf32>
    %1497 = arith.addf %1494, %1496 : vector<5x64xf32>
    %cst_804 = arith.constant 5.000000e-01 : f32
    %1498 = vector.broadcast %cst_804 : f32 to vector<5x64xf32>
    %1499 = arith.mulf %1497, %1498 : vector<5x64xf32>
    %1500 = arith.mulf %1497, %1497 : vector<5x64xf32>
    %1501 = arith.mulf %1500, %1497 : vector<5x64xf32>
    %cst_805 = arith.constant 4.471500e-02 : f32
    %1502 = vector.broadcast %cst_805 : f32 to vector<5x64xf32>
    %1503 = arith.mulf %1501, %1502 : vector<5x64xf32>
    %1504 = arith.addf %1497, %1503 : vector<5x64xf32>
    %cst_806 = arith.constant 0.797884583 : f32
    %1505 = vector.broadcast %cst_806 : f32 to vector<5x64xf32>
    %1506 = arith.mulf %1504, %1505 : vector<5x64xf32>
    %1507 = math.tanh %1506 : vector<5x64xf32>
    %cst_807 = arith.constant 1.000000e+00 : f32
    %1508 = vector.broadcast %cst_807 : f32 to vector<5x64xf32>
    %1509 = arith.addf %1507, %1508 : vector<5x64xf32>
    %1510 = arith.mulf %1499, %1509 : vector<5x64xf32>
    %1511 = arith.addf %1510, %105 : vector<5x64xf32>
    %c1_808 = arith.constant 1 : index
    %c4_809 = arith.constant 4 : index
    %c0_810 = arith.constant 0 : index
    %c0_811 = arith.constant 0 : index
    %1512 = vector.load %arg9[%c1_808, %c4_809, %c0_810, %c0_811] : memref<8x5x5x64xf32, #tpu.memory_space<vmem>>, vector<1x1x5x64xf32>
    %1513 = vector.shape_cast %1512 : vector<1x1x5x64xf32> to vector<5x64xf32>
    %1514 = vector.shape_cast %1511 : vector<5x64xf32> to vector<1x1x5x64xf32>
    tpu.vector_store %arg9[%c1_808, %c4_809, %c0_810, %c0_811], %1514 {strides = array<i32>} : memref<8x5x5x64xf32, #tpu.memory_space<vmem>>, vector<1x1x5x64xf32>,
    %c2_812 = arith.constant 2 : index
    %c0_813 = arith.constant 0 : index
    %1515 = memref.load %arg7[%c2_812, %c0_813] : memref<8x4xf32, #tpu.memory_space<smem>>
    %1516 = vector.broadcast %1515 : f32 to vector<5x64xf32>
    %1517 = arith.mulf %1438, %1516 : vector<5x64xf32>
    %c2_814 = arith.constant 2 : index
    %c1_815 = arith.constant 1 : index
    %1518 = memref.load %arg7[%c2_814, %c1_815] : memref<8x4xf32, #tpu.memory_space<smem>>
    %1519 = vector.broadcast %1518 : f32 to vector<5x64xf32>
    %1520 = arith.mulf %1440, %1519 : vector<5x64xf32>
    %1521 = arith.addf %1517, %1520 : vector<5x64xf32>
    %c2_816 = arith.constant 2 : index
    %c2_817 = arith.constant 2 : index
    %1522 = memref.load %arg7[%c2_816, %c2_817] : memref<8x4xf32, #tpu.memory_space<smem>>
    %1523 = vector.broadcast %1522 : f32 to vector<5x64xf32>
    %1524 = arith.mulf %1442, %1523 : vector<5x64xf32>
    %1525 = arith.addf %1521, %1524 : vector<5x64xf32>
    %c2_818 = arith.constant 2 : index
    %c3_819 = arith.constant 3 : index
    %1526 = memref.load %arg7[%c2_818, %c3_819] : memref<8x4xf32, #tpu.memory_space<smem>>
    %1527 = vector.broadcast %1526 : f32 to vector<5x64xf32>
    %1528 = arith.mulf %1444, %1527 : vector<5x64xf32>
    %1529 = arith.addf %1525, %1528 : vector<5x64xf32>
    %c2_820 = arith.constant 2 : index
    %1530 = memref.load %arg8[%c2_820] : memref<8xf32, #tpu.memory_space<smem>>
    %1531 = vector.broadcast %1530 : f32 to vector<5x64xf32>
    %1532 = arith.addf %1529, %1531 : vector<5x64xf32>
    %cst_821 = arith.constant 5.000000e-01 : f32
    %1533 = vector.broadcast %cst_821 : f32 to vector<5x64xf32>
    %1534 = arith.mulf %1532, %1533 : vector<5x64xf32>
    %1535 = arith.mulf %1532, %1532 : vector<5x64xf32>
    %1536 = arith.mulf %1535, %1532 : vector<5x64xf32>
    %cst_822 = arith.constant 4.471500e-02 : f32
    %1537 = vector.broadcast %cst_822 : f32 to vector<5x64xf32>
    %1538 = arith.mulf %1536, %1537 : vector<5x64xf32>
    %1539 = arith.addf %1532, %1538 : vector<5x64xf32>
    %cst_823 = arith.constant 0.797884583 : f32
    %1540 = vector.broadcast %cst_823 : f32 to vector<5x64xf32>
    %1541 = arith.mulf %1539, %1540 : vector<5x64xf32>
    %1542 = math.tanh %1541 : vector<5x64xf32>
    %cst_824 = arith.constant 1.000000e+00 : f32
    %1543 = vector.broadcast %cst_824 : f32 to vector<5x64xf32>
    %1544 = arith.addf %1542, %1543 : vector<5x64xf32>
    %1545 = arith.mulf %1534, %1544 : vector<5x64xf32>
    %1546 = arith.addf %1545, %105 : vector<5x64xf32>
    %c2_825 = arith.constant 2 : index
    %c4_826 = arith.constant 4 : index
    %c0_827 = arith.constant 0 : index
    %c0_828 = arith.constant 0 : index
    %1547 = vector.load %arg9[%c2_825, %c4_826, %c0_827, %c0_828] : memref<8x5x5x64xf32, #tpu.memory_space<vmem>>, vector<1x1x5x64xf32>
    %1548 = vector.shape_cast %1547 : vector<1x1x5x64xf32> to vector<5x64xf32>
    %1549 = vector.shape_cast %1546 : vector<5x64xf32> to vector<1x1x5x64xf32>
    tpu.vector_store %arg9[%c2_825, %c4_826, %c0_827, %c0_828], %1549 {strides = array<i32>} : memref<8x5x5x64xf32, #tpu.memory_space<vmem>>, vector<1x1x5x64xf32>,
    %c3_829 = arith.constant 3 : index
    %c0_830 = arith.constant 0 : index
    %1550 = memref.load %arg7[%c3_829, %c0_830] : memref<8x4xf32, #tpu.memory_space<smem>>
    %1551 = vector.broadcast %1550 : f32 to vector<5x64xf32>
    %1552 = arith.mulf %1438, %1551 : vector<5x64xf32>
    %c3_831 = arith.constant 3 : index
    %c1_832 = arith.constant 1 : index
    %1553 = memref.load %arg7[%c3_831, %c1_832] : memref<8x4xf32, #tpu.memory_space<smem>>
    %1554 = vector.broadcast %1553 : f32 to vector<5x64xf32>
    %1555 = arith.mulf %1440, %1554 : vector<5x64xf32>
    %1556 = arith.addf %1552, %1555 : vector<5x64xf32>
    %c3_833 = arith.constant 3 : index
    %c2_834 = arith.constant 2 : index
    %1557 = memref.load %arg7[%c3_833, %c2_834] : memref<8x4xf32, #tpu.memory_space<smem>>
    %1558 = vector.broadcast %1557 : f32 to vector<5x64xf32>
    %1559 = arith.mulf %1442, %1558 : vector<5x64xf32>
    %1560 = arith.addf %1556, %1559 : vector<5x64xf32>
    %c3_835 = arith.constant 3 : index
    %c3_836 = arith.constant 3 : index
    %1561 = memref.load %arg7[%c3_835, %c3_836] : memref<8x4xf32, #tpu.memory_space<smem>>
    %1562 = vector.broadcast %1561 : f32 to vector<5x64xf32>
    %1563 = arith.mulf %1444, %1562 : vector<5x64xf32>
    %1564 = arith.addf %1560, %1563 : vector<5x64xf32>
    %c3_837 = arith.constant 3 : index
    %1565 = memref.load %arg8[%c3_837] : memref<8xf32, #tpu.memory_space<smem>>
    %1566 = vector.broadcast %1565 : f32 to vector<5x64xf32>
    %1567 = arith.addf %1564, %1566 : vector<5x64xf32>
    %cst_838 = arith.constant 5.000000e-01 : f32
    %1568 = vector.broadcast %cst_838 : f32 to vector<5x64xf32>
    %1569 = arith.mulf %1567, %1568 : vector<5x64xf32>
    %1570 = arith.mulf %1567, %1567 : vector<5x64xf32>
    %1571 = arith.mulf %1570, %1567 : vector<5x64xf32>
    %cst_839 = arith.constant 4.471500e-02 : f32
    %1572 = vector.broadcast %cst_839 : f32 to vector<5x64xf32>
    %1573 = arith.mulf %1571, %1572 : vector<5x64xf32>
    %1574 = arith.addf %1567, %1573 : vector<5x64xf32>
    %cst_840 = arith.constant 0.797884583 : f32
    %1575 = vector.broadcast %cst_840 : f32 to vector<5x64xf32>
    %1576 = arith.mulf %1574, %1575 : vector<5x64xf32>
    %1577 = math.tanh %1576 : vector<5x64xf32>
    %cst_841 = arith.constant 1.000000e+00 : f32
    %1578 = vector.broadcast %cst_841 : f32 to vector<5x64xf32>
    %1579 = arith.addf %1577, %1578 : vector<5x64xf32>
    %1580 = arith.mulf %1569, %1579 : vector<5x64xf32>
    %1581 = arith.addf %1580, %105 : vector<5x64xf32>
    %c3_842 = arith.constant 3 : index
    %c4_843 = arith.constant 4 : index
    %c0_844 = arith.constant 0 : index
    %c0_845 = arith.constant 0 : index
    %1582 = vector.load %arg9[%c3_842, %c4_843, %c0_844, %c0_845] : memref<8x5x5x64xf32, #tpu.memory_space<vmem>>, vector<1x1x5x64xf32>
    %1583 = vector.shape_cast %1582 : vector<1x1x5x64xf32> to vector<5x64xf32>
    %1584 = vector.shape_cast %1581 : vector<5x64xf32> to vector<1x1x5x64xf32>
    tpu.vector_store %arg9[%c3_842, %c4_843, %c0_844, %c0_845], %1584 {strides = array<i32>} : memref<8x5x5x64xf32, #tpu.memory_space<vmem>>, vector<1x1x5x64xf32>,
    %c4_846 = arith.constant 4 : index
    %c0_847 = arith.constant 0 : index
    %1585 = memref.load %arg7[%c4_846, %c0_847] : memref<8x4xf32, #tpu.memory_space<smem>>
    %1586 = vector.broadcast %1585 : f32 to vector<5x64xf32>
    %1587 = arith.mulf %1438, %1586 : vector<5x64xf32>
    %c4_848 = arith.constant 4 : index
    %c1_849 = arith.constant 1 : index
    %1588 = memref.load %arg7[%c4_848, %c1_849] : memref<8x4xf32, #tpu.memory_space<smem>>
    %1589 = vector.broadcast %1588 : f32 to vector<5x64xf32>
    %1590 = arith.mulf %1440, %1589 : vector<5x64xf32>
    %1591 = arith.addf %1587, %1590 : vector<5x64xf32>
    %c4_850 = arith.constant 4 : index
    %c2_851 = arith.constant 2 : index
    %1592 = memref.load %arg7[%c4_850, %c2_851] : memref<8x4xf32, #tpu.memory_space<smem>>
    %1593 = vector.broadcast %1592 : f32 to vector<5x64xf32>
    %1594 = arith.mulf %1442, %1593 : vector<5x64xf32>
    %1595 = arith.addf %1591, %1594 : vector<5x64xf32>
    %c4_852 = arith.constant 4 : index
    %c3_853 = arith.constant 3 : index
    %1596 = memref.load %arg7[%c4_852, %c3_853] : memref<8x4xf32, #tpu.memory_space<smem>>
    %1597 = vector.broadcast %1596 : f32 to vector<5x64xf32>
    %1598 = arith.mulf %1444, %1597 : vector<5x64xf32>
    %1599 = arith.addf %1595, %1598 : vector<5x64xf32>
    %c4_854 = arith.constant 4 : index
    %1600 = memref.load %arg8[%c4_854] : memref<8xf32, #tpu.memory_space<smem>>
    %1601 = vector.broadcast %1600 : f32 to vector<5x64xf32>
    %1602 = arith.addf %1599, %1601 : vector<5x64xf32>
    %cst_855 = arith.constant 5.000000e-01 : f32
    %1603 = vector.broadcast %cst_855 : f32 to vector<5x64xf32>
    %1604 = arith.mulf %1602, %1603 : vector<5x64xf32>
    %1605 = arith.mulf %1602, %1602 : vector<5x64xf32>
    %1606 = arith.mulf %1605, %1602 : vector<5x64xf32>
    %cst_856 = arith.constant 4.471500e-02 : f32
    %1607 = vector.broadcast %cst_856 : f32 to vector<5x64xf32>
    %1608 = arith.mulf %1606, %1607 : vector<5x64xf32>
    %1609 = arith.addf %1602, %1608 : vector<5x64xf32>
    %cst_857 = arith.constant 0.797884583 : f32
    %1610 = vector.broadcast %cst_857 : f32 to vector<5x64xf32>
    %1611 = arith.mulf %1609, %1610 : vector<5x64xf32>
    %1612 = math.tanh %1611 : vector<5x64xf32>
    %cst_858 = arith.constant 1.000000e+00 : f32
    %1613 = vector.broadcast %cst_858 : f32 to vector<5x64xf32>
    %1614 = arith.addf %1612, %1613 : vector<5x64xf32>
    %1615 = arith.mulf %1604, %1614 : vector<5x64xf32>
    %1616 = arith.addf %1615, %105 : vector<5x64xf32>
    %c4_859 = arith.constant 4 : index
    %c4_860 = arith.constant 4 : index
    %c0_861 = arith.constant 0 : index
    %c0_862 = arith.constant 0 : index
    %1617 = vector.load %arg9[%c4_859, %c4_860, %c0_861, %c0_862] : memref<8x5x5x64xf32, #tpu.memory_space<vmem>>, vector<1x1x5x64xf32>
    %1618 = vector.shape_cast %1617 : vector<1x1x5x64xf32> to vector<5x64xf32>
    %1619 = vector.shape_cast %1616 : vector<5x64xf32> to vector<1x1x5x64xf32>
    tpu.vector_store %arg9[%c4_859, %c4_860, %c0_861, %c0_862], %1619 {strides = array<i32>} : memref<8x5x5x64xf32, #tpu.memory_space<vmem>>, vector<1x1x5x64xf32>,
    %c5_863 = arith.constant 5 : index
    %c0_864 = arith.constant 0 : index
    %1620 = memref.load %arg7[%c5_863, %c0_864] : memref<8x4xf32, #tpu.memory_space<smem>>
    %1621 = vector.broadcast %1620 : f32 to vector<5x64xf32>
    %1622 = arith.mulf %1438, %1621 : vector<5x64xf32>
    %c5_865 = arith.constant 5 : index
    %c1_866 = arith.constant 1 : index
    %1623 = memref.load %arg7[%c5_865, %c1_866] : memref<8x4xf32, #tpu.memory_space<smem>>
    %1624 = vector.broadcast %1623 : f32 to vector<5x64xf32>
    %1625 = arith.mulf %1440, %1624 : vector<5x64xf32>
    %1626 = arith.addf %1622, %1625 : vector<5x64xf32>
    %c5_867 = arith.constant 5 : index
    %c2_868 = arith.constant 2 : index
    %1627 = memref.load %arg7[%c5_867, %c2_868] : memref<8x4xf32, #tpu.memory_space<smem>>
    %1628 = vector.broadcast %1627 : f32 to vector<5x64xf32>
    %1629 = arith.mulf %1442, %1628 : vector<5x64xf32>
    %1630 = arith.addf %1626, %1629 : vector<5x64xf32>
    %c5_869 = arith.constant 5 : index
    %c3_870 = arith.constant 3 : index
    %1631 = memref.load %arg7[%c5_869, %c3_870] : memref<8x4xf32, #tpu.memory_space<smem>>
    %1632 = vector.broadcast %1631 : f32 to vector<5x64xf32>
    %1633 = arith.mulf %1444, %1632 : vector<5x64xf32>
    %1634 = arith.addf %1630, %1633 : vector<5x64xf32>
    %c5_871 = arith.constant 5 : index
    %1635 = memref.load %arg8[%c5_871] : memref<8xf32, #tpu.memory_space<smem>>
    %1636 = vector.broadcast %1635 : f32 to vector<5x64xf32>
    %1637 = arith.addf %1634, %1636 : vector<5x64xf32>
    %cst_872 = arith.constant 5.000000e-01 : f32
    %1638 = vector.broadcast %cst_872 : f32 to vector<5x64xf32>
    %1639 = arith.mulf %1637, %1638 : vector<5x64xf32>
    %1640 = arith.mulf %1637, %1637 : vector<5x64xf32>
    %1641 = arith.mulf %1640, %1637 : vector<5x64xf32>
    %cst_873 = arith.constant 4.471500e-02 : f32
    %1642 = vector.broadcast %cst_873 : f32 to vector<5x64xf32>
    %1643 = arith.mulf %1641, %1642 : vector<5x64xf32>
    %1644 = arith.addf %1637, %1643 : vector<5x64xf32>
    %cst_874 = arith.constant 0.797884583 : f32
    %1645 = vector.broadcast %cst_874 : f32 to vector<5x64xf32>
    %1646 = arith.mulf %1644, %1645 : vector<5x64xf32>
    %1647 = math.tanh %1646 : vector<5x64xf32>
    %cst_875 = arith.constant 1.000000e+00 : f32
    %1648 = vector.broadcast %cst_875 : f32 to vector<5x64xf32>
    %1649 = arith.addf %1647, %1648 : vector<5x64xf32>
    %1650 = arith.mulf %1639, %1649 : vector<5x64xf32>
    %1651 = arith.addf %1650, %105 : vector<5x64xf32>
    %c5_876 = arith.constant 5 : index
    %c4_877 = arith.constant 4 : index
    %c0_878 = arith.constant 0 : index
    %c0_879 = arith.constant 0 : index
    %1652 = vector.load %arg9[%c5_876, %c4_877, %c0_878, %c0_879] : memref<8x5x5x64xf32, #tpu.memory_space<vmem>>, vector<1x1x5x64xf32>
    %1653 = vector.shape_cast %1652 : vector<1x1x5x64xf32> to vector<5x64xf32>
    %1654 = vector.shape_cast %1651 : vector<5x64xf32> to vector<1x1x5x64xf32>
    tpu.vector_store %arg9[%c5_876, %c4_877, %c0_878, %c0_879], %1654 {strides = array<i32>} : memref<8x5x5x64xf32, #tpu.memory_space<vmem>>, vector<1x1x5x64xf32>,
    %c6_880 = arith.constant 6 : index
    %c0_881 = arith.constant 0 : index
    %1655 = memref.load %arg7[%c6_880, %c0_881] : memref<8x4xf32, #tpu.memory_space<smem>>
    %1656 = vector.broadcast %1655 : f32 to vector<5x64xf32>
    %1657 = arith.mulf %1438, %1656 : vector<5x64xf32>
    %c6_882 = arith.constant 6 : index
    %c1_883 = arith.constant 1 : index
    %1658 = memref.load %arg7[%c6_882, %c1_883] : memref<8x4xf32, #tpu.memory_space<smem>>
    %1659 = vector.broadcast %1658 : f32 to vector<5x64xf32>
    %1660 = arith.mulf %1440, %1659 : vector<5x64xf32>
    %1661 = arith.addf %1657, %1660 : vector<5x64xf32>
    %c6_884 = arith.constant 6 : index
    %c2_885 = arith.constant 2 : index
    %1662 = memref.load %arg7[%c6_884, %c2_885] : memref<8x4xf32, #tpu.memory_space<smem>>
    %1663 = vector.broadcast %1662 : f32 to vector<5x64xf32>
    %1664 = arith.mulf %1442, %1663 : vector<5x64xf32>
    %1665 = arith.addf %1661, %1664 : vector<5x64xf32>
    %c6_886 = arith.constant 6 : index
    %c3_887 = arith.constant 3 : index
    %1666 = memref.load %arg7[%c6_886, %c3_887] : memref<8x4xf32, #tpu.memory_space<smem>>
    %1667 = vector.broadcast %1666 : f32 to vector<5x64xf32>
    %1668 = arith.mulf %1444, %1667 : vector<5x64xf32>
    %1669 = arith.addf %1665, %1668 : vector<5x64xf32>
    %c6_888 = arith.constant 6 : index
    %1670 = memref.load %arg8[%c6_888] : memref<8xf32, #tpu.memory_space<smem>>
    %1671 = vector.broadcast %1670 : f32 to vector<5x64xf32>
    %1672 = arith.addf %1669, %1671 : vector<5x64xf32>
    %cst_889 = arith.constant 5.000000e-01 : f32
    %1673 = vector.broadcast %cst_889 : f32 to vector<5x64xf32>
    %1674 = arith.mulf %1672, %1673 : vector<5x64xf32>
    %1675 = arith.mulf %1672, %1672 : vector<5x64xf32>
    %1676 = arith.mulf %1675, %1672 : vector<5x64xf32>
    %cst_890 = arith.constant 4.471500e-02 : f32
    %1677 = vector.broadcast %cst_890 : f32 to vector<5x64xf32>
    %1678 = arith.mulf %1676, %1677 : vector<5x64xf32>
    %1679 = arith.addf %1672, %1678 : vector<5x64xf32>
    %cst_891 = arith.constant 0.797884583 : f32
    %1680 = vector.broadcast %cst_891 : f32 to vector<5x64xf32>
    %1681 = arith.mulf %1679, %1680 : vector<5x64xf32>
    %1682 = math.tanh %1681 : vector<5x64xf32>
    %cst_892 = arith.constant 1.000000e+00 : f32
    %1683 = vector.broadcast %cst_892 : f32 to vector<5x64xf32>
    %1684 = arith.addf %1682, %1683 : vector<5x64xf32>
    %1685 = arith.mulf %1674, %1684 : vector<5x64xf32>
    %1686 = arith.addf %1685, %105 : vector<5x64xf32>
    %c6_893 = arith.constant 6 : index
    %c4_894 = arith.constant 4 : index
    %c0_895 = arith.constant 0 : index
    %c0_896 = arith.constant 0 : index
    %1687 = vector.load %arg9[%c6_893, %c4_894, %c0_895, %c0_896] : memref<8x5x5x64xf32, #tpu.memory_space<vmem>>, vector<1x1x5x64xf32>
    %1688 = vector.shape_cast %1687 : vector<1x1x5x64xf32> to vector<5x64xf32>
    %1689 = vector.shape_cast %1686 : vector<5x64xf32> to vector<1x1x5x64xf32>
    tpu.vector_store %arg9[%c6_893, %c4_894, %c0_895, %c0_896], %1689 {strides = array<i32>} : memref<8x5x5x64xf32, #tpu.memory_space<vmem>>, vector<1x1x5x64xf32>,
    %c7_897 = arith.constant 7 : index
    %c0_898 = arith.constant 0 : index
    %1690 = memref.load %arg7[%c7_897, %c0_898] : memref<8x4xf32, #tpu.memory_space<smem>>
    %1691 = vector.broadcast %1690 : f32 to vector<5x64xf32>
    %1692 = arith.mulf %1438, %1691 : vector<5x64xf32>
    %c7_899 = arith.constant 7 : index
    %c1_900 = arith.constant 1 : index
    %1693 = memref.load %arg7[%c7_899, %c1_900] : memref<8x4xf32, #tpu.memory_space<smem>>
    %1694 = vector.broadcast %1693 : f32 to vector<5x64xf32>
    %1695 = arith.mulf %1440, %1694 : vector<5x64xf32>
    %1696 = arith.addf %1692, %1695 : vector<5x64xf32>
    %c7_901 = arith.constant 7 : index
    %c2_902 = arith.constant 2 : index
    %1697 = memref.load %arg7[%c7_901, %c2_902] : memref<8x4xf32, #tpu.memory_space<smem>>
    %1698 = vector.broadcast %1697 : f32 to vector<5x64xf32>
    %1699 = arith.mulf %1442, %1698 : vector<5x64xf32>
    %1700 = arith.addf %1696, %1699 : vector<5x64xf32>
    %c7_903 = arith.constant 7 : index
    %c3_904 = arith.constant 3 : index
    %1701 = memref.load %arg7[%c7_903, %c3_904] : memref<8x4xf32, #tpu.memory_space<smem>>
    %1702 = vector.broadcast %1701 : f32 to vector<5x64xf32>
    %1703 = arith.mulf %1444, %1702 : vector<5x64xf32>
    %1704 = arith.addf %1700, %1703 : vector<5x64xf32>
    %c7_905 = arith.constant 7 : index
    %1705 = memref.load %arg8[%c7_905] : memref<8xf32, #tpu.memory_space<smem>>
    %1706 = vector.broadcast %1705 : f32 to vector<5x64xf32>
    %1707 = arith.addf %1704, %1706 : vector<5x64xf32>
    %cst_906 = arith.constant 5.000000e-01 : f32
    %1708 = vector.broadcast %cst_906 : f32 to vector<5x64xf32>
    %1709 = arith.mulf %1707, %1708 : vector<5x64xf32>
    %1710 = arith.mulf %1707, %1707 : vector<5x64xf32>
    %1711 = arith.mulf %1710, %1707 : vector<5x64xf32>
    %cst_907 = arith.constant 4.471500e-02 : f32
    %1712 = vector.broadcast %cst_907 : f32 to vector<5x64xf32>
    %1713 = arith.mulf %1711, %1712 : vector<5x64xf32>
    %1714 = arith.addf %1707, %1713 : vector<5x64xf32>
    %cst_908 = arith.constant 0.797884583 : f32
    %1715 = vector.broadcast %cst_908 : f32 to vector<5x64xf32>
    %1716 = arith.mulf %1714, %1715 : vector<5x64xf32>
    %1717 = math.tanh %1716 : vector<5x64xf32>
    %cst_909 = arith.constant 1.000000e+00 : f32
    %1718 = vector.broadcast %cst_909 : f32 to vector<5x64xf32>
    %1719 = arith.addf %1717, %1718 : vector<5x64xf32>
    %1720 = arith.mulf %1709, %1719 : vector<5x64xf32>
    %1721 = arith.addf %1720, %105 : vector<5x64xf32>
    %c7_910 = arith.constant 7 : index
    %c4_911 = arith.constant 4 : index
    %c0_912 = arith.constant 0 : index
    %c0_913 = arith.constant 0 : index
    %1722 = vector.load %arg9[%c7_910, %c4_911, %c0_912, %c0_913] : memref<8x5x5x64xf32, #tpu.memory_space<vmem>>, vector<1x1x5x64xf32>
    %1723 = vector.shape_cast %1722 : vector<1x1x5x64xf32> to vector<5x64xf32>
    %1724 = vector.shape_cast %1721 : vector<5x64xf32> to vector<1x1x5x64xf32>
    tpu.vector_store %arg9[%c7_910, %c4_911, %c0_912, %c0_913], %1724 {strides = array<i32>} : memref<8x5x5x64xf32, #tpu.memory_space<vmem>>, vector<1x1x5x64xf32>,
    return
  }
}

</mosaic_0001>

<llo_original>
// kernel: squeeze.14
$region0: #{squeeze.14}
  %s0 = inlined_call_operand.vmem [shape: f32[1,3,3,3], index: 0, kind: input, shape index: {}]
  %s1 = inlined_call_operand.vmem [shape: f32[27,1], index: 1, kind: output, shape index: {}]
  $region1: #{squeeze.14} parent=0
    #allocation0 [shape = 'u8[4096]{0}', space=vmem, size = 0x1000, scoped, tag = 'scoped mem for output reshape']
    #allocation1 [shape = 'u8[12288]{0}', space=vmem, size = 0x3000, scoped, tag = 'scoped mem for input reshape']
    %s3 = sshllo.u32 0, 4
    %s4 = smul.addr 4, 2
    %s5 = scalar_lea.vmem %s0, %s4
    %v6 = vld [vmem:[%s5] sm:%s3]
    %s7 = scalar_lea.vmem [#allocation1], 16
    %8 = vst [vmem:[%s7] sm:%s3] %v6
    %s9 = scalar_lea.vmem %s0, 4
    %v10 = vld [vmem:[%s9] sm:%s3]
    %s11 = scalar_lea.vmem [#allocation1], 8
    %12 = vst [vmem:[%s11] sm:%s3] %v10
    %v13 = vld [vmem:[%s0] sm:%s3]
    %14 = vst [vmem:[#allocation1] sm:%s3] %v13
    %v15 = vld [vmem:[#allocation1] sm:$0x1]
    %vm16 = vcmask 23552
    %17 = vst.msk [vmem:[#allocation0] sm:$0x1] %vm16, %v15
    %s18 = scalar_lea.vmem [#allocation1], 18
    %v19 = vld [vmem:[%s18] sm:$0x1]
    %20 = vrot.lane.b32.xlu0 %v19, 24
    %v21 = vpop.permute.xlu0 %20
    %vm22 = vcmask 220352
    %23 = vst.msk [vmem:[#allocation0] sm:$0x1] %vm22, %v21
    %s24 = scalar_lea.vmem [#allocation1], 17
    %v25 = vld [vmem:[%s24] sm:$0x1]
    %26 = vrot.lane.b32.xlu0 %v25, 21
    %v27 = vpop.permute.xlu0 %26
    %vm28 = vcmask 195752
    %29 = vst.msk [vmem:[#allocation0] sm:$0x1] %vm28, %v27
    %s30 = scalar_lea.vmem [#allocation1], 16
    %v31 = vld [vmem:[%s30] sm:$0x1]
    %32 = vrot.lane.b32.xlu0 %v31, 18
    %v33 = vpop.permute.xlu0 %32
    %vm34 = vcmask 171152
    %35 = vst.msk [vmem:[#allocation0] sm:$0x1] %vm34, %v33
    %s36 = scalar_lea.vmem [#allocation1], 10
    %v37 = vld [vmem:[%s36] sm:$0x1]
    %38 = vrot.lane.b32.xlu0 %v37, 15
    %v39 = vpop.permute.xlu0 %38
    %vm40 = vcmask 146552
    %41 = vst.msk [vmem:[#allocation0] sm:$0x1] %vm40, %v39
    %s42 = scalar_lea.vmem [#allocation1], 9
    %v43 = vld [vmem:[%s42] sm:$0x1]
    %44 = vrot.lane.b32.xlu0 %v43, 12
    %v45 = vpop.permute.xlu0 %44
    %vm46 = vcmask 121952
    %47 = vst.msk [vmem:[#allocation0] sm:$0x1] %vm46, %v45
    %s48 = scalar_lea.vmem [#allocation1], 8
    %v49 = vld [vmem:[%s48] sm:$0x1]
    %50 = vrot.lane.b32.xlu0 %v49, 9
    %v51 = vpop.permute.xlu0 %50
    %vm52 = vcmask 97352
    %53 = vst.msk [vmem:[#allocation0] sm:$0x1] %vm52, %v51
    %s54 = scalar_lea.vmem [#allocation1], 2
    %v55 = vld [vmem:[%s54] sm:$0x1]
    %56 = vrot.lane.b32.xlu0 %v55, 6
    %v57 = vpop.permute.xlu0 %56
    %vm58 = vcmask 72752
    %59 = vst.msk [vmem:[#allocation0] sm:$0x1] %vm58, %v57
    %s60 = scalar_lea.vmem [#allocation1], 1
    %v61 = vld [vmem:[%s60] sm:$0x1]
    %62 = vrot.lane.b32.xlu0 %v61, 3
    %v63 = vpop.permute.xlu0 %62
    %vm64 = vcmask 48152
    %65 = vst.msk [vmem:[#allocation0] sm:$0x1] %vm64, %v63
    %s67 = sshllo.u32 0, 1
    %v69 = vld [vmem:[#allocation0] sm:%s67]
    %s70 = sshllo.u32 0, 1
    %71 = vst [vmem:[%s1] sm:%s70] %v69

// kernel: model_forward.1
$region0: #{model_forward.1}
  #allocation0 [shape = 'u32[]', space=smem, size = 0x4, offset = 0x4, fixed_abs, tag = 'smem constant byte address 0x4 - core index']
  #allocation1 [shape = 'u32[144,128]{1,0:T(1,128)}', space=vmem, size = 0x12000, scoped, tag = 'internal scratch']
  %s0 = inlined_call_operand.vmem [shape: f32[7,5], index: 0, kind: input, shape index: {}]
  %s1 = inlined_call_operand.vmem [shape: f32[15,64], index: 1, kind: input, shape index: {}]
  %s2 = inlined_call_operand.vmem [shape: f32[1,64], index: 2, kind: input, shape index: {}]
  %s3 = inlined_call_operand.vmem [shape: f32[27,6], index: 3, kind: input, shape index: {}]
  %s4 = inlined_call_operand.vmem [shape: f32[5,27], index: 4, kind: input, shape index: {}]
  %s5 = inlined_call_operand.vmem [shape: f32[5,1], index: 5, kind: input, shape index: {}]
  %s6 = inlined_call_operand.vmem [shape: f32[4,5,5,64], index: 6, kind: input, shape index: {}]
  %s7 = inlined_call_operand.vmem [shape: f32[8,4], index: 7, kind: input, shape index: {}]
  %s8 = inlined_call_operand.vmem [shape: f32[8], index: 8, kind: input, shape index: {}]
  %s9 = inlined_call_operand.vmem [shape: f32[8,5,5,64], index: 9, kind: output, shape index: {0}]
  %s10 = inlined_call_operand.vmem [shape: f32[5,6], index: 10, kind: output, shape index: {1}]
  %11 = xla_tuple %s9, %s10
  %s12 = sld [smem:[#allocation0]]
  $region62: #{model_forward.1} parent=0
    _
  %s14 = ssub.s32 1, %s12
  %s15 = scalar_select 0, %s14, %s12
  $region1: #{model_forward.1} parent=0
    #allocation2 [shape = 'u8[4096]{0}', space=smem, size = 0x1000, scoped, tag = 'input window, operand 7, single buffered']
    #allocation3 [shape = 's32[1]{0}', space=sflag, size = 0x4, scoped, tag = 'scoped memory for model_forward.1']
    #allocation4 [shape = 'u8[512]{0}', space=smem, size = 0x200, scoped, tag = 'input window, operand 8, single buffered']
    #allocation5 [shape = 's32[1]{0}', space=sflag, size = 0x4, scoped, tag = 'scoped memory for model_forward.1']
    %16 = vsyncpa [#allocation3], 0
    %17 = vsyncpa [#allocation5], 0
    // Predicated region
    $region2: #{model_forward.1} parent=1 // pred_check
      _
    $region3: #{model_forward.1} parent=1 // pred_check_branch
      %19 = sbr.rel (0) target = $region5
    $region4: #{model_forward.1} parent=1 // pred_region
      _
    $region5: #{model_forward.1} parent=1 // pred_fallthru
      _
    // Predicated region
    $region6: #{model_forward.1} parent=1 // pred_check
      _
    $region7: #{model_forward.1} parent=1 // pred_check_branch
      %21 = sbr.rel (0) target = $region9
    $region8: #{model_forward.1} parent=1 // pred_region
      _
    $region9: #{model_forward.1} parent=1 // pred_fallthru
      _
    // Predicated region
    $region10: #{model_forward.1} parent=1 // pred_check
      _
    $region11: #{model_forward.1} parent=1 // pred_check_branch
      %23 = sbr.rel (0) target = $region13
    $region12: #{model_forward.1} parent=1 // pred_region
      _
    $region13: #{model_forward.1} parent=1 // pred_fallthru
      _
    // Predicated region
    $region14: #{model_forward.1} parent=1 // pred_check
      _
    $region15: #{model_forward.1} parent=1 // pred_check_branch
      %25 = sbr.rel (0) target = $region17
    $region16: #{model_forward.1} parent=1 // pred_region
      _
    $region17: #{model_forward.1} parent=1 // pred_fallthru
      _
    // Predicated region
    $region18: #{model_forward.1} parent=1 // pred_check
      _
    $region19: #{model_forward.1} parent=1 // pred_check_branch
      %27 = sbr.rel (0) target = $region21
    $region20: #{model_forward.1} parent=1 // pred_region
      _
    $region21: #{model_forward.1} parent=1 // pred_fallthru
      _
    // Predicated region
    $region22: #{model_forward.1} parent=1 // pred_check
      _
    $region23: #{model_forward.1} parent=1 // pred_check_branch
      %29 = sbr.rel (0) target = $region25
    $region24: #{model_forward.1} parent=1 // pred_region
      _
    $region25: #{model_forward.1} parent=1 // pred_fallthru
      _
    // Predicated region
    $region26: #{model_forward.1} parent=1 // pred_check
      _
    $region27: #{model_forward.1} parent=1 // pred_check_branch
      %31 = sbr.rel (0) target = $region29
    $region28: #{model_forward.1} parent=1 // pred_region
      _
    $region29: #{model_forward.1} parent=1 // pred_fallthru
      _
    // Predicated region
    $region30: #{model_forward.1} parent=1 // pred_check
      _
    $region31: #{model_forward.1} parent=1 // pred_check_branch
      %33 = sbr.rel (0) target = $region33
    $region32: #{model_forward.1} parent=1 // pred_region
      %s35 = ssub.s32 128, 128
      %36 = vsyncadd [#allocation3], %s35
      %s38 = sshll.u32 %s7, 4
      %s39 = int_to_ptr.vmem [resolvable:$true] %s38
      %41 = dma.vmem_to_smem %s39, 128, [#allocation2], [#allocation3]
    $region33: #{model_forward.1} parent=1 // pred_fallthru
      _
    // Predicated region
    $region34: #{model_forward.1} parent=1 // pred_check
      _
    $region35: #{model_forward.1} parent=1 // pred_check_branch
      %43 = sbr.rel (0) target = $region37
    $region36: #{model_forward.1} parent=1 // pred_region
      %s45 = ssub.s32 16, 16
      %46 = vsyncadd [#allocation5], %s45
      %s48 = sshll.u32 %s8, 4
      %s49 = int_to_ptr.vmem [resolvable:$true] %s48
      %51 = dma.vmem_to_smem %s49, 16, [#allocation4], [#allocation5]
    $region37: #{model_forward.1} parent=1 // pred_fallthru
      _
    // Predicated region
    $region38: #{model_forward.1} parent=1 // pred_check
      _
    $region39: #{model_forward.1} parent=1 // pred_check_branch
      %53 = sbr.rel (0) target = $region41
    $region40: #{model_forward.1} parent=1 // pred_region
      %54 = dma.done [#allocation3], 128
    $region41: #{model_forward.1} parent=1 // pred_fallthru
      _
    // Predicated region
    $region42: #{model_forward.1} parent=1 // pred_check
      _
    $region43: #{model_forward.1} parent=1 // pred_check_branch
      %56 = sbr.rel (0) target = $region45
    $region44: #{model_forward.1} parent=1 // pred_region
      %57 = dma.done [#allocation5], 16
    $region45: #{model_forward.1} parent=1 // pred_fallthru
      _
    %58 = sfence
    %v59 = vld [vmem:[%s2] sm:$0x1]
    %v61 = vlaneseq
    %v62 = vshrl.u32 %v61, 7
    %v63 = vsub.s32 0, %v62
    %v64 = vrot.slane %v59, %v63
    %v66 = vld [vmem:[%s0] sm:$0x1f]
    %v67 = vld [vmem:[%s1] sm:$0x1]
    %69 = vset.pattern.permute.xlu0 0
    %70 = vperm.xlu0 %69, %v66
    %v71 = vpop.permute.xlu0 %70
    %v73 = vlaneseq
    %v74 = vshrl.u32 %v73, 7
    %v75 = vsub.s32 0, %v74
    %v76 = vrot.slane %v67, %v75
    %v77 = vmul.f32 %v71, %v76
    %v78 = vadd.f32 %v64, %v77
    %v79 = vld [vmem:[%s0 + $0x1] sm:$0x1f]
    %v80 = vld [vmem:[%s1 + $0x1] sm:$0x1]
    %82 = vset.pattern.permute.xlu0 0
    %83 = vperm.xlu0 %82, %v79
    %v84 = vpop.permute.xlu0 %83
    %v86 = vlaneseq
    %v87 = vshrl.u32 %v86, 7
    %v88 = vsub.s32 0, %v87
    %v89 = vrot.slane %v80, %v88
    %v90 = vmul.f32 %v84, %v89
    %v91 = vadd.f32 %v78, %v90
    %v92 = vld [vmem:[%s0 + $0x2] sm:$0x1f]
    %v93 = vld [vmem:[%s1 + $0x2] sm:$0x1]
    %95 = vset.pattern.permute.xlu0 0
    %96 = vperm.xlu0 %95, %v92
    %v97 = vpop.permute.xlu0 %96
    %v99 = vlaneseq
    %v100 = vshrl.u32 %v99, 7
    %v101 = vsub.s32 0, %v100
    %v102 = vrot.slane %v93, %v101
    %v103 = vmul.f32 %v97, %v102
    %v104 = vadd.f32 %v91, %v103
    %v105 = vld [vmem:[%s1 + $0x3] sm:$0x1]
    %106 = vset.pattern.permute.xlu0 1
    %107 = vperm.xlu0 %106, %v66
    %v108 = vpop.permute.xlu0 %107
    %v110 = vlaneseq
    %v111 = vshrl.u32 %v110, 7
    %v112 = vsub.s32 0, %v111
    %v113 = vrot.slane %v105, %v112
    %v114 = vmul.f32 %v108, %v113
    %v115 = vadd.f32 %v104, %v114
    %v116 = vld [vmem:[%s1 + $0x4] sm:$0x1]
    %117 = vset.pattern.permute.xlu0 1
    %118 = vperm.xlu0 %117, %v79
    %v119 = vpop.permute.xlu0 %118
    %v121 = vlaneseq
    %v122 = vshrl.u32 %v121, 7
    %v123 = vsub.s32 0, %v122
    %v124 = vrot.slane %v116, %v123
    %v125 = vmul.f32 %v119, %v124
    %v126 = vadd.f32 %v115, %v125
    %v127 = vld [vmem:[%s1 + $0x5] sm:$0x1]
    %128 = vset.pattern.permute.xlu0 1
    %129 = vperm.xlu0 %128, %v92
    %v130 = vpop.permute.xlu0 %129
    %v132 = vlaneseq
    %v133 = vshrl.u32 %v132, 7
    %v134 = vsub.s32 0, %v133
    %v135 = vrot.slane %v127, %v134
    %v136 = vmul.f32 %v130, %v135
    %v137 = vadd.f32 %v126, %v136
    %v138 = vld [vmem:[%s1 + $0x6] sm:$0x1]
    %139 = vset.pattern.permute.xlu0 2
    %140 = vperm.xlu0 %139, %v66
    %v141 = vpop.permute.xlu0 %140
    %v143 = vlaneseq
    %v144 = vshrl.u32 %v143, 7
    %v145 = vsub.s32 0, %v144
    %v146 = vrot.slane %v138, %v145
    %v147 = vmul.f32 %v141, %v146
    %v148 = vadd.f32 %v137, %v147
    %v149 = vld [vmem:[%s1 + $0x7] sm:$0x1]
    %150 = vset.pattern.permute.xlu0 2
    %151 = vperm.xlu0 %150, %v79
    %v152 = vpop.permute.xlu0 %151
    %v154 = vlaneseq
    %v155 = vshrl.u32 %v154, 7
    %v156 = vsub.s32 0, %v155
    %v157 = vrot.slane %v149, %v156
    %v158 = vmul.f32 %v152, %v157
    %v159 = vadd.f32 %v148, %v158
    %v160 = vld [vmem:[%s1 + $0x8] sm:$0x1]
    %161 = vset.pattern.permute.xlu0 2
    %162 = vperm.xlu0 %161, %v92
    %v163 = vpop.permute.xlu0 %162
    %v165 = vlaneseq
    %v166 = vshrl.u32 %v165, 7
    %v167 = vsub.s32 0, %v166
    %v168 = vrot.slane %v160, %v167
    %v169 = vmul.f32 %v163, %v168
    %v170 = vadd.f32 %v159, %v169
    %v171 = vld [vmem:[%s1 + $0x9] sm:$0x1]
    %172 = vset.pattern.permute.xlu0 3
    %173 = vperm.xlu0 %172, %v66
    %v174 = vpop.permute.xlu0 %173
    %v176 = vlaneseq
    %v177 = vshrl.u32 %v176, 7
    %v178 = vsub.s32 0, %v177
    %v179 = vrot.slane %v171, %v178
    %v180 = vmul.f32 %v174, %v179
    %v181 = vadd.f32 %v170, %v180
    %v182 = vld [vmem:[%s1 + $0xa] sm:$0x1]
    %183 = vset.pattern.permute.xlu0 3
    %184 = vperm.xlu0 %183, %v79
    %v185 = vpop.permute.xlu0 %184
    %v187 = vlaneseq
    %v188 = vshrl.u32 %v187, 7
    %v189 = vsub.s32 0, %v188
    %v190 = vrot.slane %v182, %v189
    %v191 = vmul.f32 %v185, %v190
    %v192 = vadd.f32 %v181, %v191
    %v193 = vld [vmem:[%s1 + $0xb] sm:$0x1]
    %194 = vset.pattern.permute.xlu0 3
    %195 = vperm.xlu0 %194, %v92
    %v196 = vpop.permute.xlu0 %195
    %v198 = vlaneseq
    %v199 = vshrl.u32 %v198, 7
    %v200 = vsub.s32 0, %v199
    %v201 = vrot.slane %v193, %v200
    %v202 = vmul.f32 %v196, %v201
    %v203 = vadd.f32 %v192, %v202
    %v204 = vld [vmem:[%s1 + $0xc] sm:$0x1]
    %205 = vset.pattern.permute.xlu0 4
    %206 = vperm.xlu0 %205, %v66
    %v207 = vpop.permute.xlu0 %206
    %v209 = vlaneseq
    %v210 = vshrl.u32 %v209, 7
    %v211 = vsub.s32 0, %v210
    %v212 = vrot.slane %v204, %v211
    %v213 = vmul.f32 %v207, %v212
    %v214 = vadd.f32 %v203, %v213
    %v215 = vld [vmem:[%s1 + $0xd] sm:$0x1]
    %216 = vset.pattern.permute.xlu0 4
    %217 = vperm.xlu0 %216, %v79
    %v218 = vpop.permute.xlu0 %217
    %v220 = vlaneseq
    %v221 = vshrl.u32 %v220, 7
    %v222 = vsub.s32 0, %v221
    %v223 = vrot.slane %v215, %v222
    %v224 = vmul.f32 %v218, %v223
    %v225 = vadd.f32 %v214, %v224
    %v226 = vld [vmem:[%s1 + $0xe] sm:$0x1]
    %227 = vset.pattern.permute.xlu0 4
    %228 = vperm.xlu0 %227, %v92
    %v229 = vpop.permute.xlu0 %228
    %v231 = vlaneseq
    %v232 = vshrl.u32 %v231, 7
    %v233 = vsub.s32 0, %v232
    %v234 = vrot.slane %v226, %v233
    %v235 = vmul.f32 %v229, %v234
    %v236 = vadd.f32 %v225, %v235
    %v237 = vmul.f32 %v236, 0.5
    %v238 = vmul.f32 %v236, %v236
    %v239 = vmul.f32 %v238, %v236
    %v240 = vmul.f32 %v239, 0.044715
    %v241 = vadd.f32 %v236, %v240
    %v242 = vmul.f32 %v241, 0.7978846
    %v243 = vtanh.pop %v242
    %v244 = vadd.f32 %v243, 1.0
    %v245 = vmul.f32 %v237, %v244
    %v246 = vld [vmem:[%s5] sm:$0x1f]
    %248 = vset.pattern.permute.xlu0 0
    %249 = vperm.xlu0 %248, %v246
    %v250 = vpop.permute.xlu0 %249
    %v252 = vld [vmem:[%s4] sm:$0x1f]
    %v253 = vld [vmem:[%s3] sm:$0x1]
    %255 = vset.pattern.permute.xlu0 0
    %256 = vperm.xlu0 %255, %v252
    %v257 = vpop.permute.xlu0 %256
    %v259 = vlaneseq
    %v260 = vshrl.u32 %v259, 7
    %v261 = vsub.s32 0, %v260
    %v262 = vrot.slane %v253, %v261
    %v263 = vmul.f32 %v257, %v262
    %v264 = vadd.f32 %v250, %v263
    %v265 = vld [vmem:[%s3 + $0x1] sm:$0x1]
    %266 = vset.pattern.permute.xlu0 1
    %267 = vperm.xlu0 %266, %v252
    %v268 = vpop.permute.xlu0 %267
    %v270 = vlaneseq
    %v271 = vshrl.u32 %v270, 7
    %v272 = vsub.s32 0, %v271
    %v273 = vrot.slane %v265, %v272
    %v274 = vmul.f32 %v268, %v273
    %v275 = vadd.f32 %v264, %v274
    %v276 = vld [vmem:[%s3 + $0x2] sm:$0x1]
    %277 = vset.pattern.permute.xlu0 2
    %278 = vperm.xlu0 %277, %v252
    %v279 = vpop.permute.xlu0 %278
    %v281 = vlaneseq
    %v282 = vshrl.u32 %v281, 7
    %v283 = vsub.s32 0, %v282
    %v284 = vrot.slane %v276, %v283
    %v285 = vmul.f32 %v279, %v284
    %v286 = vadd.f32 %v275, %v285
    %v287 = vld [vmem:[%s3 + $0x3] sm:$0x1]
    %288 = vset.pattern.permute.xlu0 3
    %289 = vperm.xlu0 %288, %v252
    %v290 = vpop.permute.xlu0 %289
    %v292 = vlaneseq
    %v293 = vshrl.u32 %v292, 7
    %v294 = vsub.s32 0, %v293
    %v295 = vrot.slane %v287, %v294
    %v296 = vmul.f32 %v290, %v295
    %v297 = vadd.f32 %v286, %v296
    %v298 = vld [vmem:[%s3 + $0x4] sm:$0x1]
    %299 = vset.pattern.permute.xlu0 4
    %300 = vperm.xlu0 %299, %v252
    %v301 = vpop.permute.xlu0 %300
    %v303 = vlaneseq
    %v304 = vshrl.u32 %v303, 7
    %v305 = vsub.s32 0, %v304
    %v306 = vrot.slane %v298, %v305
    %v307 = vmul.f32 %v301, %v306
    %v308 = vadd.f32 %v297, %v307
    %v309 = vld [vmem:[%s3 + $0x5] sm:$0x1]
    %310 = vset.pattern.permute.xlu0 5
    %311 = vperm.xlu0 %310, %v252
    %v312 = vpop.permute.xlu0 %311
    %v314 = vlaneseq
    %v315 = vshrl.u32 %v314, 7
    %v316 = vsub.s32 0, %v315
    %v317 = vrot.slane %v309, %v316
    %v318 = vmul.f32 %v312, %v317
    %v319 = vadd.f32 %v308, %v318
    %v320 = vld [vmem:[%s3 + $0x6] sm:$0x1]
    %321 = vset.pattern.permute.xlu0 6
    %322 = vperm.xlu0 %321, %v252
    %v323 = vpop.permute.xlu0 %322
    %v325 = vlaneseq
    %v326 = vshrl.u32 %v325, 7
    %v327 = vsub.s32 0, %v326
    %v328 = vrot.slane %v320, %v327
    %v329 = vmul.f32 %v323, %v328
    %v330 = vadd.f32 %v319, %v329
    %v331 = vld [vmem:[%s3 + $0x7] sm:$0x1]
    %332 = vset.pattern.permute.xlu0 7
    %333 = vperm.xlu0 %332, %v252
    %v334 = vpop.permute.xlu0 %333
    %v336 = vlaneseq
    %v337 = vshrl.u32 %v336, 7
    %v338 = vsub.s32 0, %v337
    %v339 = vrot.slane %v331, %v338
    %v340 = vmul.f32 %v334, %v339
    %v341 = vadd.f32 %v330, %v340
    %v342 = vld [vmem:[%s3 + $0x8] sm:$0x1]
    %343 = vset.pattern.permute.xlu0 8
    %344 = vperm.xlu0 %343, %v252
    %v345 = vpop.permute.xlu0 %344
    %v347 = vlaneseq
    %v348 = vshrl.u32 %v347, 7
    %v349 = vsub.s32 0, %v348
    %v350 = vrot.slane %v342, %v349
    %v351 = vmul.f32 %v345, %v350
    %v352 = vadd.f32 %v341, %v351
    %v353 = vld [vmem:[%s3 + $0x9] sm:$0x1]
    %354 = vset.pattern.permute.xlu0 9
    %355 = vperm.xlu0 %354, %v252
    %v356 = vpop.permute.xlu0 %355
    %v358 = vlaneseq
    %v359 = vshrl.u32 %v358, 7
    %v360 = vsub.s32 0, %v359
    %v361 = vrot.slane %v353, %v360
    %v362 = vmul.f32 %v356, %v361
    %v363 = vadd.f32 %v352, %v362
    %v364 = vld [vmem:[%s3 + $0xa] sm:$0x1]
    %365 = vset.pattern.permute.xlu0 10
    %366 = vperm.xlu0 %365, %v252
    %v367 = vpop.permute.xlu0 %366
    %v369 = vlaneseq
    %v370 = vshrl.u32 %v369, 7
    %v371 = vsub.s32 0, %v370
    %v372 = vrot.slane %v364, %v371
    %v373 = vmul.f32 %v367, %v372
    %v374 = vadd.f32 %v363, %v373
    %v375 = vld [vmem:[%s3 + $0xb] sm:$0x1]
    %376 = vset.pattern.permute.xlu0 11
    %377 = vperm.xlu0 %376, %v252
    %v378 = vpop.permute.xlu0 %377
    %v380 = vlaneseq
    %v381 = vshrl.u32 %v380, 7
    %v382 = vsub.s32 0, %v381
    %v383 = vrot.slane %v375, %v382
    %v384 = vmul.f32 %v378, %v383
    %v385 = vadd.f32 %v374, %v384
    %v386 = vld [vmem:[%s3 + $0xc] sm:$0x1]
    %387 = vset.pattern.permute.xlu0 12
    %388 = vperm.xlu0 %387, %v252
    %v389 = vpop.permute.xlu0 %388
    %v391 = vlaneseq
    %v392 = vshrl.u32 %v391, 7
    %v393 = vsub.s32 0, %v392
    %v394 = vrot.slane %v386, %v393
    %v395 = vmul.f32 %v389, %v394
    %v396 = vadd.f32 %v385, %v395
    %v397 = vld [vmem:[%s3 + $0xd] sm:$0x1]
    %398 = vset.pattern.permute.xlu0 13
    %399 = vperm.xlu0 %398, %v252
    %v400 = vpop.permute.xlu0 %399
    %v402 = vlaneseq
    %v403 = vshrl.u32 %v402, 7
    %v404 = vsub.s32 0, %v403
    %v405 = vrot.slane %v397, %v404
    %v406 = vmul.f32 %v400, %v405
    %v407 = vadd.f32 %v396, %v406
    %v408 = vld [vmem:[%s3 + $0xe] sm:$0x1]
    %409 = vset.pattern.permute.xlu0 14
    %410 = vperm.xlu0 %409, %v252
    %v411 = vpop.permute.xlu0 %410
    %v413 = vlaneseq
    %v414 = vshrl.u32 %v413, 7
    %v415 = vsub.s32 0, %v414
    %v416 = vrot.slane %v408, %v415
    %v417 = vmul.f32 %v411, %v416
    %v418 = vadd.f32 %v407, %v417
    %v419 = vld [vmem:[%s3 + $0xf] sm:$0x1]
    %420 = vset.pattern.permute.xlu0 15
    %421 = vperm.xlu0 %420, %v252
    %v422 = vpop.permute.xlu0 %421
    %v424 = vlaneseq
    %v425 = vshrl.u32 %v424, 7
    %v426 = vsub.s32 0, %v425
    %v427 = vrot.slane %v419, %v426
    %v428 = vmul.f32 %v422, %v427
    %v429 = vadd.f32 %v418, %v428
    %v430 = vld [vmem:[%s3 + $0x10] sm:$0x1]
    %431 = vset.pattern.permute.xlu0 16
    %432 = vperm.xlu0 %431, %v252
    %v433 = vpop.permute.xlu0 %432
    %v435 = vlaneseq
    %v436 = vshrl.u32 %v435, 7
    %v437 = vsub.s32 0, %v436
    %v438 = vrot.slane %v430, %v437
    %v439 = vmul.f32 %v433, %v438
    %v440 = vadd.f32 %v429, %v439
    %v441 = vld [vmem:[%s3 + $0x11] sm:$0x1]
    %442 = vset.pattern.permute.xlu0 17
    %443 = vperm.xlu0 %442, %v252
    %v444 = vpop.permute.xlu0 %443
    %v446 = vlaneseq
    %v447 = vshrl.u32 %v446, 7
    %v448 = vsub.s32 0, %v447
    %v449 = vrot.slane %v441, %v448
    %v450 = vmul.f32 %v444, %v449
    %v451 = vadd.f32 %v440, %v450
    %v452 = vld [vmem:[%s3 + $0x12] sm:$0x1]
    %453 = vset.pattern.permute.xlu0 18
    %454 = vperm.xlu0 %453, %v252
    %v455 = vpop.permute.xlu0 %454
    %v457 = vlaneseq
    %v458 = vshrl.u32 %v457, 7
    %v459 = vsub.s32 0, %v458
    %v460 = vrot.slane %v452, %v459
    %v461 = vmul.f32 %v455, %v460
    %v462 = vadd.f32 %v451, %v461
    %v463 = vld [vmem:[%s3 + $0x13] sm:$0x1]
    %464 = vset.pattern.permute.xlu0 19
    %465 = vperm.xlu0 %464, %v252
    %v466 = vpop.permute.xlu0 %465
    %v468 = vlaneseq
    %v469 = vshrl.u32 %v468, 7
    %v470 = vsub.s32 0, %v469
    %v471 = vrot.slane %v463, %v470
    %v472 = vmul.f32 %v466, %v471
    %v473 = vadd.f32 %v462, %v472
    %v474 = vld [vmem:[%s3 + $0x14] sm:$0x1]
    %475 = vset.pattern.permute.xlu0 20
    %476 = vperm.xlu0 %475, %v252
    %v477 = vpop.permute.xlu0 %476
    %v479 = vlaneseq
    %v480 = vshrl.u32 %v479, 7
    %v481 = vsub.s32 0, %v480
    %v482 = vrot.slane %v474, %v481
    %v483 = vmul.f32 %v477, %v482
    %v484 = vadd.f32 %v473, %v483
    %v485 = vld [vmem:[%s3 + $0x15] sm:$0x1]
    %486 = vset.pattern.permute.xlu0 21
    %487 = vperm.xlu0 %486, %v252
    %v488 = vpop.permute.xlu0 %487
    %v490 = vlaneseq
    %v491 = vshrl.u32 %v490, 7
    %v492 = vsub.s32 0, %v491
    %v493 = vrot.slane %v485, %v492
    %v494 = vmul.f32 %v488, %v493
    %v495 = vadd.f32 %v484, %v494
    %v496 = vld [vmem:[%s3 + $0x16] sm:$0x1]
    %497 = vset.pattern.permute.xlu0 22
    %498 = vperm.xlu0 %497, %v252
    %v499 = vpop.permute.xlu0 %498
    %v501 = vlaneseq
    %v502 = vshrl.u32 %v501, 7
    %v503 = vsub.s32 0, %v502
    %v504 = vrot.slane %v496, %v503
    %v505 = vmul.f32 %v499, %v504
    %v506 = vadd.f32 %v495, %v505
    %v507 = vld [vmem:[%s3 + $0x17] sm:$0x1]
    %508 = vset.pattern.permute.xlu0 23
    %509 = vperm.xlu0 %508, %v252
    %v510 = vpop.permute.xlu0 %509
    %v512 = vlaneseq
    %v513 = vshrl.u32 %v512, 7
    %v514 = vsub.s32 0, %v513
    %v515 = vrot.slane %v507, %v514
    %v516 = vmul.f32 %v510, %v515
    %v517 = vadd.f32 %v506, %v516
    %v518 = vld [vmem:[%s3 + $0x18] sm:$0x1]
    %519 = vset.pattern.permute.xlu0 24
    %520 = vperm.xlu0 %519, %v252
    %v521 = vpop.permute.xlu0 %520
    %v523 = vlaneseq
    %v524 = vshrl.u32 %v523, 7
    %v525 = vsub.s32 0, %v524
    %v526 = vrot.slane %v518, %v525
    %v527 = vmul.f32 %v521, %v526
    %v528 = vadd.f32 %v517, %v527
    %v529 = vld [vmem:[%s3 + $0x19] sm:$0x1]
    %530 = vset.pattern.permute.xlu0 25
    %531 = vperm.xlu0 %530, %v252
    %v532 = vpop.permute.xlu0 %531
    %v534 = vlaneseq
    %v535 = vshrl.u32 %v534, 7
    %v536 = vsub.s32 0, %v535
    %v537 = vrot.slane %v529, %v536
    %v538 = vmul.f32 %v532, %v537
    %v539 = vadd.f32 %v528, %v538
    %v540 = vld [vmem:[%s3 + $0x1a] sm:$0x1]
    %541 = vset.pattern.permute.xlu0 26
    %542 = vperm.xlu0 %541, %v252
    %v543 = vpop.permute.xlu0 %542
    %v545 = vlaneseq
    %v546 = vshrl.u32 %v545, 7
    %v547 = vsub.s32 0, %v546
    %v548 = vrot.slane %v540, %v547
    %v549 = vmul.f32 %v543, %v548
    %v550 = vadd.f32 %v539, %v549
    %v551 = vmul.f32 %v550, 0.5
    %v552 = vmul.f32 %v550, %v550
    %v553 = vmul.f32 %v552, %v550
    %v554 = vmul.f32 %v553, 0.044715
    %v555 = vadd.f32 %v550, %v554
    %v556 = vmul.f32 %v555, 0.7978846
    %v557 = vtanh.pop %v556
    %v558 = vadd.f32 %v557, 1.0
    %v559 = vmul.f32 %v551, %v558
    %vm560 = vcmask 45056
    %561 = vst.msk [vmem:[%s10] sm:$0x1f] %vm560, %v559
    %v562 = vld [vmem:[%s6] sm:$0x1f]
    %s563 = scalar_lea.vmem %s6, 40
    %v564 = vld [vmem:[%s563] sm:$0x1f]
    %s565 = scalar_lea.vmem %s6, 80
    %v566 = vld [vmem:[%s565] sm:$0x1f]
    %s567 = scalar_lea.vmem %s6, 120
    %v568 = vld [vmem:[%s567] sm:$0x1f]
    %s569 = sld [smem:[#allocation2]]
    %v570 = vstv %s569
    %v571 = vmul.f32 %v562, %v570
    %s572 = sld [smem:[#allocation2 + $0x1]]
    %v573 = vstv %s572
    %v574 = vmul.f32 %v564, %v573
    %v575 = vadd.f32 %v571, %v574
    %s576 = sld [smem:[#allocation2 + $0x2]]
    %v577 = vstv %s576
    %v578 = vmul.f32 %v566, %v577
    %v579 = vadd.f32 %v575, %v578
    %s580 = sld [smem:[#allocation2 + $0x3]]
    %v581 = vstv %s580
    %v582 = vmul.f32 %v568, %v581
    %v583 = vadd.f32 %v579, %v582
    %s584 = sld [smem:[#allocation4]]
    %v585 = vstv %s584
    %v586 = vadd.f32 %v583, %v585
    %v587 = vmul.f32 %v586, 0.5
    %v588 = vmul.f32 %v586, %v586
    %v589 = vmul.f32 %v588, %v586
    %v590 = vmul.f32 %v589, 0.044715
    %v591 = vadd.f32 %v586, %v590
    %v592 = vmul.f32 %v591, 0.7978846
    %v593 = vtanh.pop %v592
    %v594 = vadd.f32 %v593, 1.0
    %v595 = vmul.f32 %v587, %v594
    %v596 = vadd.f32 %v595, %v245
    %vm597 = vcmask 520192
    %598 = vst.msk [vmem:[%s9] sm:$0x1f] %vm597, %v596
    %s599 = sld [smem:[#allocation2 + $0x80]]
    %v600 = vstv %s599
    %v601 = vmul.f32 %v562, %v600
    %s602 = sld [smem:[#allocation2 + $0x81]]
    %v603 = vstv %s602
    %v604 = vmul.f32 %v564, %v603
    %v605 = vadd.f32 %v601, %v604
    %s606 = sld [smem:[#allocation2 + $0x82]]
    %v607 = vstv %s606
    %v608 = vmul.f32 %v566, %v607
    %v609 = vadd.f32 %v605, %v608
    %s610 = sld [smem:[#allocation2 + $0x83]]
    %v611 = vstv %s610
    %v612 = vmul.f32 %v568, %v611
    %v613 = vadd.f32 %v609, %v612
    %s614 = sld [smem:[#allocation4 + $0x1]]
    %v615 = vstv %s614
    %v616 = vadd.f32 %v613, %v615
    %v617 = vmul.f32 %v616, 0.5
    %v618 = vmul.f32 %v616, %v616
    %v619 = vmul.f32 %v618, %v616
    %v620 = vmul.f32 %v619, 0.044715
    %v621 = vadd.f32 %v616, %v620
    %v622 = vmul.f32 %v621, 0.7978846
    %v623 = vtanh.pop %v622
    %v624 = vadd.f32 %v623, 1.0
    %v625 = vmul.f32 %v617, %v624
    %v626 = vadd.f32 %v625, %v245
    %s627 = scalar_lea.vmem %s9, 40
    %628 = vst.msk [vmem:[%s627] sm:$0x1f] %vm597, %v626
    %s629 = sld [smem:[#allocation2 + $0x100]]
    %v630 = vstv %s629
    %v631 = vmul.f32 %v562, %v630
    %s632 = sld [smem:[#allocation2 + $0x101]]
    %v633 = vstv %s632
    %v634 = vmul.f32 %v564, %v633
    %v635 = vadd.f32 %v631, %v634
    %s636 = sld [smem:[#allocation2 + $0x102]]
    %v637 = vstv %s636
    %v638 = vmul.f32 %v566, %v637
    %v639 = vadd.f32 %v635, %v638
    %s640 = sld [smem:[#allocation2 + $0x103]]
    %v641 = vstv %s640
    %v642 = vmul.f32 %v568, %v641
    %v643 = vadd.f32 %v639, %v642
    %s644 = sld [smem:[#allocation4 + $0x2]]
    %v645 = vstv %s644
    %v646 = vadd.f32 %v643, %v645
    %v647 = vmul.f32 %v646, 0.5
    %v648 = vmul.f32 %v646, %v646
    %v649 = vmul.f32 %v648, %v646
    %v650 = vmul.f32 %v649, 0.044715
    %v651 = vadd.f32 %v646, %v650
    %v652 = vmul.f32 %v651, 0.7978846
    %v653 = vtanh.pop %v652
    %v654 = vadd.f32 %v653, 1.0
    %v655 = vmul.f32 %v647, %v654
    %v656 = vadd.f32 %v655, %v245
    %s657 = scalar_lea.vmem %s9, 80
    %658 = vst.msk [vmem:[%s657] sm:$0x1f] %vm597, %v656
    %s659 = sld [smem:[#allocation2 + $0x180]]
    %v660 = vstv %s659
    %v661 = vmul.f32 %v562, %v660
    %s662 = sld [smem:[#allocation2 + $0x181]]
    %v663 = vstv %s662
    %v664 = vmul.f32 %v564, %v663
    %v665 = vadd.f32 %v661, %v664
    %s666 = sld [smem:[#allocation2 + $0x182]]
    %v667 = vstv %s666
    %v668 = vmul.f32 %v566, %v667
    %v669 = vadd.f32 %v665, %v668
    %s670 = sld [smem:[#allocation2 + $0x183]]
    %v671 = vstv %s670
    %v672 = vmul.f32 %v568, %v671
    %v673 = vadd.f32 %v669, %v672
    %s674 = sld [smem:[#allocation4 + $0x3]]
    %v675 = vstv %s674
    %v676 = vadd.f32 %v673, %v675
    %v677 = vmul.f32 %v676, 0.5
    %v678 = vmul.f32 %v676, %v676
    %v679 = vmul.f32 %v678, %v676
    %v680 = vmul.f32 %v679, 0.044715
    %v681 = vadd.f32 %v676, %v680
    %v682 = vmul.f32 %v681, 0.7978846
    %v683 = vtanh.pop %v682
    %v684 = vadd.f32 %v683, 1.0
    %v685 = vmul.f32 %v677, %v684
    %v686 = vadd.f32 %v685, %v245
    %s687 = scalar_lea.vmem %s9, 120
    %688 = vst.msk [vmem:[%s687] sm:$0x1f] %vm597, %v686
    %s689 = sld [smem:[#allocation2 + $0x200]]
    %v690 = vstv %s689
    %v691 = vmul.f32 %v562, %v690
    %s692 = sld [smem:[#allocation2 + $0x201]]
    %v693 = vstv %s692
    %v694 = vmul.f32 %v564, %v693
    %v695 = vadd.f32 %v691, %v694
    %s696 = sld [smem:[#allocation2 + $0x202]]
    %v697 = vstv %s696
    %v698 = vmul.f32 %v566, %v697
    %v699 = vadd.f32 %v695, %v698
    %s700 = sld [smem:[#allocation2 + $0x203]]
    %v701 = vstv %s700
    %v702 = vmul.f32 %v568, %v701
    %v703 = vadd.f32 %v699, %v702
    %s704 = sld [smem:[#allocation4 + $0x4]]
    %v705 = vstv %s704
    %v706 = vadd.f32 %v703, %v705
    %v707 = vmul.f32 %v706, 0.5
    %v708 = vmul.f32 %v706, %v706
    %v709 = vmul.f32 %v708, %v706
    %v710 = vmul.f32 %v709, 0.044715
    %v711 = vadd.f32 %v706, %v710
    %v712 = vmul.f32 %v711, 0.7978846
    %v713 = vtanh.pop %v712
    %v714 = vadd.f32 %v713, 1.0
    %v715 = vmul.f32 %v707, %v714
    %v716 = vadd.f32 %v715, %v245
    %s717 = scalar_lea.vmem %s9, 160
    %718 = vst.msk [vmem:[%s717] sm:$0x1f] %vm597, %v716
    %s719 = sld [smem:[#allocation2 + $0x280]]
    %v720 = vstv %s719
    %v721 = vmul.f32 %v562, %v720
    %s722 = sld [smem:[#allocation2 + $0x281]]
    %v723 = vstv %s722
    %v724 = vmul.f32 %v564, %v723
    %v725 = vadd.f32 %v721, %v724
    %s726 = sld [smem:[#allocation2 + $0x282]]
    %v727 = vstv %s726
    %v728 = vmul.f32 %v566, %v727
    %v729 = vadd.f32 %v725, %v728
    %s730 = sld [smem:[#allocation2 + $0x283]]
    %v731 = vstv %s730
    %v732 = vmul.f32 %v568, %v731
    %v733 = vadd.f32 %v729, %v732
    %s734 = sld [smem:[#allocation4 + $0x5]]
    %v735 = vstv %s734
    %v736 = vadd.f32 %v733, %v735
    %v737 = vmul.f32 %v736, 0.5
    %v738 = vmul.f32 %v736, %v736
    %v739 = vmul.f32 %v738, %v736
    %v740 = vmul.f32 %v739, 0.044715
    %v741 = vadd.f32 %v736, %v740
    %v742 = vmul.f32 %v741, 0.7978846
    %v743 = vtanh.pop %v742
    %v744 = vadd.f32 %v743, 1.0
    %v745 = vmul.f32 %v737, %v744
    %v746 = vadd.f32 %v745, %v245
    %s747 = scalar_lea.vmem %s9, 200
    %748 = vst.msk [vmem:[%s747] sm:$0x1f] %vm597, %v746
    %s749 = sld [smem:[#allocation2 + $0x300]]
    %v750 = vstv %s749
    %v751 = vmul.f32 %v562, %v750
    %s752 = sld [smem:[#allocation2 + $0x301]]
    %v753 = vstv %s752
    %v754 = vmul.f32 %v564, %v753
    %v755 = vadd.f32 %v751, %v754
    %s756 = sld [smem:[#allocation2 + $0x302]]
    %v757 = vstv %s756
    %v758 = vmul.f32 %v566, %v757
    %v759 = vadd.f32 %v755, %v758
    %s760 = sld [smem:[#allocation2 + $0x303]]
    %v761 = vstv %s760
    %v762 = vmul.f32 %v568, %v761
    %v763 = vadd.f32 %v759, %v762
    %s764 = sld [smem:[#allocation4 + $0x6]]
    %v765 = vstv %s764
    %v766 = vadd.f32 %v763, %v765
    %v767 = vmul.f32 %v766, 0.5
    %v768 = vmul.f32 %v766, %v766
    %v769 = vmul.f32 %v768, %v766
    %v770 = vmul.f32 %v769, 0.044715
    %v771 = vadd.f32 %v766, %v770
    %v772 = vmul.f32 %v771, 0.7978846
    %v773 = vtanh.pop %v772
    %v774 = vadd.f32 %v773, 1.0
    %v775 = vmul.f32 %v767, %v774
    %v776 = vadd.f32 %v775, %v245
    %s777 = scalar_lea.vmem %s9, 240
    %778 = vst.msk [vmem:[%s777] sm:$0x1f] %vm597, %v776
    %s779 = sld [smem:[#allocation2 + $0x380]]
    %v780 = vstv %s779
    %v781 = vmul.f32 %v562, %v780
    %s782 = sld [smem:[#allocation2 + $0x381]]
    %v783 = vstv %s782
    %v784 = vmul.f32 %v564, %v783
    %v785 = vadd.f32 %v781, %v784
    %s786 = sld [smem:[#allocation2 + $0x382]]
    %v787 = vstv %s786
    %v788 = vmul.f32 %v566, %v787
    %v789 = vadd.f32 %v785, %v788
    %s790 = sld [smem:[#allocation2 + $0x383]]
    %v791 = vstv %s790
    %v792 = vmul.f32 %v568, %v791
    %v793 = vadd.f32 %v789, %v792
    %s794 = sld [smem:[#allocation4 + $0x7]]
    %v795 = vstv %s794
    %v796 = vadd.f32 %v793, %v795
    %v797 = vmul.f32 %v796, 0.5
    %v798 = vmul.f32 %v796, %v796
    %v799 = vmul.f32 %v798, %v796
    %v800 = vmul.f32 %v799, 0.044715
    %v801 = vadd.f32 %v796, %v800
    %v802 = vmul.f32 %v801, 0.7978846
    %v803 = vtanh.pop %v802
    %v804 = vadd.f32 %v803, 1.0
    %v805 = vmul.f32 %v797, %v804
    %v806 = vadd.f32 %v805, %v245
    %s807 = scalar_lea.vmem %s9, 280
    %808 = vst.msk [vmem:[%s807] sm:$0x1f] %vm597, %v806
    %s809 = scalar_lea.vmem %s6, 8
    %v810 = vld [vmem:[%s809] sm:$0x1f]
    %s811 = scalar_lea.vmem %s6, 48
    %v812 = vld [vmem:[%s811] sm:$0x1f]
    %s813 = scalar_lea.vmem %s6, 88
    %v814 = vld [vmem:[%s813] sm:$0x1f]
    %s815 = scalar_lea.vmem %s6, 128
    %v816 = vld [vmem:[%s815] sm:$0x1f]
    %s817 = sld [smem:[#allocation2]]
    %v818 = vstv %s817
    %v819 = vmul.f32 %v810, %v818
    %s820 = sld [smem:[#allocation2 + $0x1]]
    %v821 = vstv %s820
    %v822 = vmul.f32 %v812, %v821
    %v823 = vadd.f32 %v819, %v822
    %s824 = sld [smem:[#allocation2 + $0x2]]
    %v825 = vstv %s824
    %v826 = vmul.f32 %v814, %v825
    %v827 = vadd.f32 %v823, %v826
    %s828 = sld [smem:[#allocation2 + $0x3]]
    %v829 = vstv %s828
    %v830 = vmul.f32 %v816, %v829
    %v831 = vadd.f32 %v827, %v830
    %s832 = sld [smem:[#allocation4]]
    %v833 = vstv %s832
    %v834 = vadd.f32 %v831, %v833
    %v835 = vmul.f32 %v834, 0.5
    %v836 = vmul.f32 %v834, %v834
    %v837 = vmul.f32 %v836, %v834
    %v838 = vmul.f32 %v837, 0.044715
    %v839 = vadd.f32 %v834, %v838
    %v840 = vmul.f32 %v839, 0.7978846
    %v841 = vtanh.pop %v840
    %v842 = vadd.f32 %v841, 1.0
    %v843 = vmul.f32 %v835, %v842
    %v844 = vadd.f32 %v843, %v245
    %s845 = scalar_lea.vmem %s9, 8
    %846 = vst.msk [vmem:[%s845] sm:$0x1f] %vm597, %v844
    %s847 = sld [smem:[#allocation2 + $0x80]]
    %v848 = vstv %s847
    %v849 = vmul.f32 %v810, %v848
    %s850 = sld [smem:[#allocation2 + $0x81]]
    %v851 = vstv %s850
    %v852 = vmul.f32 %v812, %v851
    %v853 = vadd.f32 %v849, %v852
    %s854 = sld [smem:[#allocation2 + $0x82]]
    %v855 = vstv %s854
    %v856 = vmul.f32 %v814, %v855
    %v857 = vadd.f32 %v853, %v856
    %s858 = sld [smem:[#allocation2 + $0x83]]
    %v859 = vstv %s858
    %v860 = vmul.f32 %v816, %v859
    %v861 = vadd.f32 %v857, %v860
    %s862 = sld [smem:[#allocation4 + $0x1]]
    %v863 = vstv %s862
    %v864 = vadd.f32 %v861, %v863
    %v865 = vmul.f32 %v864, 0.5
    %v866 = vmul.f32 %v864, %v864
    %v867 = vmul.f32 %v866, %v864
    %v868 = vmul.f32 %v867, 0.044715
    %v869 = vadd.f32 %v864, %v868
    %v870 = vmul.f32 %v869, 0.7978846
    %v871 = vtanh.pop %v870
    %v872 = vadd.f32 %v871, 1.0
    %v873 = vmul.f32 %v865, %v872
    %v874 = vadd.f32 %v873, %v245
    %s875 = scalar_lea.vmem %s9, 48
    %876 = vst.msk [vmem:[%s875] sm:$0x1f] %vm597, %v874
    %s877 = sld [smem:[#allocation2 + $0x100]]
    %v878 = vstv %s877
    %v879 = vmul.f32 %v810, %v878
    %s880 = sld [smem:[#allocation2 + $0x101]]
    %v881 = vstv %s880
    %v882 = vmul.f32 %v812, %v881
    %v883 = vadd.f32 %v879, %v882
    %s884 = sld [smem:[#allocation2 + $0x102]]
    %v885 = vstv %s884
    %v886 = vmul.f32 %v814, %v885
    %v887 = vadd.f32 %v883, %v886
    %s888 = sld [smem:[#allocation2 + $0x103]]
    %v889 = vstv %s888
    %v890 = vmul.f32 %v816, %v889
    %v891 = vadd.f32 %v887, %v890
    %s892 = sld [smem:[#allocation4 + $0x2]]
    %v893 = vstv %s892
    %v894 = vadd.f32 %v891, %v893
    %v895 = vmul.f32 %v894, 0.5
    %v896 = vmul.f32 %v894, %v894
    %v897 = vmul.f32 %v896, %v894
    %v898 = vmul.f32 %v897, 0.044715
    %v899 = vadd.f32 %v894, %v898
    %v900 = vmul.f32 %v899, 0.7978846
    %v901 = vtanh.pop %v900
    %v902 = vadd.f32 %v901, 1.0
    %v903 = vmul.f32 %v895, %v902
    %v904 = vadd.f32 %v903, %v245
    %s905 = scalar_lea.vmem %s9, 88
    %906 = vst.msk [vmem:[%s905] sm:$0x1f] %vm597, %v904
    %s907 = sld [smem:[#allocation2 + $0x180]]
    %v908 = vstv %s907
    %v909 = vmul.f32 %v810, %v908
    %s910 = sld [smem:[#allocation2 + $0x181]]
    %v911 = vstv %s910
    %v912 = vmul.f32 %v812, %v911
    %v913 = vadd.f32 %v909, %v912
    %s914 = sld [smem:[#allocation2 + $0x182]]
    %v915 = vstv %s914
    %v916 = vmul.f32 %v814, %v915
    %v917 = vadd.f32 %v913, %v916
    %s918 = sld [smem:[#allocation2 + $0x183]]
    %v919 = vstv %s918
    %v920 = vmul.f32 %v816, %v919
    %v921 = vadd.f32 %v917, %v920
    %s922 = sld [smem:[#allocation4 + $0x3]]
    %v923 = vstv %s922
    %v924 = vadd.f32 %v921, %v923
    %v925 = vmul.f32 %v924, 0.5
    %v926 = vmul.f32 %v924, %v924
    %v927 = vmul.f32 %v926, %v924
    %v928 = vmul.f32 %v927, 0.044715
    %v929 = vadd.f32 %v924, %v928
    %v930 = vmul.f32 %v929, 0.7978846
    %v931 = vtanh.pop %v930
    %v932 = vadd.f32 %v931, 1.0
    %v933 = vmul.f32 %v925, %v932
    %v934 = vadd.f32 %v933, %v245
    %s935 = scalar_lea.vmem %s9, 128
    %936 = vst.msk [vmem:[%s935] sm:$0x1f] %vm597, %v934
    %s937 = sld [smem:[#allocation2 + $0x200]]
    %v938 = vstv %s937
    %v939 = vmul.f32 %v810, %v938
    %s940 = sld [smem:[#allocation2 + $0x201]]
    %v941 = vstv %s940
    %v942 = vmul.f32 %v812, %v941
    %v943 = vadd.f32 %v939, %v942
    %s944 = sld [smem:[#allocation2 + $0x202]]
    %v945 = vstv %s944
    %v946 = vmul.f32 %v814, %v945
    %v947 = vadd.f32 %v943, %v946
    %s948 = sld [smem:[#allocation2 + $0x203]]
    %v949 = vstv %s948
    %v950 = vmul.f32 %v816, %v949
    %v951 = vadd.f32 %v947, %v950
    %s952 = sld [smem:[#allocation4 + $0x4]]
    %v953 = vstv %s952
    %v954 = vadd.f32 %v951, %v953
    %v955 = vmul.f32 %v954, 0.5
    %v956 = vmul.f32 %v954, %v954
    %v957 = vmul.f32 %v956, %v954
    %v958 = vmul.f32 %v957, 0.044715
    %v959 = vadd.f32 %v954, %v958
    %v960 = vmul.f32 %v959, 0.7978846
    %v961 = vtanh.pop %v960
    %v962 = vadd.f32 %v961, 1.0
    %v963 = vmul.f32 %v955, %v962
    %v964 = vadd.f32 %v963, %v245
    %s965 = scalar_lea.vmem %s9, 168
    %966 = vst.msk [vmem:[%s965] sm:$0x1f] %vm597, %v964
    %s967 = sld [smem:[#allocation2 + $0x280]]
    %v968 = vstv %s967
    %v969 = vmul.f32 %v810, %v968
    %s970 = sld [smem:[#allocation2 + $0x281]]
    %v971 = vstv %s970
    %v972 = vmul.f32 %v812, %v971
    %v973 = vadd.f32 %v969, %v972
    %s974 = sld [smem:[#allocation2 + $0x282]]
    %v975 = vstv %s974
    %v976 = vmul.f32 %v814, %v975
    %v977 = vadd.f32 %v973, %v976
    %s978 = sld [smem:[#allocation2 + $0x283]]
    %v979 = vstv %s978
    %v980 = vmul.f32 %v816, %v979
    %v981 = vadd.f32 %v977, %v980
    %s982 = sld [smem:[#allocation4 + $0x5]]
    %v983 = vstv %s982
    %v984 = vadd.f32 %v981, %v983
    %v985 = vmul.f32 %v984, 0.5
    %v986 = vmul.f32 %v984, %v984
    %v987 = vmul.f32 %v986, %v984
    %v988 = vmul.f32 %v987, 0.044715
    %v989 = vadd.f32 %v984, %v988
    %v990 = vmul.f32 %v989, 0.7978846
    %v991 = vtanh.pop %v990
    %v992 = vadd.f32 %v991, 1.0
    %v993 = vmul.f32 %v985, %v992
    %v994 = vadd.f32 %v993, %v245
    %s995 = scalar_lea.vmem %s9, 208
    %996 = vst.msk [vmem:[%s995] sm:$0x1f] %vm597, %v994
    %s997 = sld [smem:[#allocation2 + $0x300]]
    %v998 = vstv %s997
    %v999 = vmul.f32 %v810, %v998
    %s1000 = sld [smem:[#allocation2 + $0x301]]
    %v1001 = vstv %s1000
    %v1002 = vmul.f32 %v812, %v1001
    %v1003 = vadd.f32 %v999, %v1002
    %s1004 = sld [smem:[#allocation2 + $0x302]]
    %v1005 = vstv %s1004
    %v1006 = vmul.f32 %v814, %v1005
    %v1007 = vadd.f32 %v1003, %v1006
    %s1008 = sld [smem:[#allocation2 + $0x303]]
    %v1009 = vstv %s1008
    %v1010 = vmul.f32 %v816, %v1009
    %v1011 = vadd.f32 %v1007, %v1010
    %s1012 = sld [smem:[#allocation4 + $0x6]]
    %v1013 = vstv %s1012
    %v1014 = vadd.f32 %v1011, %v1013
    %v1015 = vmul.f32 %v1014, 0.5
    %v1016 = vmul.f32 %v1014, %v1014
    %v1017 = vmul.f32 %v1016, %v1014
    %v1018 = vmul.f32 %v1017, 0.044715
    %v1019 = vadd.f32 %v1014, %v1018
    %v1020 = vmul.f32 %v1019, 0.7978846
    %v1021 = vtanh.pop %v1020
    %v1022 = vadd.f32 %v1021, 1.0
    %v1023 = vmul.f32 %v1015, %v1022
    %v1024 = vadd.f32 %v1023, %v245
    %s1025 = scalar_lea.vmem %s9, 248
    %1026 = vst.msk [vmem:[%s1025] sm:$0x1f] %vm597, %v1024
    %s1027 = sld [smem:[#allocation2 + $0x380]]
    %v1028 = vstv %s1027
    %v1029 = vmul.f32 %v810, %v1028
    %s1030 = sld [smem:[#allocation2 + $0x381]]
    %v1031 = vstv %s1030
    %v1032 = vmul.f32 %v812, %v1031
    %v1033 = vadd.f32 %v1029, %v1032
    %s1034 = sld [smem:[#allocation2 + $0x382]]
    %v1035 = vstv %s1034
    %v1036 = vmul.f32 %v814, %v1035
    %v1037 = vadd.f32 %v1033, %v1036
    %s1038 = sld [smem:[#allocation2 + $0x383]]
    %v1039 = vstv %s1038
    %v1040 = vmul.f32 %v816, %v1039
    %v1041 = vadd.f32 %v1037, %v1040
    %s1042 = sld [smem:[#allocation4 + $0x7]]
    %v1043 = vstv %s1042
    %v1044 = vadd.f32 %v1041, %v1043
    %v1045 = vmul.f32 %v1044, 0.5
    %v1046 = vmul.f32 %v1044, %v1044
    %v1047 = vmul.f32 %v1046, %v1044
    %v1048 = vmul.f32 %v1047, 0.044715
    %v1049 = vadd.f32 %v1044, %v1048
    %v1050 = vmul.f32 %v1049, 0.7978846
    %v1051 = vtanh.pop %v1050
    %v1052 = vadd.f32 %v1051, 1.0
    %v1053 = vmul.f32 %v1045, %v1052
    %v1054 = vadd.f32 %v1053, %v245
    %s1055 = scalar_lea.vmem %s9, 288
    %1056 = vst.msk [vmem:[%s1055] sm:$0x1f] %vm597, %v1054
    %s1057 = scalar_lea.vmem %s6, 16
    %v1058 = vld [vmem:[%s1057] sm:$0x1f]
    %s1059 = scalar_lea.vmem %s6, 56
    %v1060 = vld [vmem:[%s1059] sm:$0x1f]
    %s1061 = scalar_lea.vmem %s6, 96
    %v1062 = vld [vmem:[%s1061] sm:$0x1f]
    %s1063 = scalar_lea.vmem %s6, 136
    %v1064 = vld [vmem:[%s1063] sm:$0x1f]
    %s1065 = sld [smem:[#allocation2]]
    %v1066 = vstv %s1065
    %v1067 = vmul.f32 %v1058, %v1066
    %s1068 = sld [smem:[#allocation2 + $0x1]]
    %v1069 = vstv %s1068
    %v1070 = vmul.f32 %v1060, %v1069
    %v1071 = vadd.f32 %v1067, %v1070
    %s1072 = sld [smem:[#allocation2 + $0x2]]
    %v1073 = vstv %s1072
    %v1074 = vmul.f32 %v1062, %v1073
    %v1075 = vadd.f32 %v1071, %v1074
    %s1076 = sld [smem:[#allocation2 + $0x3]]
    %v1077 = vstv %s1076
    %v1078 = vmul.f32 %v1064, %v1077
    %v1079 = vadd.f32 %v1075, %v1078
    %s1080 = sld [smem:[#allocation4]]
    %v1081 = vstv %s1080
    %v1082 = vadd.f32 %v1079, %v1081
    %v1083 = vmul.f32 %v1082, 0.5
    %v1084 = vmul.f32 %v1082, %v1082
    %v1085 = vmul.f32 %v1084, %v1082
    %v1086 = vmul.f32 %v1085, 0.044715
    %v1087 = vadd.f32 %v1082, %v1086
    %v1088 = vmul.f32 %v1087, 0.7978846
    %v1089 = vtanh.pop %v1088
    %v1090 = vadd.f32 %v1089, 1.0
    %v1091 = vmul.f32 %v1083, %v1090
    %v1092 = vadd.f32 %v1091, %v245
    %s1093 = scalar_lea.vmem %s9, 16
    %1094 = vst.msk [vmem:[%s1093] sm:$0x1f] %vm597, %v1092
    %s1095 = sld [smem:[#allocation2 + $0x80]]
    %v1096 = vstv %s1095
    %v1097 = vmul.f32 %v1058, %v1096
    %s1098 = sld [smem:[#allocation2 + $0x81]]
    %v1099 = vstv %s1098
    %v1100 = vmul.f32 %v1060, %v1099
    %v1101 = vadd.f32 %v1097, %v1100
    %s1102 = sld [smem:[#allocation2 + $0x82]]
    %v1103 = vstv %s1102
    %v1104 = vmul.f32 %v1062, %v1103
    %v1105 = vadd.f32 %v1101, %v1104
    %s1106 = sld [smem:[#allocation2 + $0x83]]
    %v1107 = vstv %s1106
    %v1108 = vmul.f32 %v1064, %v1107
    %v1109 = vadd.f32 %v1105, %v1108
    %s1110 = sld [smem:[#allocation4 + $0x1]]
    %v1111 = vstv %s1110
    %v1112 = vadd.f32 %v1109, %v1111
    %v1113 = vmul.f32 %v1112, 0.5
    %v1114 = vmul.f32 %v1112, %v1112
    %v1115 = vmul.f32 %v1114, %v1112
    %v1116 = vmul.f32 %v1115, 0.044715
    %v1117 = vadd.f32 %v1112, %v1116
    %v1118 = vmul.f32 %v1117, 0.7978846
    %v1119 = vtanh.pop %v1118
    %v1120 = vadd.f32 %v1119, 1.0
    %v1121 = vmul.f32 %v1113, %v1120
    %v1122 = vadd.f32 %v1121, %v245
    %s1123 = scalar_lea.vmem %s9, 56
    %1124 = vst.msk [vmem:[%s1123] sm:$0x1f] %vm597, %v1122
    %s1125 = sld [smem:[#allocation2 + $0x100]]
    %v1126 = vstv %s1125
    %v1127 = vmul.f32 %v1058, %v1126
    %s1128 = sld [smem:[#allocation2 + $0x101]]
    %v1129 = vstv %s1128
    %v1130 = vmul.f32 %v1060, %v1129
    %v1131 = vadd.f32 %v1127, %v1130
    %s1132 = sld [smem:[#allocation2 + $0x102]]
    %v1133 = vstv %s1132
    %v1134 = vmul.f32 %v1062, %v1133
    %v1135 = vadd.f32 %v1131, %v1134
    %s1136 = sld [smem:[#allocation2 + $0x103]]
    %v1137 = vstv %s1136
    %v1138 = vmul.f32 %v1064, %v1137
    %v1139 = vadd.f32 %v1135, %v1138
    %s1140 = sld [smem:[#allocation4 + $0x2]]
    %v1141 = vstv %s1140
    %v1142 = vadd.f32 %v1139, %v1141
    %v1143 = vmul.f32 %v1142, 0.5
    %v1144 = vmul.f32 %v1142, %v1142
    %v1145 = vmul.f32 %v1144, %v1142
    %v1146 = vmul.f32 %v1145, 0.044715
    %v1147 = vadd.f32 %v1142, %v1146
    %v1148 = vmul.f32 %v1147, 0.7978846
    %v1149 = vtanh.pop %v1148
    %v1150 = vadd.f32 %v1149, 1.0
    %v1151 = vmul.f32 %v1143, %v1150
    %v1152 = vadd.f32 %v1151, %v245
    %s1153 = scalar_lea.vmem %s9, 96
    %1154 = vst.msk [vmem:[%s1153] sm:$0x1f] %vm597, %v1152
    %s1155 = sld [smem:[#allocation2 + $0x180]]
    %v1156 = vstv %s1155
    %v1157 = vmul.f32 %v1058, %v1156
    %s1158 = sld [smem:[#allocation2 + $0x181]]
    %v1159 = vstv %s1158
    %v1160 = vmul.f32 %v1060, %v1159
    %v1161 = vadd.f32 %v1157, %v1160
    %s1162 = sld [smem:[#allocation2 + $0x182]]
    %v1163 = vstv %s1162
    %v1164 = vmul.f32 %v1062, %v1163
    %v1165 = vadd.f32 %v1161, %v1164
    %s1166 = sld [smem:[#allocation2 + $0x183]]
    %v1167 = vstv %s1166
    %v1168 = vmul.f32 %v1064, %v1167
    %v1169 = vadd.f32 %v1165, %v1168
    %s1170 = sld [smem:[#allocation4 + $0x3]]
    %v1171 = vstv %s1170
    %v1172 = vadd.f32 %v1169, %v1171
    %v1173 = vmul.f32 %v1172, 0.5
    %v1174 = vmul.f32 %v1172, %v1172
    %v1175 = vmul.f32 %v1174, %v1172
    %v1176 = vmul.f32 %v1175, 0.044715
    %v1177 = vadd.f32 %v1172, %v1176
    %v1178 = vmul.f32 %v1177, 0.7978846
    %v1179 = vtanh.pop %v1178
    %v1180 = vadd.f32 %v1179, 1.0
    %v1181 = vmul.f32 %v1173, %v1180
    %v1182 = vadd.f32 %v1181, %v245
    %s1183 = scalar_lea.vmem %s9, 136
    %1184 = vst.msk [vmem:[%s1183] sm:$0x1f] %vm597, %v1182
    %s1185 = sld [smem:[#allocation2 + $0x200]]
    %v1186 = vstv %s1185
    %v1187 = vmul.f32 %v1058, %v1186
    %s1188 = sld [smem:[#allocation2 + $0x201]]
    %v1189 = vstv %s1188
    %v1190 = vmul.f32 %v1060, %v1189
    %v1191 = vadd.f32 %v1187, %v1190
    %s1192 = sld [smem:[#allocation2 + $0x202]]
    %v1193 = vstv %s1192
    %v1194 = vmul.f32 %v1062, %v1193
    %v1195 = vadd.f32 %v1191, %v1194
    %s1196 = sld [smem:[#allocation2 + $0x203]]
    %v1197 = vstv %s1196
    %v1198 = vmul.f32 %v1064, %v1197
    %v1199 = vadd.f32 %v1195, %v1198
    %s1200 = sld [smem:[#allocation4 + $0x4]]
    %v1201 = vstv %s1200
    %v1202 = vadd.f32 %v1199, %v1201
    %v1203 = vmul.f32 %v1202, 0.5
    %v1204 = vmul.f32 %v1202, %v1202
    %v1205 = vmul.f32 %v1204, %v1202
    %v1206 = vmul.f32 %v1205, 0.044715
    %v1207 = vadd.f32 %v1202, %v1206
    %v1208 = vmul.f32 %v1207, 0.7978846
    %v1209 = vtanh.pop %v1208
    %v1210 = vadd.f32 %v1209, 1.0
    %v1211 = vmul.f32 %v1203, %v1210
    %v1212 = vadd.f32 %v1211, %v245
    %s1213 = scalar_lea.vmem %s9, 176
    %1214 = vst.msk [vmem:[%s1213] sm:$0x1f] %vm597, %v1212
    %s1215 = sld [smem:[#allocation2 + $0x280]]
    %v1216 = vstv %s1215
    %v1217 = vmul.f32 %v1058, %v1216
    %s1218 = sld [smem:[#allocation2 + $0x281]]
    %v1219 = vstv %s1218
    %v1220 = vmul.f32 %v1060, %v1219
    %v1221 = vadd.f32 %v1217, %v1220
    %s1222 = sld [smem:[#allocation2 + $0x282]]
    %v1223 = vstv %s1222
    %v1224 = vmul.f32 %v1062, %v1223
    %v1225 = vadd.f32 %v1221, %v1224
    %s1226 = sld [smem:[#allocation2 + $0x283]]
    %v1227 = vstv %s1226
    %v1228 = vmul.f32 %v1064, %v1227
    %v1229 = vadd.f32 %v1225, %v1228
    %s1230 = sld [smem:[#allocation4 + $0x5]]
    %v1231 = vstv %s1230
    %v1232 = vadd.f32 %v1229, %v1231
    %v1233 = vmul.f32 %v1232, 0.5
    %v1234 = vmul.f32 %v1232, %v1232
    %v1235 = vmul.f32 %v1234, %v1232
    %v1236 = vmul.f32 %v1235, 0.044715
    %v1237 = vadd.f32 %v1232, %v1236
    %v1238 = vmul.f32 %v1237, 0.7978846
    %v1239 = vtanh.pop %v1238
    %v1240 = vadd.f32 %v1239, 1.0
    %v1241 = vmul.f32 %v1233, %v1240
    %v1242 = vadd.f32 %v1241, %v245
    %s1243 = scalar_lea.vmem %s9, 216
    %1244 = vst.msk [vmem:[%s1243] sm:$0x1f] %vm597, %v1242
    %s1245 = sld [smem:[#allocation2 + $0x300]]
    %v1246 = vstv %s1245
    %v1247 = vmul.f32 %v1058, %v1246
    %s1248 = sld [smem:[#allocation2 + $0x301]]
    %v1249 = vstv %s1248
    %v1250 = vmul.f32 %v1060, %v1249
    %v1251 = vadd.f32 %v1247, %v1250
    %s1252 = sld [smem:[#allocation2 + $0x302]]
    %v1253 = vstv %s1252
    %v1254 = vmul.f32 %v1062, %v1253
    %v1255 = vadd.f32 %v1251, %v1254
    %s1256 = sld [smem:[#allocation2 + $0x303]]
    %v1257 = vstv %s1256
    %v1258 = vmul.f32 %v1064, %v1257
    %v1259 = vadd.f32 %v1255, %v1258
    %s1260 = sld [smem:[#allocation4 + $0x6]]
    %v1261 = vstv %s1260
    %v1262 = vadd.f32 %v1259, %v1261
    %v1263 = vmul.f32 %v1262, 0.5
    %v1264 = vmul.f32 %v1262, %v1262
    %v1265 = vmul.f32 %v1264, %v1262
    %v1266 = vmul.f32 %v1265, 0.044715
    %v1267 = vadd.f32 %v1262, %v1266
    %v1268 = vmul.f32 %v1267, 0.7978846
    %v1269 = vtanh.pop %v1268
    %v1270 = vadd.f32 %v1269, 1.0
    %v1271 = vmul.f32 %v1263, %v1270
    %v1272 = vadd.f32 %v1271, %v245
    %s1273 = scalar_lea.vmem %s9, 256
    %1274 = vst.msk [vmem:[%s1273] sm:$0x1f] %vm597, %v1272
    %s1275 = sld [smem:[#allocation2 + $0x380]]
    %v1276 = vstv %s1275
    %v1277 = vmul.f32 %v1058, %v1276
    %s1278 = sld [smem:[#allocation2 + $0x381]]
    %v1279 = vstv %s1278
    %v1280 = vmul.f32 %v1060, %v1279
    %v1281 = vadd.f32 %v1277, %v1280
    %s1282 = sld [smem:[#allocation2 + $0x382]]
    %v1283 = vstv %s1282
    %v1284 = vmul.f32 %v1062, %v1283
    %v1285 = vadd.f32 %v1281, %v1284
    %s1286 = sld [smem:[#allocation2 + $0x383]]
    %v1287 = vstv %s1286
    %v1288 = vmul.f32 %v1064, %v1287
    %v1289 = vadd.f32 %v1285, %v1288
    %s1290 = sld [smem:[#allocation4 + $0x7]]
    %v1291 = vstv %s1290
    %v1292 = vadd.f32 %v1289, %v1291
    %v1293 = vmul.f32 %v1292, 0.5
    %v1294 = vmul.f32 %v1292, %v1292
    %v1295 = vmul.f32 %v1294, %v1292
    %v1296 = vmul.f32 %v1295, 0.044715
    %v1297 = vadd.f32 %v1292, %v1296
    %v1298 = vmul.f32 %v1297, 0.7978846
    %v1299 = vtanh.pop %v1298
    %v1300 = vadd.f32 %v1299, 1.0
    %v1301 = vmul.f32 %v1293, %v1300
    %v1302 = vadd.f32 %v1301, %v245
    %s1303 = scalar_lea.vmem %s9, 296
    %1304 = vst.msk [vmem:[%s1303] sm:$0x1f] %vm597, %v1302
    %s1305 = scalar_lea.vmem %s6, 24
    %v1306 = vld [vmem:[%s1305] sm:$0x1f]
    %s1307 = scalar_lea.vmem %s6, 64
    %v1308 = vld [vmem:[%s1307] sm:$0x1f]
    %s1309 = scalar_lea.vmem %s6, 104
    %v1310 = vld [vmem:[%s1309] sm:$0x1f]
    %s1311 = scalar_lea.vmem %s6, 144
    %v1312 = vld [vmem:[%s1311] sm:$0x1f]
    %s1313 = sld [smem:[#allocation2]]
    %v1314 = vstv %s1313
    %v1315 = vmul.f32 %v1306, %v1314
    %s1316 = sld [smem:[#allocation2 + $0x1]]
    %v1317 = vstv %s1316
    %v1318 = vmul.f32 %v1308, %v1317
    %v1319 = vadd.f32 %v1315, %v1318
    %s1320 = sld [smem:[#allocation2 + $0x2]]
    %v1321 = vstv %s1320
    %v1322 = vmul.f32 %v1310, %v1321
    %v1323 = vadd.f32 %v1319, %v1322
    %s1324 = sld [smem:[#allocation2 + $0x3]]
    %v1325 = vstv %s1324
    %v1326 = vmul.f32 %v1312, %v1325
    %v1327 = vadd.f32 %v1323, %v1326
    %s1328 = sld [smem:[#allocation4]]
    %v1329 = vstv %s1328
    %v1330 = vadd.f32 %v1327, %v1329
    %v1331 = vmul.f32 %v1330, 0.5
    %v1332 = vmul.f32 %v1330, %v1330
    %v1333 = vmul.f32 %v1332, %v1330
    %v1334 = vmul.f32 %v1333, 0.044715
    %v1335 = vadd.f32 %v1330, %v1334
    %v1336 = vmul.f32 %v1335, 0.7978846
    %v1337 = vtanh.pop %v1336
    %v1338 = vadd.f32 %v1337, 1.0
    %v1339 = vmul.f32 %v1331, %v1338
    %v1340 = vadd.f32 %v1339, %v245
    %s1341 = scalar_lea.vmem %s9, 24
    %1342 = vst.msk [vmem:[%s1341] sm:$0x1f] %vm597, %v1340
    %s1343 = sld [smem:[#allocation2 + $0x80]]
    %v1344 = vstv %s1343
    %v1345 = vmul.f32 %v1306, %v1344
    %s1346 = sld [smem:[#allocation2 + $0x81]]
    %v1347 = vstv %s1346
    %v1348 = vmul.f32 %v1308, %v1347
    %v1349 = vadd.f32 %v1345, %v1348
    %s1350 = sld [smem:[#allocation2 + $0x82]]
    %v1351 = vstv %s1350
    %v1352 = vmul.f32 %v1310, %v1351
    %v1353 = vadd.f32 %v1349, %v1352
    %s1354 = sld [smem:[#allocation2 + $0x83]]
    %v1355 = vstv %s1354
    %v1356 = vmul.f32 %v1312, %v1355
    %v1357 = vadd.f32 %v1353, %v1356
    %s1358 = sld [smem:[#allocation4 + $0x1]]
    %v1359 = vstv %s1358
    %v1360 = vadd.f32 %v1357, %v1359
    %v1361 = vmul.f32 %v1360, 0.5
    %v1362 = vmul.f32 %v1360, %v1360
    %v1363 = vmul.f32 %v1362, %v1360
    %v1364 = vmul.f32 %v1363, 0.044715
    %v1365 = vadd.f32 %v1360, %v1364
    %v1366 = vmul.f32 %v1365, 0.7978846
    %v1367 = vtanh.pop %v1366
    %v1368 = vadd.f32 %v1367, 1.0
    %v1369 = vmul.f32 %v1361, %v1368
    %v1370 = vadd.f32 %v1369, %v245
    %s1371 = scalar_lea.vmem %s9, 64
    %1372 = vst.msk [vmem:[%s1371] sm:$0x1f] %vm597, %v1370
    %s1373 = sld [smem:[#allocation2 + $0x100]]
    %v1374 = vstv %s1373
    %v1375 = vmul.f32 %v1306, %v1374
    %s1376 = sld [smem:[#allocation2 + $0x101]]
    %v1377 = vstv %s1376
    %v1378 = vmul.f32 %v1308, %v1377
    %v1379 = vadd.f32 %v1375, %v1378
    %s1380 = sld [smem:[#allocation2 + $0x102]]
    %v1381 = vstv %s1380
    %v1382 = vmul.f32 %v1310, %v1381
    %v1383 = vadd.f32 %v1379, %v1382
    %s1384 = sld [smem:[#allocation2 + $0x103]]
    %v1385 = vstv %s1384
    %v1386 = vmul.f32 %v1312, %v1385
    %v1387 = vadd.f32 %v1383, %v1386
    %s1388 = sld [smem:[#allocation4 + $0x2]]
    %v1389 = vstv %s1388
    %v1390 = vadd.f32 %v1387, %v1389
    %v1391 = vmul.f32 %v1390, 0.5
    %v1392 = vmul.f32 %v1390, %v1390
    %v1393 = vmul.f32 %v1392, %v1390
    %v1394 = vmul.f32 %v1393, 0.044715
    %v1395 = vadd.f32 %v1390, %v1394
    %v1396 = vmul.f32 %v1395, 0.7978846
    %v1397 = vtanh.pop %v1396
    %v1398 = vadd.f32 %v1397, 1.0
    %v1399 = vmul.f32 %v1391, %v1398
    %v1400 = vadd.f32 %v1399, %v245
    %s1401 = scalar_lea.vmem %s9, 104
    %1402 = vst.msk [vmem:[%s1401] sm:$0x1f] %vm597, %v1400
    %s1403 = sld [smem:[#allocation2 + $0x180]]
    %v1404 = vstv %s1403
    %v1405 = vmul.f32 %v1306, %v1404
    %s1406 = sld [smem:[#allocation2 + $0x181]]
    %v1407 = vstv %s1406
    %v1408 = vmul.f32 %v1308, %v1407
    %v1409 = vadd.f32 %v1405, %v1408
    %s1410 = sld [smem:[#allocation2 + $0x182]]
    %v1411 = vstv %s1410
    %v1412 = vmul.f32 %v1310, %v1411
    %v1413 = vadd.f32 %v1409, %v1412
    %s1414 = sld [smem:[#allocation2 + $0x183]]
    %v1415 = vstv %s1414
    %v1416 = vmul.f32 %v1312, %v1415
    %v1417 = vadd.f32 %v1413, %v1416
    %s1418 = sld [smem:[#allocation4 + $0x3]]
    %v1419 = vstv %s1418
    %v1420 = vadd.f32 %v1417, %v1419
    %v1421 = vmul.f32 %v1420, 0.5
    %v1422 = vmul.f32 %v1420, %v1420
    %v1423 = vmul.f32 %v1422, %v1420
    %v1424 = vmul.f32 %v1423, 0.044715
    %v1425 = vadd.f32 %v1420, %v1424
    %v1426 = vmul.f32 %v1425, 0.7978846
    %v1427 = vtanh.pop %v1426
    %v1428 = vadd.f32 %v1427, 1.0
    %v1429 = vmul.f32 %v1421, %v1428
    %v1430 = vadd.f32 %v1429, %v245
    %s1431 = scalar_lea.vmem %s9, 144
    %1432 = vst.msk [vmem:[%s1431] sm:$0x1f] %vm597, %v1430
    %s1433 = sld [smem:[#allocation2 + $0x200]]
    %v1434 = vstv %s1433
    %v1435 = vmul.f32 %v1306, %v1434
    %s1436 = sld [smem:[#allocation2 + $0x201]]
    %v1437 = vstv %s1436
    %v1438 = vmul.f32 %v1308, %v1437
    %v1439 = vadd.f32 %v1435, %v1438
    %s1440 = sld [smem:[#allocation2 + $0x202]]
    %v1441 = vstv %s1440
    %v1442 = vmul.f32 %v1310, %v1441
    %v1443 = vadd.f32 %v1439, %v1442
    %s1444 = sld [smem:[#allocation2 + $0x203]]
    %v1445 = vstv %s1444
    %v1446 = vmul.f32 %v1312, %v1445
    %v1447 = vadd.f32 %v1443, %v1446
    %s1448 = sld [smem:[#allocation4 + $0x4]]
    %v1449 = vstv %s1448
    %v1450 = vadd.f32 %v1447, %v1449
    %v1451 = vmul.f32 %v1450, 0.5
    %v1452 = vmul.f32 %v1450, %v1450
    %v1453 = vmul.f32 %v1452, %v1450
    %v1454 = vmul.f32 %v1453, 0.044715
    %v1455 = vadd.f32 %v1450, %v1454
    %v1456 = vmul.f32 %v1455, 0.7978846
    %v1457 = vtanh.pop %v1456
    %v1458 = vadd.f32 %v1457, 1.0
    %v1459 = vmul.f32 %v1451, %v1458
    %v1460 = vadd.f32 %v1459, %v245
    %s1461 = scalar_lea.vmem %s9, 184
    %1462 = vst.msk [vmem:[%s1461] sm:$0x1f] %vm597, %v1460
    %s1463 = sld [smem:[#allocation2 + $0x280]]
    %v1464 = vstv %s1463
    %v1465 = vmul.f32 %v1306, %v1464
    %s1466 = sld [smem:[#allocation2 + $0x281]]
    %v1467 = vstv %s1466
    %v1468 = vmul.f32 %v1308, %v1467
    %v1469 = vadd.f32 %v1465, %v1468
    %s1470 = sld [smem:[#allocation2 + $0x282]]
    %v1471 = vstv %s1470
    %v1472 = vmul.f32 %v1310, %v1471
    %v1473 = vadd.f32 %v1469, %v1472
    %s1474 = sld [smem:[#allocation2 + $0x283]]
    %v1475 = vstv %s1474
    %v1476 = vmul.f32 %v1312, %v1475
    %v1477 = vadd.f32 %v1473, %v1476
    %s1478 = sld [smem:[#allocation4 + $0x5]]
    %v1479 = vstv %s1478
    %v1480 = vadd.f32 %v1477, %v1479
    %v1481 = vmul.f32 %v1480, 0.5
    %v1482 = vmul.f32 %v1480, %v1480
    %v1483 = vmul.f32 %v1482, %v1480
    %v1484 = vmul.f32 %v1483, 0.044715
    %v1485 = vadd.f32 %v1480, %v1484
    %v1486 = vmul.f32 %v1485, 0.7978846
    %v1487 = vtanh.pop %v1486
    %v1488 = vadd.f32 %v1487, 1.0
    %v1489 = vmul.f32 %v1481, %v1488
    %v1490 = vadd.f32 %v1489, %v245
    %s1491 = scalar_lea.vmem %s9, 224
    %1492 = vst.msk [vmem:[%s1491] sm:$0x1f] %vm597, %v1490
    %s1493 = sld [smem:[#allocation2 + $0x300]]
    %v1494 = vstv %s1493
    %v1495 = vmul.f32 %v1306, %v1494
    %s1496 = sld [smem:[#allocation2 + $0x301]]
    %v1497 = vstv %s1496
    %v1498 = vmul.f32 %v1308, %v1497
    %v1499 = vadd.f32 %v1495, %v1498
    %s1500 = sld [smem:[#allocation2 + $0x302]]
    %v1501 = vstv %s1500
    %v1502 = vmul.f32 %v1310, %v1501
    %v1503 = vadd.f32 %v1499, %v1502
    %s1504 = sld [smem:[#allocation2 + $0x303]]
    %v1505 = vstv %s1504
    %v1506 = vmul.f32 %v1312, %v1505
    %v1507 = vadd.f32 %v1503, %v1506
    %s1508 = sld [smem:[#allocation4 + $0x6]]
    %v1509 = vstv %s1508
    %v1510 = vadd.f32 %v1507, %v1509
    %v1511 = vmul.f32 %v1510, 0.5
    %v1512 = vmul.f32 %v1510, %v1510
    %v1513 = vmul.f32 %v1512, %v1510
    %v1514 = vmul.f32 %v1513, 0.044715
    %v1515 = vadd.f32 %v1510, %v1514
    %v1516 = vmul.f32 %v1515, 0.7978846
    %v1517 = vtanh.pop %v1516
    %v1518 = vadd.f32 %v1517, 1.0
    %v1519 = vmul.f32 %v1511, %v1518
    %v1520 = vadd.f32 %v1519, %v245
    %s1521 = scalar_lea.vmem %s9, 264
    %1522 = vst.msk [vmem:[%s1521] sm:$0x1f] %vm597, %v1520
    %s1523 = sld [smem:[#allocation2 + $0x380]]
    %v1524 = vstv %s1523
    %v1525 = vmul.f32 %v1306, %v1524
    %s1526 = sld [smem:[#allocation2 + $0x381]]
    %v1527 = vstv %s1526
    %v1528 = vmul.f32 %v1308, %v1527
    %v1529 = vadd.f32 %v1525, %v1528
    %s1530 = sld [smem:[#allocation2 + $0x382]]
    %v1531 = vstv %s1530
    %v1532 = vmul.f32 %v1310, %v1531
    %v1533 = vadd.f32 %v1529, %v1532
    %s1534 = sld [smem:[#allocation2 + $0x383]]
    %v1535 = vstv %s1534
    %v1536 = vmul.f32 %v1312, %v1535
    %v1537 = vadd.f32 %v1533, %v1536
    %s1538 = sld [smem:[#allocation4 + $0x7]]
    %v1539 = vstv %s1538
    %v1540 = vadd.f32 %v1537, %v1539
    %v1541 = vmul.f32 %v1540, 0.5
    %v1542 = vmul.f32 %v1540, %v1540
    %v1543 = vmul.f32 %v1542, %v1540
    %v1544 = vmul.f32 %v1543, 0.044715
    %v1545 = vadd.f32 %v1540, %v1544
    %v1546 = vmul.f32 %v1545, 0.7978846
    %v1547 = vtanh.pop %v1546
    %v1548 = vadd.f32 %v1547, 1.0
    %v1549 = vmul.f32 %v1541, %v1548
    %v1550 = vadd.f32 %v1549, %v245
    %s1551 = scalar_lea.vmem %s9, 304
    %1552 = vst.msk [vmem:[%s1551] sm:$0x1f] %vm597, %v1550
    %s1553 = scalar_lea.vmem %s6, 32
    %v1554 = vld [vmem:[%s1553] sm:$0x1f]
    %s1555 = scalar_lea.vmem %s6, 72
    %v1556 = vld [vmem:[%s1555] sm:$0x1f]
    %s1557 = scalar_lea.vmem %s6, 112
    %v1558 = vld [vmem:[%s1557] sm:$0x1f]
    %s1559 = scalar_lea.vmem %s6, 152
    %v1560 = vld [vmem:[%s1559] sm:$0x1f]
    %s1561 = sld [smem:[#allocation2]]
    %v1562 = vstv %s1561
    %v1563 = vmul.f32 %v1554, %v1562
    %s1564 = sld [smem:[#allocation2 + $0x1]]
    %v1565 = vstv %s1564
    %v1566 = vmul.f32 %v1556, %v1565
    %v1567 = vadd.f32 %v1563, %v1566
    %s1568 = sld [smem:[#allocation2 + $0x2]]
    %v1569 = vstv %s1568
    %v1570 = vmul.f32 %v1558, %v1569
    %v1571 = vadd.f32 %v1567, %v1570
    %s1572 = sld [smem:[#allocation2 + $0x3]]
    %v1573 = vstv %s1572
    %v1574 = vmul.f32 %v1560, %v1573
    %v1575 = vadd.f32 %v1571, %v1574
    %s1576 = sld [smem:[#allocation4]]
    %v1577 = vstv %s1576
    %v1578 = vadd.f32 %v1575, %v1577
    %v1579 = vmul.f32 %v1578, 0.5
    %v1580 = vmul.f32 %v1578, %v1578
    %v1581 = vmul.f32 %v1580, %v1578
    %v1582 = vmul.f32 %v1581, 0.044715
    %v1583 = vadd.f32 %v1578, %v1582
    %v1584 = vmul.f32 %v1583, 0.7978846
    %v1585 = vtanh.pop %v1584
    %v1586 = vadd.f32 %v1585, 1.0
    %v1587 = vmul.f32 %v1579, %v1586
    %v1588 = vadd.f32 %v1587, %v245
    %s1589 = scalar_lea.vmem %s9, 32
    %1590 = vst.msk [vmem:[%s1589] sm:$0x1f] %vm597, %v1588
    %s1591 = sld [smem:[#allocation2 + $0x80]]
    %v1592 = vstv %s1591
    %v1593 = vmul.f32 %v1554, %v1592
    %s1594 = sld [smem:[#allocation2 + $0x81]]
    %v1595 = vstv %s1594
    %v1596 = vmul.f32 %v1556, %v1595
    %v1597 = vadd.f32 %v1593, %v1596
    %s1598 = sld [smem:[#allocation2 + $0x82]]
    %v1599 = vstv %s1598
    %v1600 = vmul.f32 %v1558, %v1599
    %v1601 = vadd.f32 %v1597, %v1600
    %s1602 = sld [smem:[#allocation2 + $0x83]]
    %v1603 = vstv %s1602
    %v1604 = vmul.f32 %v1560, %v1603
    %v1605 = vadd.f32 %v1601, %v1604
    %s1606 = sld [smem:[#allocation4 + $0x1]]
    %v1607 = vstv %s1606
    %v1608 = vadd.f32 %v1605, %v1607
    %v1609 = vmul.f32 %v1608, 0.5
    %v1610 = vmul.f32 %v1608, %v1608
    %v1611 = vmul.f32 %v1610, %v1608
    %v1612 = vmul.f32 %v1611, 0.044715
    %v1613 = vadd.f32 %v1608, %v1612
    %v1614 = vmul.f32 %v1613, 0.7978846
    %v1615 = vtanh.pop %v1614
    %v1616 = vadd.f32 %v1615, 1.0
    %v1617 = vmul.f32 %v1609, %v1616
    %v1618 = vadd.f32 %v1617, %v245
    %s1619 = scalar_lea.vmem %s9, 72
    %1620 = vst.msk [vmem:[%s1619] sm:$0x1f] %vm597, %v1618
    %s1621 = sld [smem:[#allocation2 + $0x100]]
    %v1622 = vstv %s1621
    %v1623 = vmul.f32 %v1554, %v1622
    %s1624 = sld [smem:[#allocation2 + $0x101]]
    %v1625 = vstv %s1624
    %v1626 = vmul.f32 %v1556, %v1625
    %v1627 = vadd.f32 %v1623, %v1626
    %s1628 = sld [smem:[#allocation2 + $0x102]]
    %v1629 = vstv %s1628
    %v1630 = vmul.f32 %v1558, %v1629
    %v1631 = vadd.f32 %v1627, %v1630
    %s1632 = sld [smem:[#allocation2 + $0x103]]
    %v1633 = vstv %s1632
    %v1634 = vmul.f32 %v1560, %v1633
    %v1635 = vadd.f32 %v1631, %v1634
    %s1636 = sld [smem:[#allocation4 + $0x2]]
    %v1637 = vstv %s1636
    %v1638 = vadd.f32 %v1635, %v1637
    %v1639 = vmul.f32 %v1638, 0.5
    %v1640 = vmul.f32 %v1638, %v1638
    %v1641 = vmul.f32 %v1640, %v1638
    %v1642 = vmul.f32 %v1641, 0.044715
    %v1643 = vadd.f32 %v1638, %v1642
    %v1644 = vmul.f32 %v1643, 0.7978846
    %v1645 = vtanh.pop %v1644
    %v1646 = vadd.f32 %v1645, 1.0
    %v1647 = vmul.f32 %v1639, %v1646
    %v1648 = vadd.f32 %v1647, %v245
    %s1649 = scalar_lea.vmem %s9, 112
    %1650 = vst.msk [vmem:[%s1649] sm:$0x1f] %vm597, %v1648
    %s1651 = sld [smem:[#allocation2 + $0x180]]
    %v1652 = vstv %s1651
    %v1653 = vmul.f32 %v1554, %v1652
    %s1654 = sld [smem:[#allocation2 + $0x181]]
    %v1655 = vstv %s1654
    %v1656 = vmul.f32 %v1556, %v1655
    %v1657 = vadd.f32 %v1653, %v1656
    %s1658 = sld [smem:[#allocation2 + $0x182]]
    %v1659 = vstv %s1658
    %v1660 = vmul.f32 %v1558, %v1659
    %v1661 = vadd.f32 %v1657, %v1660
    %s1662 = sld [smem:[#allocation2 + $0x183]]
    %v1663 = vstv %s1662
    %v1664 = vmul.f32 %v1560, %v1663
    %v1665 = vadd.f32 %v1661, %v1664
    %s1666 = sld [smem:[#allocation4 + $0x3]]
    %v1667 = vstv %s1666
    %v1668 = vadd.f32 %v1665, %v1667
    %v1669 = vmul.f32 %v1668, 0.5
    %v1670 = vmul.f32 %v1668, %v1668
    %v1671 = vmul.f32 %v1670, %v1668
    %v1672 = vmul.f32 %v1671, 0.044715
    %v1673 = vadd.f32 %v1668, %v1672
    %v1674 = vmul.f32 %v1673, 0.7978846
    %v1675 = vtanh.pop %v1674
    %v1676 = vadd.f32 %v1675, 1.0
    %v1677 = vmul.f32 %v1669, %v1676
    %v1678 = vadd.f32 %v1677, %v245
    %s1679 = scalar_lea.vmem %s9, 152
    %1680 = vst.msk [vmem:[%s1679] sm:$0x1f] %vm597, %v1678
    %s1681 = sld [smem:[#allocation2 + $0x200]]
    %v1682 = vstv %s1681
    %v1683 = vmul.f32 %v1554, %v1682
    %s1684 = sld [smem:[#allocation2 + $0x201]]
    %v1685 = vstv %s1684
    %v1686 = vmul.f32 %v1556, %v1685
    %v1687 = vadd.f32 %v1683, %v1686
    %s1688 = sld [smem:[#allocation2 + $0x202]]
    %v1689 = vstv %s1688
    %v1690 = vmul.f32 %v1558, %v1689
    %v1691 = vadd.f32 %v1687, %v1690
    %s1692 = sld [smem:[#allocation2 + $0x203]]
    %v1693 = vstv %s1692
    %v1694 = vmul.f32 %v1560, %v1693
    %v1695 = vadd.f32 %v1691, %v1694
    %s1696 = sld [smem:[#allocation4 + $0x4]]
    %v1697 = vstv %s1696
    %v1698 = vadd.f32 %v1695, %v1697
    %v1699 = vmul.f32 %v1698, 0.5
    %v1700 = vmul.f32 %v1698, %v1698
    %v1701 = vmul.f32 %v1700, %v1698
    %v1702 = vmul.f32 %v1701, 0.044715
    %v1703 = vadd.f32 %v1698, %v1702
    %v1704 = vmul.f32 %v1703, 0.7978846
    %v1705 = vtanh.pop %v1704
    %v1706 = vadd.f32 %v1705, 1.0
    %v1707 = vmul.f32 %v1699, %v1706
    %v1708 = vadd.f32 %v1707, %v245
    %s1709 = scalar_lea.vmem %s9, 192
    %1710 = vst.msk [vmem:[%s1709] sm:$0x1f] %vm597, %v1708
    %s1711 = sld [smem:[#allocation2 + $0x280]]
    %v1712 = vstv %s1711
    %v1713 = vmul.f32 %v1554, %v1712
    %s1714 = sld [smem:[#allocation2 + $0x281]]
    %v1715 = vstv %s1714
    %v1716 = vmul.f32 %v1556, %v1715
    %v1717 = vadd.f32 %v1713, %v1716
    %s1718 = sld [smem:[#allocation2 + $0x282]]
    %v1719 = vstv %s1718
    %v1720 = vmul.f32 %v1558, %v1719
    %v1721 = vadd.f32 %v1717, %v1720
    %s1722 = sld [smem:[#allocation2 + $0x283]]
    %v1723 = vstv %s1722
    %v1724 = vmul.f32 %v1560, %v1723
    %v1725 = vadd.f32 %v1721, %v1724
    %s1726 = sld [smem:[#allocation4 + $0x5]]
    %v1727 = vstv %s1726
    %v1728 = vadd.f32 %v1725, %v1727
    %v1729 = vmul.f32 %v1728, 0.5
    %v1730 = vmul.f32 %v1728, %v1728
    %v1731 = vmul.f32 %v1730, %v1728
    %v1732 = vmul.f32 %v1731, 0.044715
    %v1733 = vadd.f32 %v1728, %v1732
    %v1734 = vmul.f32 %v1733, 0.7978846
    %v1735 = vtanh.pop %v1734
    %v1736 = vadd.f32 %v1735, 1.0
    %v1737 = vmul.f32 %v1729, %v1736
    %v1738 = vadd.f32 %v1737, %v245
    %s1739 = scalar_lea.vmem %s9, 232
    %1740 = vst.msk [vmem:[%s1739] sm:$0x1f] %vm597, %v1738
    %s1741 = sld [smem:[#allocation2 + $0x300]]
    %v1742 = vstv %s1741
    %v1743 = vmul.f32 %v1554, %v1742
    %s1744 = sld [smem:[#allocation2 + $0x301]]
    %v1745 = vstv %s1744
    %v1746 = vmul.f32 %v1556, %v1745
    %v1747 = vadd.f32 %v1743, %v1746
    %s1748 = sld [smem:[#allocation2 + $0x302]]
    %v1749 = vstv %s1748
    %v1750 = vmul.f32 %v1558, %v1749
    %v1751 = vadd.f32 %v1747, %v1750
    %s1752 = sld [smem:[#allocation2 + $0x303]]
    %v1753 = vstv %s1752
    %v1754 = vmul.f32 %v1560, %v1753
    %v1755 = vadd.f32 %v1751, %v1754
    %s1756 = sld [smem:[#allocation4 + $0x6]]
    %v1757 = vstv %s1756
    %v1758 = vadd.f32 %v1755, %v1757
    %v1759 = vmul.f32 %v1758, 0.5
    %v1760 = vmul.f32 %v1758, %v1758
    %v1761 = vmul.f32 %v1760, %v1758
    %v1762 = vmul.f32 %v1761, 0.044715
    %v1763 = vadd.f32 %v1758, %v1762
    %v1764 = vmul.f32 %v1763, 0.7978846
    %v1765 = vtanh.pop %v1764
    %v1766 = vadd.f32 %v1765, 1.0
    %v1767 = vmul.f32 %v1759, %v1766
    %v1768 = vadd.f32 %v1767, %v245
    %s1769 = scalar_lea.vmem %s9, 272
    %1770 = vst.msk [vmem:[%s1769] sm:$0x1f] %vm597, %v1768
    %s1771 = sld [smem:[#allocation2 + $0x380]]
    %v1772 = vstv %s1771
    %v1773 = vmul.f32 %v1554, %v1772
    %s1774 = sld [smem:[#allocation2 + $0x381]]
    %v1775 = vstv %s1774
    %v1776 = vmul.f32 %v1556, %v1775
    %v1777 = vadd.f32 %v1773, %v1776
    %s1778 = sld [smem:[#allocation2 + $0x382]]
    %v1779 = vstv %s1778
    %v1780 = vmul.f32 %v1558, %v1779
    %v1781 = vadd.f32 %v1777, %v1780
    %s1782 = sld [smem:[#allocation2 + $0x383]]
    %v1783 = vstv %s1782
    %v1784 = vmul.f32 %v1560, %v1783
    %v1785 = vadd.f32 %v1781, %v1784
    %s1786 = sld [smem:[#allocation4 + $0x7]]
    %v1787 = vstv %s1786
    %v1788 = vadd.f32 %v1785, %v1787
    %v1789 = vmul.f32 %v1788, 0.5
    %v1790 = vmul.f32 %v1788, %v1788
    %v1791 = vmul.f32 %v1790, %v1788
    %v1792 = vmul.f32 %v1791, 0.044715
    %v1793 = vadd.f32 %v1788, %v1792
    %v1794 = vmul.f32 %v1793, 0.7978846
    %v1795 = vtanh.pop %v1794
    %v1796 = vadd.f32 %v1795, 1.0
    %v1797 = vmul.f32 %v1789, %v1796
    %v1798 = vadd.f32 %v1797, %v245
    %s1799 = scalar_lea.vmem %s9, 312
    %1800 = vst.msk [vmem:[%s1799] sm:$0x1f] %vm597, %v1798
    // Predicated region
    $region46: #{model_forward.1} parent=1 // pred_check
      _
    $region47: #{model_forward.1} parent=1 // pred_check_branch
      %1802 = sbr.rel (0) target = $region49
    $region48: #{model_forward.1} parent=1 // pred_region
      _
    $region49: #{model_forward.1} parent=1 // pred_fallthru
      _
    // Predicated region
    $region50: #{model_forward.1} parent=1 // pred_check
      _
    $region51: #{model_forward.1} parent=1 // pred_check_branch
      %1804 = sbr.rel (0) target = $region53
    $region52: #{model_forward.1} parent=1 // pred_region
      _
    $region53: #{model_forward.1} parent=1 // pred_fallthru
      _
    // Predicated region
    $region54: #{model_forward.1} parent=1 // pred_check
      _
    $region55: #{model_forward.1} parent=1 // pred_check_branch
      %1806 = sbr.rel (0) target = $region57
    $region56: #{model_forward.1} parent=1 // pred_region
      _
    $region57: #{model_forward.1} parent=1 // pred_fallthru
      _
    // Predicated region
    $region58: #{model_forward.1} parent=1 // pred_check
      _
    $region59: #{model_forward.1} parent=1 // pred_check_branch
      %1808 = sbr.rel (0) target = $region61
    $region60: #{model_forward.1} parent=1 // pred_region
      _
    $region61: #{model_forward.1} parent=1 // pred_fallthru
      _
    %1809 = vsyncpa [#allocation3], 1
    %1810 = vsyncpa [#allocation5], 1

</llo_original>
